<compile_context>
chip_gen: v7x
topology: tpu7x:2x2x1
jax: 0.10.0
libtpu: 0.0.40
codegen_flags: <defaults>
</compile_context>

<pallas_src>
import math

import jax
import jax.numpy as jnp
from jax import lax
from jax.experimental import pallas as pl
from jax.experimental.pallas import tpu as pltpu


def _round_up(x, m):
    return ((x + m - 1) // m) * m


def _vmem_capacity_bytes():
    try:
        return int(pltpu.get_tpu_info().vmem_capacity_bytes)
    except Exception:
        return 128 * 1024 * 1024  # assume v5e/v6e-class if the query is unavailable


# ----------------------------------------------------------------------------
# Fused kernel factory.
# Inputs (in order):
#   p0 (tile,8) | Wcls (S*d, k_pad) | bcls (1, k_pad)
#   then per stage (ni_list order):
#     fine   : x (tile, cin) | W_folded (cin, d)   | shift (1, d)
#     coarse : pT_scaled (8, n1_pad) | pT_sq (1, n1_pad) | f_coarse (n1_pad, d)
# Outputs: cls (tile, k_pad), then one (tile, d) per fine stage.
# ----------------------------------------------------------------------------
def _make_fused_kernel(stage_meta, d, k_pad):
    n_in = 3 + 3 * len(stage_meta)

    def _nn_gather(p0, pT_c, sq_c, f_c):
        # d2' = -2 a.b + |b|^2   (|a|^2 dropped: per-row constant, argmin-invariant)
        d2 = jnp.dot(p0, pT_c, preferred_element_type=jnp.float32) + sq_c
        col = lax.broadcasted_iota(jnp.int32, d2.shape, 1)
        cmin = jnp.min(d2, axis=1, keepdims=True)
        width = d2.shape[1]
        nearest = jnp.min(jnp.where(d2 <= cmin, col, width), axis=1, keepdims=True)
        onehot = (col == nearest).astype(jnp.float32)
        # TODO(synk): onehot/f_c (and the classifier dot) could run in bf16 with f32
        #             accumulation for ~3x MXU throughput; kept f32 for exact parity.
        feat = jnp.dot(onehot, f_c, preferred_element_type=jnp.float32)
        return cmin, feat

    def kernel(*refs):
        in_refs = refs[:n_in]
        out_refs = refs[n_in:]
        p0_ref, wcls_ref, bcls_ref = in_refs[0], in_refs[1], in_refs[2]
        cls_ref = out_refs[0]
        fine_out_refs = list(out_refs[1:])

        p0 = p0_ref[...]                        # (tile, 8) zero-padded coords
        tile = p0.shape[0]

        feats = []
        idx = 3
        fine_idx = 0
        for meta in stage_meta:
            if meta["kind"] == "fine":
                x_ref, w_ref, s_ref = in_refs[idx], in_refs[idx + 1], in_refs[idx + 2]
                idx += 3
                f = jnp.maximum(
                    jnp.dot(x_ref[...], w_ref[...], preferred_element_type=jnp.float32)
                    + s_ref[...],
                    0.0,
                )
                fine_out_refs[fine_idx][...] = f.astype(fine_out_refs[fine_idx].dtype)
                fine_idx += 1
            else:
                pT_ref, sq_ref, f_ref = in_refs[idx], in_refs[idx + 1], in_refs[idx + 2]
                idx += 3
                chunk = meta["chunk"]
                n_chunks = meta["n_chunks"]
                if n_chunks == 1:
                    _, f = _nn_gather(p0, pT_ref[...], sq_ref[...], f_ref[...])
                else:
                    def chunk_step(c, carry, pT_ref=pT_ref, sq_ref=sq_ref,
                                   f_ref=f_ref, chunk=chunk):
                        run_min, run_feat = carry
                        start = pl.multiple_of(c * chunk, chunk)
                        cmin, feat_c = _nn_gather(
                            p0,
                            pT_ref[:, pl.ds(start, chunk)],
                            sq_ref[:, pl.ds(start, chunk)],
                            f_ref[pl.ds(start, chunk), :],
                        )
                        better = cmin < run_min   # strict <: earlier chunk wins ties
                        return (jnp.where(better, cmin, run_min),
                                jnp.where(better, feat_c, run_feat))

                    init = (jnp.full((tile, 1), jnp.inf, jnp.float32),
                            jnp.zeros((tile, d), jnp.float32))
                    _, f = lax.fori_loop(0, n_chunks, chunk_step, init)
            feats.append(f)

        # single classifier matmul over the lane-concatenated per-stage features
        feat = feats[0] if len(feats) == 1 else jnp.concatenate(feats, axis=1)
        cls = jnp.dot(feat, wcls_ref[...], preferred_element_type=jnp.float32) + bcls_ref[...]
        cls_ref[...] = cls.astype(cls_ref.dtype)

    return kernel


# ----------------------------------------------------------------------------
# MultiHead wrapper (parameter setup, stage bookkeeping, padding/slicing)
# ----------------------------------------------------------------------------
class MultiHeadPallas:
    """JAX/Pallas port of MultiHead with ftype='f_out', combine='concat'."""

    def __init__(self, fdims, base_fdim, k, ni_list, key):
        self.ni_list = ni_list
        self.base_fdim = base_fdim
        self.k = k

        vmem_cap = _vmem_capacity_bytes()
        self.small_vmem = vmem_cap <= 64 * 1024 * 1024       # v7x-class (64 MiB VMEM)
        self.vmem_limit = (38 if self.small_vmem else 48) * 1024 * 1024
        self.coarse_chunk_cap = 256 if self.small_vmem else 1024

        keys = jax.random.split(key, 2 * len(ni_list) + 2)
        self.mlp_params = []  # per stage: (W_folded, shift_folded)
        for idx, (_, i) in enumerate(ni_list):
            cin = fdims[i]
            bound = 1.0 / math.sqrt(cin)
            w = jax.random.uniform(keys[2 * idx], (cin, base_fdim), jnp.float32, -bound, bound)
            b = jax.random.uniform(keys[2 * idx + 1], (1, base_fdim), jnp.float32, -bound, bound)
            # deterministic (non-trivial) eval-mode BN params
            ar = jnp.arange(base_fdim, dtype=jnp.float32)
            gamma = 1.0 + 0.1 * jnp.cos(ar)
            beta = 0.05 * jnp.sin(ar)
            r_mean = 0.02 * ar / base_fdim
            r_var = 1.0 + 0.1 * jnp.abs(jnp.sin(ar))
            inv_std = gamma / jnp.sqrt(r_var + 1e-5)
            scale = inv_std[None, :]
            shift = (beta - r_mean * inv_std)[None, :]
            # TODO(synk): BatchNorm1d is eval-mode only (running stats folded into the
            #             Linear); training-mode batch statistics are not reproduced.
            w_folded = w * scale
            shift_folded = b * scale + shift
            self.mlp_params.append((w_folded, shift_folded))

        fdim_total = base_fdim * len(ni_list)
        bound = 1.0 / math.sqrt(fdim_total)
        self.cls_w = jax.random.uniform(keys[-2], (fdim_total, k), jnp.float32, -bound, bound)
        self.cls_b = jax.random.uniform(keys[-1], (1, k), jnp.float32, -bound, bound)
        # lane-dense classifier output: pad k -> multiple of 128 with zero columns
        self.k_pad = _round_up(k, 128)
        self.cls_w_pad = jnp.pad(self.cls_w, ((0, 0), (0, self.k_pad - k)))
        self.cls_b_pad = jnp.pad(self.cls_b, ((0, 0), (0, self.k_pad - k)))

    def __call__(self, stage_list):
        # TODO(synk): single-batch pointops offsets only; multi-batch offsets not handled.
        d = self.base_fdim
        p0 = stage_list['up'][0]['p']
        n0 = p0.shape[0]
        if self.small_vmem:
            tile_n = 256
        else:
            tile_n = 512 if n0 >= 4096 else 256
        n0_pad = _round_up(n0, tile_n)
        # coords padded to 8 sublane columns so the K=3 cross-term matmul is aligned
        p0_pad = jnp.pad(p0, ((0, n0_pad - n0), (0, 8 - p0.shape[1])))

        stage_meta = []
        fused_inputs = [p0_pad, self.cls_w_pad, self.cls_b_pad]
        # (block_shape, index_map, grid_invariant?)
        spec_descs = [
            ((tile_n, 8), lambda g: (g, 0), False),
            ((self.cls_w_pad.shape[0], self.k_pad), lambda g: (0, 0), True),
            ((1, self.k_pad), lambda g: (0, 0), True),
        ]
        coarse_writebacks = []   # (n, i, features) for stage_list
        fine_slots = []          # (n, i) whose MLP output comes out of the fused kernel

        for (n, i), (w_f, s_f) in zip(self.ni_list, self.mlp_params):
            x_in = stage_list[n][i]['f_out']
            if i == 0:
                # fine stage: its MLP is fused into the per-tile kernel
                cin = x_in.shape[1]
                x_pad = jnp.pad(x_in, ((0, n0_pad - n0), (0, 0)))
                fused_inputs += [x_pad, w_f, s_f]
                spec_descs += [
                    ((tile_n, cin), lambda g: (g, 0), False),
                    ((cin, d), lambda g: (0, 0), True),
                    ((1, d), lambda g: (0, 0), True),
                ]
                stage_meta.append({"kind": "fine"})
                fine_slots.append((n, i))
            else:
                # coarse stage: tiny MLP in plain XLA; upsample + classifier fused below.
                n1 = x_in.shape[0]
                chunk = min(self.coarse_chunk_cap, _round_up(n1, 256))
                n1_pad = _round_up(n1, chunk)
                f_coarse = jnp.maximum(
                    jnp.pad(x_in, ((0, n1_pad - n1), (0, 0))) @ w_f + s_f, 0.0)
                coarse_writebacks.append((n, i, f_coarse[:n1]))

                p_c = stage_list[n][i]['p']
                # pad coarse points with a large coordinate sentinel (never the nearest),
                # pre-scale by -2 and precompute |pc|^2 so the kernel only does dot+add.
                p_c_pad = jnp.concatenate(
                    [p_c, jnp.full((n1_pad - n1, p_c.shape[1]), 1e6, p_c.dtype)], axis=0)
                pT_scaled = jnp.pad(-2.0 * p_c_pad.T,
                                    ((0, 8 - p_c.shape[1]), (0, 0)))     # (8, n1_pad)
                pT_sq = jnp.sum(p_c_pad * p_c_pad, axis=1)[None, :]      # (1, n1_pad)

                fused_inputs += [pT_scaled, pT_sq, f_coarse]
                spec_descs += [
                    ((8, n1_pad), lambda g: (0, 0), True),
                    ((1, n1_pad), lambda g: (0, 0), True),
                    ((n1_pad, d), lambda g: (0, 0), True),
                ]
                stage_meta.append({"kind": "coarse", "chunk": chunk,
                                   "n_chunks": n1_pad // chunk})

        kernel = _make_fused_kernel(stage_meta, d, self.k_pad)
        num_fine = len(fine_slots)
        out_shapes = (jax.ShapeDtypeStruct((n0_pad, self.k_pad), jnp.float32),) + tuple(
            jax.ShapeDtypeStruct((n0_pad, d), jnp.float32) for _ in range(num_fine))
        out_specs = (pl.BlockSpec((tile_n, self.k_pad), lambda g: (g, 0)),) + tuple(
            pl.BlockSpec((tile_n, d), lambda g: (g, 0)) for _ in range(num_fine))

        def build_in_specs(single_buffer):
            specs = []
            for shape, imap, const in spec_descs:
                if const and single_buffer:
                    # grid-invariant block -> no point double-buffering it
                    specs.append(pl.BlockSpec(shape, imap, pipeline_mode=pl.Buffered(1)))
                else:
                    specs.append(pl.BlockSpec(shape, imap))
            return specs

        def run(single_buffer):
            return pl.pallas_call(
                kernel,
                out_shape=out_shapes,
                grid=(n0_pad // tile_n,),
                in_specs=build_in_specs(single_buffer),
                out_specs=out_specs,
                compiler_params=pltpu.CompilerParams(
                    dimension_semantics=("parallel",),
                    vmem_limit_bytes=self.vmem_limit,
                ),
            )(*fused_inputs)

        try:
            outs = run(True)
        except Exception:
            # pipeline_mode / Buffered(1) unsupported on this jax build -> default buffering
            outs = run(False)

        logits = outs[0][:n0, :self.k]
        for (n, i), f_pad in zip(fine_slots, outs[1:]):
            stage_list[n][i]['f_out'] = f_pad[:n0]
        for n, i, f_c in coarse_writebacks:
            stage_list[n][i]['f_out'] = f_c
        return logits, stage_list


# ----------------------------------------------------------------------------
# Pure-JAX reference (for correctness check only)
# ----------------------------------------------------------------------------
def _reference_forward(head, stage_list_in):
    collect = []
    for (n, i), (w_f, s_f) in zip(head.ni_list, head.mlp_params):
        x = stage_list_in[n][i]['f_out']
        f = jnp.maximum(x @ w_f + s_f, 0.0)
        if i == 0:
            up = f
        else:
            p0 = stage_list_in['up'][0]['p']
            p1 = stage_list_in[n][i]['p']
            d2 = jnp.sum((p0[:, None, :] - p1[None, :, :]) ** 2, axis=-1)
            up = f[jnp.argmin(d2, axis=1)]
        collect.append(up)
    x = jnp.concatenate(collect, axis=1)
    return x @ head.cls_w + head.cls_b


if __name__ == "__main__":
    key = jax.random.PRNGKey(0)
    k_p0, k_p1, k_x0, k_x1, k_params = jax.random.split(key, 5)

    N0, N1 = 64, 16               # fine / coarse point counts (single batch)
    fdims = [32, 64]              # per-stage feature dims
    base_fdim = 32                # MLP output dim per head
    num_classes = 17
    ni_list = [('up', 0), ('up', 1)]   # parse_stage('up0-up1', ...)

    stage_list = {
        'up': [
            {'p': jax.random.normal(k_p0, (N0, 3), jnp.float32),
             'f_out': jax.random.normal(k_x0, (N0, fdims[0]), jnp.float32),
             'offset': jnp.array([N0], jnp.int32)},
            {'p': jax.random.normal(k_p1, (N1, 3), jnp.float32),
             'f_out': jax.random.normal(k_x1, (N1, fdims[1]), jnp.float32),
             'offset': jnp.array([N1], jnp.int32)},
        ]
    }

    head = MultiHeadPallas(fdims, base_fdim, num_classes, ni_list, k_params)

    ref_logits = _reference_forward(head, stage_list)   # reads only; run before mutation

    logits, stage_list_out = head(stage_list)
    jax.block_until_ready(logits)

    assert logits.shape == (N0, num_classes)
    assert stage_list_out['up'][0]['f_out'].shape == (N0, base_fdim)
    assert stage_list_out['up'][1]['f_out'].shape == (N1, base_fdim)
    assert jnp.allclose(logits, ref_logits, atol=2e-3, rtol=2e-3), "mismatch vs JAX reference"
    print("KERNEL_OK")
</pallas_src>

<mosaic_0001>
module attributes {stable_mosaic.version = 11 : i64} {
  func.func @kernel(%arg0: i32, %arg1: memref<256x8xf32, #tpu.memory_space<vmem>>, %arg2: memref<64x128xf32, #tpu.memory_space<vmem>>, %arg3: memref<1x128xf32, #tpu.memory_space<vmem>>, %arg4: memref<256x32xf32, #tpu.memory_space<vmem>>, %arg5: memref<32x32xf32, #tpu.memory_space<vmem>>, %arg6: memref<1x32xf32, #tpu.memory_space<vmem>>, %arg7: memref<8x256xf32, #tpu.memory_space<vmem>>, %arg8: memref<1x256xf32, #tpu.memory_space<vmem>>, %arg9: memref<256x32xf32, #tpu.memory_space<vmem>>, %arg10: memref<256x128xf32, #tpu.memory_space<vmem>>, %arg11: memref<256x32xf32, #tpu.memory_space<vmem>>) attributes {dimension_semantics = [#tpu.dimension_semantics<parallel>], iteration_bounds = array<i64: 1>, scalar_prefetch = 0 : i64, scratch_operands = 0 : i64, tpu.core_type = #tpu.core_type<tc>, window_params = [{transform_indices = @transform_0, window_bounds = array<i64: 256, 8>}, {pipeline_mode = #tpu.pipeline_mode<synchronous>, transform_indices = @transform_1, window_bounds = array<i64: 64, 128>}, {pipeline_mode = #tpu.pipeline_mode<synchronous>, transform_indices = @transform_2, window_bounds = array<i64: 1, 128>}, {transform_indices = @transform_3, window_bounds = array<i64: 256, 32>}, {pipeline_mode = #tpu.pipeline_mode<synchronous>, transform_indices = @transform_4, window_bounds = array<i64: 32, 32>}, {pipeline_mode = #tpu.pipeline_mode<synchronous>, transform_indices = @transform_5, window_bounds = array<i64: 1, 32>}, {pipeline_mode = #tpu.pipeline_mode<synchronous>, transform_indices = @transform_6, window_bounds = array<i64: 8, 256>}, {pipeline_mode = #tpu.pipeline_mode<synchronous>, transform_indices = @transform_7, window_bounds = array<i64: 1, 256>}, {pipeline_mode = #tpu.pipeline_mode<synchronous>, transform_indices = @transform_8, window_bounds = array<i64: 256, 32>}, {transform_indices = @transform_9, window_bounds = array<i64: 256, 128>}, {transform_indices = @transform_10, window_bounds = array<i64: 256, 32>}]} {
    %c0 = arith.constant 0 : index
    %c0_0 = arith.constant 0 : index
    %0 = vector.load %arg1[%c0, %c0_0] : memref<256x8xf32, #tpu.memory_space<vmem>>, vector<256x8xf32>
    %c0_1 = arith.constant 0 : index
    %c0_2 = arith.constant 0 : index
    %1 = vector.load %arg4[%c0_1, %c0_2] : memref<256x32xf32, #tpu.memory_space<vmem>>, vector<256x32xf32>
    %c0_3 = arith.constant 0 : index
    %c0_4 = arith.constant 0 : index
    %2 = vector.load %arg5[%c0_3, %c0_4] : memref<32x32xf32, #tpu.memory_space<vmem>>, vector<32x32xf32>
    %cst = arith.constant dense<0.000000e+00> : vector<256x32xf32>
    %3 = tpu.matmul %1, %2, %cst {dimension_numbers = #tpu.dot_dimension_numbers<[1], [0], [0], [1], [0, 0, 1, 1], [], []>} : vector<256x32xf32>, vector<32x32xf32>, vector<256x32xf32> -> vector<256x32xf32>
    %c0_5 = arith.constant 0 : index
    %c0_6 = arith.constant 0 : index
    %4 = vector.load %arg6[%c0_5, %c0_6] : memref<1x32xf32, #tpu.memory_space<vmem>>, vector<1x32xf32>
    %5 = vector.broadcast %4 : vector<1x32xf32> to vector<256x32xf32>
    %6 = arith.addf %3, %5 : vector<256x32xf32>
    %cst_7 = arith.constant 0.000000e+00 : f32
    %7 = vector.broadcast %cst_7 : f32 to vector<256x32xf32>
    %8 = arith.maximumf %6, %7 : vector<256x32xf32>
    %c0_8 = arith.constant 0 : index
    %c0_9 = arith.constant 0 : index
    %9 = vector.load %arg11[%c0_8, %c0_9] : memref<256x32xf32, #tpu.memory_space<vmem>>, vector<256x32xf32>
    tpu.vector_store %arg11[%c0_8, %c0_9], %8 {strides = array<i32>} : memref<256x32xf32, #tpu.memory_space<vmem>>, vector<256x32xf32>,
    %c0_10 = arith.constant 0 : index
    %c0_11 = arith.constant 0 : index
    %10 = vector.load %arg7[%c0_10, %c0_11] : memref<8x256xf32, #tpu.memory_space<vmem>>, vector<8x256xf32>
    %c0_12 = arith.constant 0 : index
    %c0_13 = arith.constant 0 : index
    %11 = vector.load %arg8[%c0_12, %c0_13] : memref<1x256xf32, #tpu.memory_space<vmem>>, vector<1x256xf32>
    %c0_14 = arith.constant 0 : index
    %c0_15 = arith.constant 0 : index
    %12 = vector.load %arg9[%c0_14, %c0_15] : memref<256x32xf32, #tpu.memory_space<vmem>>, vector<256x32xf32>
    %cst_16 = arith.constant dense<0.000000e+00> : vector<256x256xf32>
    %13 = tpu.matmul %0, %10, %cst_16 {dimension_numbers = #tpu.dot_dimension_numbers<[1], [0], [0], [1], [0, 0, 1, 1], [], []>} : vector<256x8xf32>, vector<8x256xf32>, vector<256x256xf32> -> vector<256x256xf32>
    %14 = vector.broadcast %11 : vector<1x256xf32> to vector<256x256xf32>
    %15 = arith.addf %13, %14 : vector<256x256xf32>
    %16 = tpu.iota {dimensions = array<i32: 1>} : vector<256x256xi32>
    %cst_17 = arith.constant dense<0x7F800000> : vector<256xf32>
    %17 = vector.multi_reduction <minimumf>, %15, %cst_17 [1] : vector<256x256xf32> to vector<256xf32>
    %18 = vector.shape_cast %17 : vector<256xf32> to vector<256x1xf32>
    %19 = vector.broadcast %18 : vector<256x1xf32> to vector<256x256xf32>
    %20 = arith.cmpf ole, %15, %19 : vector<256x256xf32>
    %c256_i32 = arith.constant 256 : i32
    %21 = vector.broadcast %c256_i32 : i32 to vector<256x256xi32>
    %22 = arith.select %20, %16, %21 : vector<256x256xi1>, vector<256x256xi32>
    %cst_18 = arith.constant dense<2147483647> : vector<256xi32>
    %23 = vector.multi_reduction <minsi>, %22, %cst_18 [1] : vector<256x256xi32> to vector<256xi32>
    %24 = vector.shape_cast %23 : vector<256xi32> to vector<256x1xi32>
    %25 = vector.broadcast %24 : vector<256x1xi32> to vector<256x256xi32>
    %26 = arith.cmpi eq, %16, %25 : vector<256x256xi32>
    %27 = arith.extui %26 : vector<256x256xi1> to vector<256x256xi32>
    %28 = arith.sitofp %27 : vector<256x256xi32> to vector<256x256xf32>
    %cst_19 = arith.constant dense<0.000000e+00> : vector<256x32xf32>
    %29 = tpu.matmul %28, %12, %cst_19 {dimension_numbers = #tpu.dot_dimension_numbers<[1], [0], [0], [1], [0, 0, 1, 1], [], []>} : vector<256x256xf32>, vector<256x32xf32>, vector<256x32xf32> -> vector<256x32xf32>
    %30 = tpu.concatenate %8, %29 in 1 : vector<256x32xf32>, vector<256x32xf32> -> vector<256x64xf32>
    %c0_20 = arith.constant 0 : index
    %c0_21 = arith.constant 0 : index
    %31 = vector.load %arg2[%c0_20, %c0_21] : memref<64x128xf32, #tpu.memory_space<vmem>>, vector<64x128xf32>
    %cst_22 = arith.constant dense<0.000000e+00> : vector<256x128xf32>
    %32 = tpu.matmul %30, %31, %cst_22 {dimension_numbers = #tpu.dot_dimension_numbers<[1], [0], [0], [1], [0, 0, 1, 1], [], []>} : vector<256x64xf32>, vector<64x128xf32>, vector<256x128xf32> -> vector<256x128xf32>
    %c0_23 = arith.constant 0 : index
    %c0_24 = arith.constant 0 : index
    %33 = vector.load %arg3[%c0_23, %c0_24] : memref<1x128xf32, #tpu.memory_space<vmem>>, vector<1x128xf32>
    %34 = vector.broadcast %33 : vector<1x128xf32> to vector<256x128xf32>
    %35 = arith.addf %32, %34 : vector<256x128xf32>
    %c0_25 = arith.constant 0 : index
    %c0_26 = arith.constant 0 : index
    %36 = vector.load %arg10[%c0_25, %c0_26] : memref<256x128xf32, #tpu.memory_space<vmem>>, vector<256x128xf32>
    tpu.vector_store %arg10[%c0_25, %c0_26], %35 {strides = array<i32>} : memref<256x128xf32, #tpu.memory_space<vmem>>, vector<256x128xf32>,
    return
  }
  func.func @transform_0(%arg0: i32) -> (i32, i32) {
    %c0_i32 = arith.constant 0 : i32
    %c0_i32_0 = arith.constant 0 : i32
    return %arg0, %c0_i32 : i32, i32
  }
  func.func @transform_1(%arg0: i32) -> (i32, i32) {
    %c0_i32 = arith.constant 0 : i32
    %c0_i32_0 = arith.constant 0 : i32
    %c0_i32_1 = arith.constant 0 : i32
    return %c0_i32, %c0_i32_0 : i32, i32
  }
  func.func @transform_2(%arg0: i32) -> (i32, i32) {
    %c0_i32 = arith.constant 0 : i32
    %c0_i32_0 = arith.constant 0 : i32
    %c0_i32_1 = arith.constant 0 : i32
    return %c0_i32, %c0_i32_0 : i32, i32
  }
  func.func @transform_3(%arg0: i32) -> (i32, i32) {
    %c0_i32 = arith.constant 0 : i32
    %c0_i32_0 = arith.constant 0 : i32
    return %arg0, %c0_i32 : i32, i32
  }
  func.func @transform_4(%arg0: i32) -> (i32, i32) {
    %c0_i32 = arith.constant 0 : i32
    %c0_i32_0 = arith.constant 0 : i32
    %c0_i32_1 = arith.constant 0 : i32
    return %c0_i32, %c0_i32_0 : i32, i32
  }
  func.func @transform_5(%arg0: i32) -> (i32, i32) {
    %c0_i32 = arith.constant 0 : i32
    %c0_i32_0 = arith.constant 0 : i32
    %c0_i32_1 = arith.constant 0 : i32
    return %c0_i32, %c0_i32_0 : i32, i32
  }
  func.func @transform_6(%arg0: i32) -> (i32, i32) {
    %c0_i32 = arith.constant 0 : i32
    %c0_i32_0 = arith.constant 0 : i32
    %c0_i32_1 = arith.constant 0 : i32
    return %c0_i32, %c0_i32_0 : i32, i32
  }
  func.func @transform_7(%arg0: i32) -> (i32, i32) {
    %c0_i32 = arith.constant 0 : i32
    %c0_i32_0 = arith.constant 0 : i32
    %c0_i32_1 = arith.constant 0 : i32
    return %c0_i32, %c0_i32_0 : i32, i32
  }
  func.func @transform_8(%arg0: i32) -> (i32, i32) {
    %c0_i32 = arith.constant 0 : i32
    %c0_i32_0 = arith.constant 0 : i32
    %c0_i32_1 = arith.constant 0 : i32
    return %c0_i32, %c0_i32_0 : i32, i32
  }
  func.func @transform_9(%arg0: i32) -> (i32, i32) {
    %c0_i32 = arith.constant 0 : i32
    %c0_i32_0 = arith.constant 0 : i32
    return %arg0, %c0_i32 : i32, i32
  }
  func.func @transform_10(%arg0: i32) -> (i32, i32) {
    %c0_i32 = arith.constant 0 : i32
    %c0_i32_0 = arith.constant 0 : i32
    return %arg0, %c0_i32 : i32, i32
  }
}

module attributes {stable_mosaic.version = 11 : i64} {
  func.func @kernel(%arg0: i32, %arg1: memref<256x8xf32, #tpu.memory_space<vmem>>, %arg2: memref<64x128xf32, #tpu.memory_space<vmem>>, %arg3: memref<1x128xf32, #tpu.memory_space<vmem>>, %arg4: memref<256x32xf32, #tpu.memory_space<vmem>>, %arg5: memref<32x32xf32, #tpu.memory_space<vmem>>, %arg6: memref<1x32xf32, #tpu.memory_space<vmem>>, %arg7: memref<8x256xf32, #tpu.memory_space<vmem>>, %arg8: memref<1x256xf32, #tpu.memory_space<vmem>>, %arg9: memref<256x32xf32, #tpu.memory_space<vmem>>, %arg10: memref<256x128xf32, #tpu.memory_space<vmem>>, %arg11: memref<256x32xf32, #tpu.memory_space<vmem>>) attributes {dimension_semantics = [#tpu.dimension_semantics<parallel>], iteration_bounds = array<i64: 1>, scalar_prefetch = 0 : i64, scratch_operands = 0 : i64, tpu.core_type = #tpu.core_type<tc>, window_params = [{transform_indices = @transform_0, window_bounds = array<i64: 256, 8>}, {pipeline_mode = #tpu.pipeline_mode<synchronous>, transform_indices = @transform_1, window_bounds = array<i64: 64, 128>}, {pipeline_mode = #tpu.pipeline_mode<synchronous>, transform_indices = @transform_2, window_bounds = array<i64: 1, 128>}, {transform_indices = @transform_3, window_bounds = array<i64: 256, 32>}, {pipeline_mode = #tpu.pipeline_mode<synchronous>, transform_indices = @transform_4, window_bounds = array<i64: 32, 32>}, {pipeline_mode = #tpu.pipeline_mode<synchronous>, transform_indices = @transform_5, window_bounds = array<i64: 1, 32>}, {pipeline_mode = #tpu.pipeline_mode<synchronous>, transform_indices = @transform_6, window_bounds = array<i64: 8, 256>}, {pipeline_mode = #tpu.pipeline_mode<synchronous>, transform_indices = @transform_7, window_bounds = array<i64: 1, 256>}, {pipeline_mode = #tpu.pipeline_mode<synchronous>, transform_indices = @transform_8, window_bounds = array<i64: 256, 32>}, {transform_indices = @transform_9, window_bounds = array<i64: 256, 128>}, {transform_indices = @transform_10, window_bounds = array<i64: 256, 32>}]} {
    %c0 = arith.constant 0 : index
    %c0_0 = arith.constant 0 : index
    %0 = vector.load %arg1[%c0, %c0_0] : memref<256x8xf32, #tpu.memory_space<vmem>>, vector<256x8xf32>
    %c0_1 = arith.constant 0 : index
    %c0_2 = arith.constant 0 : index
    %1 = vector.load %arg4[%c0_1, %c0_2] : memref<256x32xf32, #tpu.memory_space<vmem>>, vector<256x32xf32>
    %c0_3 = arith.constant 0 : index
    %c0_4 = arith.constant 0 : index
    %2 = vector.load %arg5[%c0_3, %c0_4] : memref<32x32xf32, #tpu.memory_space<vmem>>, vector<32x32xf32>
    %cst = arith.constant dense<0.000000e+00> : vector<256x32xf32>
    %3 = tpu.matmul %1, %2, %cst {dimension_numbers = #tpu.dot_dimension_numbers<[1], [0], [0], [1], [0, 0, 1, 1], [], []>} : vector<256x32xf32>, vector<32x32xf32>, vector<256x32xf32> -> vector<256x32xf32>
    %c0_5 = arith.constant 0 : index
    %c0_6 = arith.constant 0 : index
    %4 = vector.load %arg6[%c0_5, %c0_6] : memref<1x32xf32, #tpu.memory_space<vmem>>, vector<1x32xf32>
    %5 = vector.broadcast %4 : vector<1x32xf32> to vector<256x32xf32>
    %6 = arith.addf %3, %5 : vector<256x32xf32>
    %cst_7 = arith.constant 0.000000e+00 : f32
    %7 = vector.broadcast %cst_7 : f32 to vector<256x32xf32>
    %8 = arith.maximumf %6, %7 : vector<256x32xf32>
    %c0_8 = arith.constant 0 : index
    %c0_9 = arith.constant 0 : index
    %9 = vector.load %arg11[%c0_8, %c0_9] : memref<256x32xf32, #tpu.memory_space<vmem>>, vector<256x32xf32>
    tpu.vector_store %arg11[%c0_8, %c0_9], %8 {strides = array<i32>} : memref<256x32xf32, #tpu.memory_space<vmem>>, vector<256x32xf32>,
    %c0_10 = arith.constant 0 : index
    %c0_11 = arith.constant 0 : index
    %10 = vector.load %arg7[%c0_10, %c0_11] : memref<8x256xf32, #tpu.memory_space<vmem>>, vector<8x256xf32>
    %c0_12 = arith.constant 0 : index
    %c0_13 = arith.constant 0 : index
    %11 = vector.load %arg8[%c0_12, %c0_13] : memref<1x256xf32, #tpu.memory_space<vmem>>, vector<1x256xf32>
    %c0_14 = arith.constant 0 : index
    %c0_15 = arith.constant 0 : index
    %12 = vector.load %arg9[%c0_14, %c0_15] : memref<256x32xf32, #tpu.memory_space<vmem>>, vector<256x32xf32>
    %cst_16 = arith.constant dense<0.000000e+00> : vector<256x256xf32>
    %13 = tpu.matmul %0, %10, %cst_16 {dimension_numbers = #tpu.dot_dimension_numbers<[1], [0], [0], [1], [0, 0, 1, 1], [], []>} : vector<256x8xf32>, vector<8x256xf32>, vector<256x256xf32> -> vector<256x256xf32>
    %14 = vector.broadcast %11 : vector<1x256xf32> to vector<256x256xf32>
    %15 = arith.addf %13, %14 : vector<256x256xf32>
    %16 = tpu.iota {dimensions = array<i32: 1>} : vector<256x256xi32>
    %cst_17 = arith.constant dense<0x7F800000> : vector<256xf32>
    %17 = vector.multi_reduction <minimumf>, %15, %cst_17 [1] : vector<256x256xf32> to vector<256xf32>
    %18 = vector.shape_cast %17 : vector<256xf32> to vector<256x1xf32>
    %19 = vector.broadcast %18 : vector<256x1xf32> to vector<256x256xf32>
    %20 = arith.cmpf ole, %15, %19 : vector<256x256xf32>
    %c256_i32 = arith.constant 256 : i32
    %21 = vector.broadcast %c256_i32 : i32 to vector<256x256xi32>
    %22 = arith.select %20, %16, %21 : vector<256x256xi1>, vector<256x256xi32>
    %cst_18 = arith.constant dense<2147483647> : vector<256xi32>
    %23 = vector.multi_reduction <minsi>, %22, %cst_18 [1] : vector<256x256xi32> to vector<256xi32>
    %24 = vector.shape_cast %23 : vector<256xi32> to vector<256x1xi32>
    %25 = vector.broadcast %24 : vector<256x1xi32> to vector<256x256xi32>
    %26 = arith.cmpi eq, %16, %25 : vector<256x256xi32>
    %27 = arith.extui %26 : vector<256x256xi1> to vector<256x256xi32>
    %28 = arith.sitofp %27 : vector<256x256xi32> to vector<256x256xf32>
    %cst_19 = arith.constant dense<0.000000e+00> : vector<256x32xf32>
    %29 = tpu.matmul %28, %12, %cst_19 {dimension_numbers = #tpu.dot_dimension_numbers<[1], [0], [0], [1], [0, 0, 1, 1], [], []>} : vector<256x256xf32>, vector<256x32xf32>, vector<256x32xf32> -> vector<256x32xf32>
    %30 = tpu.concatenate %8, %29 in 1 : vector<256x32xf32>, vector<256x32xf32> -> vector<256x64xf32>
    %c0_20 = arith.constant 0 : index
    %c0_21 = arith.constant 0 : index
    %31 = vector.load %arg2[%c0_20, %c0_21] : memref<64x128xf32, #tpu.memory_space<vmem>>, vector<64x128xf32>
    %cst_22 = arith.constant dense<0.000000e+00> : vector<256x128xf32>
    %32 = tpu.matmul %30, %31, %cst_22 {dimension_numbers = #tpu.dot_dimension_numbers<[1], [0], [0], [1], [0, 0, 1, 1], [], []>} : vector<256x64xf32>, vector<64x128xf32>, vector<256x128xf32> -> vector<256x128xf32>
    %c0_23 = arith.constant 0 : index
    %c0_24 = arith.constant 0 : index
    %33 = vector.load %arg3[%c0_23, %c0_24] : memref<1x128xf32, #tpu.memory_space<vmem>>, vector<1x128xf32>
    %34 = vector.broadcast %33 : vector<1x128xf32> to vector<256x128xf32>
    %35 = arith.addf %32, %34 : vector<256x128xf32>
    %c0_25 = arith.constant 0 : index
    %c0_26 = arith.constant 0 : index
    %36 = vector.load %arg10[%c0_25, %c0_26] : memref<256x128xf32, #tpu.memory_space<vmem>>, vector<256x128xf32>
    tpu.vector_store %arg10[%c0_25, %c0_26], %35 {strides = array<i32>} : memref<256x128xf32, #tpu.memory_space<vmem>>, vector<256x128xf32>,
    return
  }
  func.func @transform_0(%arg0: i32) -> (i32, i32) {
    %c0_i32 = arith.constant 0 : i32
    %c0_i32_0 = arith.constant 0 : i32
    return %arg0, %c0_i32 : i32, i32
  }
  func.func @transform_1(%arg0: i32) -> (i32, i32) {
    %c0_i32 = arith.constant 0 : i32
    %c0_i32_0 = arith.constant 0 : i32
    %c0_i32_1 = arith.constant 0 : i32
    return %c0_i32, %c0_i32_0 : i32, i32
  }
  func.func @transform_2(%arg0: i32) -> (i32, i32) {
    %c0_i32 = arith.constant 0 : i32
    %c0_i32_0 = arith.constant 0 : i32
    %c0_i32_1 = arith.constant 0 : i32
    return %c0_i32, %c0_i32_0 : i32, i32
  }
  func.func @transform_3(%arg0: i32) -> (i32, i32) {
    %c0_i32 = arith.constant 0 : i32
    %c0_i32_0 = arith.constant 0 : i32
    return %arg0, %c0_i32 : i32, i32
  }
  func.func @transform_4(%arg0: i32) -> (i32, i32) {
    %c0_i32 = arith.constant 0 : i32
    %c0_i32_0 = arith.constant 0 : i32
    %c0_i32_1 = arith.constant 0 : i32
    return %c0_i32, %c0_i32_0 : i32, i32
  }
  func.func @transform_5(%arg0: i32) -> (i32, i32) {
    %c0_i32 = arith.constant 0 : i32
    %c0_i32_0 = arith.constant 0 : i32
    %c0_i32_1 = arith.constant 0 : i32
    return %c0_i32, %c0_i32_0 : i32, i32
  }
  func.func @transform_6(%arg0: i32) -> (i32, i32) {
    %c0_i32 = arith.constant 0 : i32
    %c0_i32_0 = arith.constant 0 : i32
    %c0_i32_1 = arith.constant 0 : i32
    return %c0_i32, %c0_i32_0 : i32, i32
  }
  func.func @transform_7(%arg0: i32) -> (i32, i32) {
    %c0_i32 = arith.constant 0 : i32
    %c0_i32_0 = arith.constant 0 : i32
    %c0_i32_1 = arith.constant 0 : i32
    return %c0_i32, %c0_i32_0 : i32, i32
  }
  func.func @transform_8(%arg0: i32) -> (i32, i32) {
    %c0_i32 = arith.constant 0 : i32
    %c0_i32_0 = arith.constant 0 : i32
    %c0_i32_1 = arith.constant 0 : i32
    return %c0_i32, %c0_i32_0 : i32, i32
  }
  func.func @transform_9(%arg0: i32) -> (i32, i32) {
    %c0_i32 = arith.constant 0 : i32
    %c0_i32_0 = arith.constant 0 : i32
    return %arg0, %c0_i32 : i32, i32
  }
  func.func @transform_10(%arg0: i32) -> (i32, i32) {
    %c0_i32 = arith.constant 0 : i32
    %c0_i32_0 = arith.constant 0 : i32
    return %arg0, %c0_i32 : i32, i32
  }
}

</mosaic_0001>

<llo_original>
// kernel: tpu_custom_call.1
$region0: #{tpu_custom_call.1}
  #allocation0 [shape = 'u32[]', space=smem, size = 0x4, offset = 0x4, fixed_abs, tag = 'smem constant byte address 0x4 - core index']
  #allocation1 [shape = 'u32[144,128]{1,0:T(1,128)}', space=vmem, size = 0x12000, scoped, tag = 'internal scratch']
  %s0 = inlined_call_operand.vmem [shape: f32[256,8], index: 0, kind: input, shape index: {}]
  %s1 = inlined_call_operand.vmem [shape: f32[64,128], index: 1, kind: input, shape index: {}]
  %s2 = inlined_call_operand.vmem [shape: f32[1,128], index: 2, kind: input, shape index: {}]
  %s3 = inlined_call_operand.vmem [shape: f32[256,32], index: 3, kind: input, shape index: {}]
  %s4 = inlined_call_operand.vmem [shape: f32[32,32], index: 4, kind: input, shape index: {}]
  %s5 = inlined_call_operand.vmem [shape: f32[1,32], index: 5, kind: input, shape index: {}]
  %s6 = inlined_call_operand.vmem [shape: f32[8,256], index: 6, kind: input, shape index: {}]
  %s7 = inlined_call_operand.vmem [shape: f32[1,256], index: 7, kind: input, shape index: {}]
  %s8 = inlined_call_operand.vmem [shape: f32[256,32], index: 8, kind: input, shape index: {}]
  %s9 = inlined_call_operand.hbm [shape: f32[256,128], index: 9, kind: output, shape index: {0}]
  %s10 = inlined_call_operand.vmem [shape: f32[256,32], index: 10, kind: output, shape index: {1}]
  %11 = xla_tuple %s9, %s10
  %s12 = sld [smem:[#allocation0]]
  $region54: #{tpu_custom_call.1} parent=0
    _
  %s14 = ssub.s32 1, %s12
  %s15 = scalar_select 0, %s14, %s12
  $region1: #{tpu_custom_call.1} parent=0
    #allocation2 [shape = 'u8[131072]{0}', space=vmem, size = 0x20000, scoped, tag = 'output window, operand 0, single buffered']
    #allocation3 [shape = 's32[1]{0}', space=sflag, size = 0x4, scoped, tag = 'scoped memory for tpu_custom_call.1']
    %16 = vsyncpa [#allocation3], 0
    // Predicated region
    $region2: #{tpu_custom_call.1} parent=1 // pred_check
      _
    $region3: #{tpu_custom_call.1} parent=1 // pred_check_branch
      %18 = sbr.rel (0) target = $region5
    $region4: #{tpu_custom_call.1} parent=1 // pred_region
      _
    $region5: #{tpu_custom_call.1} parent=1 // pred_fallthru
      _
    // Predicated region
    $region6: #{tpu_custom_call.1} parent=1 // pred_check
      _
    $region7: #{tpu_custom_call.1} parent=1 // pred_check_branch
      %20 = sbr.rel (0) target = $region9
    $region8: #{tpu_custom_call.1} parent=1 // pred_region
      _
    $region9: #{tpu_custom_call.1} parent=1 // pred_fallthru
      _
    // Predicated region
    $region10: #{tpu_custom_call.1} parent=1 // pred_check
      _
    $region11: #{tpu_custom_call.1} parent=1 // pred_check_branch
      %22 = sbr.rel (0) target = $region13
    $region12: #{tpu_custom_call.1} parent=1 // pred_region
      _
    $region13: #{tpu_custom_call.1} parent=1 // pred_fallthru
      _
    // Predicated region
    $region14: #{tpu_custom_call.1} parent=1 // pred_check
      _
    $region15: #{tpu_custom_call.1} parent=1 // pred_check_branch
      %24 = sbr.rel (0) target = $region17
    $region16: #{tpu_custom_call.1} parent=1 // pred_region
      _
    $region17: #{tpu_custom_call.1} parent=1 // pred_fallthru
      _
    // Predicated region
    $region18: #{tpu_custom_call.1} parent=1 // pred_check
      _
    $region19: #{tpu_custom_call.1} parent=1 // pred_check_branch
      %26 = sbr.rel (0) target = $region21
    $region20: #{tpu_custom_call.1} parent=1 // pred_region
      _
    $region21: #{tpu_custom_call.1} parent=1 // pred_fallthru
      _
    // Predicated region
    $region22: #{tpu_custom_call.1} parent=1 // pred_check
      _
    $region23: #{tpu_custom_call.1} parent=1 // pred_check_branch
      %28 = sbr.rel (0) target = $region25
    $region24: #{tpu_custom_call.1} parent=1 // pred_region
      _
    $region25: #{tpu_custom_call.1} parent=1 // pred_fallthru
      _
    // Predicated region
    $region26: #{tpu_custom_call.1} parent=1 // pred_check
      _
    $region27: #{tpu_custom_call.1} parent=1 // pred_check_branch
      %30 = sbr.rel (0) target = $region29
    $region28: #{tpu_custom_call.1} parent=1 // pred_region
      _
    $region29: #{tpu_custom_call.1} parent=1 // pred_fallthru
      _
    // Predicated region
    $region30: #{tpu_custom_call.1} parent=1 // pred_check
      _
    $region31: #{tpu_custom_call.1} parent=1 // pred_check_branch
      %32 = sbr.rel (0) target = $region33
    $region32: #{tpu_custom_call.1} parent=1 // pred_region
      _
    $region33: #{tpu_custom_call.1} parent=1 // pred_fallthru
      _
    // Predicated region
    $region34: #{tpu_custom_call.1} parent=1 // pred_check
      _
    $region35: #{tpu_custom_call.1} parent=1 // pred_check_branch
      %34 = sbr.rel (0) target = $region37
    $region36: #{tpu_custom_call.1} parent=1 // pred_region
      _
    $region37: #{tpu_custom_call.1} parent=1 // pred_fallthru
      _
    %v35 = vld [vmem:[%s0] sm:$0xff]
    %v36 = vld [vmem:[%s0 + $0x8] sm:$0xff]
    %v37 = vld [vmem:[%s0 + $0x10] sm:$0xff]
    %v38 = vld [vmem:[%s0 + $0x18] sm:$0xff]
    %v39 = vld [vmem:[%s0 + $0x20] sm:$0xff]
    %v40 = vld [vmem:[%s0 + $0x28] sm:$0xff]
    %v41 = vld [vmem:[%s0 + $0x30] sm:$0xff]
    %v42 = vld [vmem:[%s0 + $0x38] sm:$0xff]
    %v43 = vld [vmem:[%s0 + $0x40] sm:$0xff]
    %v44 = vld [vmem:[%s0 + $0x48] sm:$0xff]
    %v45 = vld [vmem:[%s0 + $0x50] sm:$0xff]
    %v46 = vld [vmem:[%s0 + $0x58] sm:$0xff]
    %v47 = vld [vmem:[%s0 + $0x60] sm:$0xff]
    %v48 = vld [vmem:[%s0 + $0x68] sm:$0xff]
    %v49 = vld [vmem:[%s0 + $0x70] sm:$0xff]
    %v50 = vld [vmem:[%s0 + $0x78] sm:$0xff]
    %v51 = vld [vmem:[%s0 + $0x80] sm:$0xff]
    %v52 = vld [vmem:[%s0 + $0x88] sm:$0xff]
    %v53 = vld [vmem:[%s0 + $0x90] sm:$0xff]
    %v54 = vld [vmem:[%s0 + $0x98] sm:$0xff]
    %v55 = vld [vmem:[%s0 + $0xa0] sm:$0xff]
    %v56 = vld [vmem:[%s0 + $0xa8] sm:$0xff]
    %v57 = vld [vmem:[%s0 + $0xb0] sm:$0xff]
    %v58 = vld [vmem:[%s0 + $0xb8] sm:$0xff]
    %v59 = vld [vmem:[%s0 + $0xc0] sm:$0xff]
    %v60 = vld [vmem:[%s0 + $0xc8] sm:$0xff]
    %v61 = vld [vmem:[%s0 + $0xd0] sm:$0xff]
    %v62 = vld [vmem:[%s0 + $0xd8] sm:$0xff]
    %v63 = vld [vmem:[%s0 + $0xe0] sm:$0xff]
    %v64 = vld [vmem:[%s0 + $0xe8] sm:$0xff]
    %v65 = vld [vmem:[%s0 + $0xf0] sm:$0xff]
    %v66 = vld [vmem:[%s0 + $0xf8] sm:$0xff]
    %v67 = vld [vmem:[%s3] sm:$0xff]
    %v68 = vld [vmem:[%s3 + $0x8] sm:$0xff]
    %v69 = vld [vmem:[%s3 + $0x10] sm:$0xff]
    %v70 = vld [vmem:[%s3 + $0x18] sm:$0xff]
    %v71 = vld [vmem:[%s3 + $0x20] sm:$0xff]
    %v72 = vld [vmem:[%s3 + $0x28] sm:$0xff]
    %v73 = vld [vmem:[%s3 + $0x30] sm:$0xff]
    %v74 = vld [vmem:[%s3 + $0x38] sm:$0xff]
    %v75 = vld [vmem:[%s3 + $0x40] sm:$0xff]
    %v76 = vld [vmem:[%s3 + $0x48] sm:$0xff]
    %v77 = vld [vmem:[%s3 + $0x50] sm:$0xff]
    %v78 = vld [vmem:[%s3 + $0x58] sm:$0xff]
    %v79 = vld [vmem:[%s3 + $0x60] sm:$0xff]
    %v80 = vld [vmem:[%s3 + $0x68] sm:$0xff]
    %v81 = vld [vmem:[%s3 + $0x70] sm:$0xff]
    %v82 = vld [vmem:[%s3 + $0x78] sm:$0xff]
    %v83 = vld [vmem:[%s3 + $0x80] sm:$0xff]
    %v84 = vld [vmem:[%s3 + $0x88] sm:$0xff]
    %v85 = vld [vmem:[%s3 + $0x90] sm:$0xff]
    %v86 = vld [vmem:[%s3 + $0x98] sm:$0xff]
    %v87 = vld [vmem:[%s3 + $0xa0] sm:$0xff]
    %v88 = vld [vmem:[%s3 + $0xa8] sm:$0xff]
    %v89 = vld [vmem:[%s3 + $0xb0] sm:$0xff]
    %v90 = vld [vmem:[%s3 + $0xb8] sm:$0xff]
    %v91 = vld [vmem:[%s3 + $0xc0] sm:$0xff]
    %v92 = vld [vmem:[%s3 + $0xc8] sm:$0xff]
    %v93 = vld [vmem:[%s3 + $0xd0] sm:$0xff]
    %v94 = vld [vmem:[%s3 + $0xd8] sm:$0xff]
    %v95 = vld [vmem:[%s3 + $0xe0] sm:$0xff]
    %v96 = vld [vmem:[%s3 + $0xe8] sm:$0xff]
    %v97 = vld [vmem:[%s3 + $0xf0] sm:$0xff]
    %v98 = vld [vmem:[%s3 + $0xf8] sm:$0xff]
    %v99 = vld [vmem:[%s4] sm:$0xff]
    %v100 = vld [vmem:[%s4 + $0x8] sm:$0xff]
    %v101 = vld [vmem:[%s4 + $0x10] sm:$0xff]
    %v102 = vld [vmem:[%s4 + $0x18] sm:$0xff]
    %v103 = vld [vmem:[%s5] sm:$0x1]
    %v105 = vlaneseq
    %v106 = vshrl.u32 %v105, 7
    %v107 = vsub.s32 0, %v106
    %v108 = vrot.slane %v103, %v107
    %vm110 = vcmask 261120
    %v112 = vsel %vm110, %v67, 0
    %v115 = vsel %vm110, %v68, 0
    %v118 = vsel %vm110, %v69, 0
    %v121 = vsel %vm110, %v70, 0
    %v124 = vsel %vm110, %v71, 0
    %v127 = vsel %vm110, %v72, 0
    %v130 = vsel %vm110, %v73, 0
    %v133 = vsel %vm110, %v74, 0
    %v136 = vsel %vm110, %v75, 0
    %v139 = vsel %vm110, %v76, 0
    %v142 = vsel %vm110, %v77, 0
    %v145 = vsel %vm110, %v78, 0
    %v148 = vsel %vm110, %v79, 0
    %v151 = vsel %vm110, %v80, 0
    %v154 = vsel %vm110, %v81, 0
    %v157 = vsel %vm110, %v82, 0
    %v160 = vsel %vm110, %v83, 0
    %v163 = vsel %vm110, %v84, 0
    %v166 = vsel %vm110, %v85, 0
    %v169 = vsel %vm110, %v86, 0
    %v172 = vsel %vm110, %v87, 0
    %v175 = vsel %vm110, %v88, 0
    %v178 = vsel %vm110, %v89, 0
    %v181 = vsel %vm110, %v90, 0
    %v184 = vsel %vm110, %v91, 0
    %v187 = vsel %vm110, %v92, 0
    %v190 = vsel %vm110, %v93, 0
    %v193 = vsel %vm110, %v94, 0
    %v196 = vsel %vm110, %v95, 0
    %v199 = vsel %vm110, %v96, 0
    %v202 = vsel %vm110, %v97, 0
    %v205 = vsel %vm110, %v98, 0
    %207 = vmatprep.subr.mxu0 0.0
    %208 = vmatpush1.msra.mxu0 %v99
    %209 = vmatprep.subr.mxu0 0.0
    %210 = vmatpush1.msra.mxu0 %v100
    %211 = vmatprep.subr.mxu0 0.0
    %212 = vmatpush1.msra.mxu0 %v101
    %213 = vmatprep.subr.mxu0 0.0
    %214 = vmatpush1.msra.mxu0 %v102
    %215 = vmatprep.subr.mxu0 0.0
    %216 = vmatpush1.msra.mxu0 0.0
    %217 = vmatprep.subr.mxu0 0.0
    %218 = vmatpush1.msra.mxu0 0.0
    %219 = vmatprep.subr.mxu0 0.0
    %220 = vmatpush1.msra.mxu0 0.0
    %221 = vmatprep.subr.mxu0 0.0
    %222 = vmatpush1.msra.mxu0 0.0
    %223 = vmatprep.subr.mxu0 0.0
    %224 = vmatpush1.msra.mxu0 0.0
    %225 = vmatprep.subr.mxu0 0.0
    %226 = vmatpush1.msra.mxu0 0.0
    %227 = vmatprep.subr.mxu0 0.0
    %228 = vmatpush1.msra.mxu0 0.0
    %229 = vmatprep.subr.mxu0 0.0
    %230 = vmatpush1.msra.mxu0 0.0
    %231 = vmatprep.subr.mxu0 0.0
    %232 = vmatpush1.msra.mxu0 0.0
    %233 = vmatprep.subr.mxu0 0.0
    %234 = vmatpush1.msra.mxu0 0.0
    %235 = vmatprep.subr.mxu0 0.0
    %236 = vmatpush1.msra.mxu0 0.0
    %237 = vmatprep.subr.mxu0 0.0
    %238 = vmatpush1.msra.mxu0 0.0
    %239 = vmatprep.subr.mxu0 0.0
    %240 = vmatpush1.msra.mxu0 0.0
    %241 = vmatprep.subr.mxu0 0.0
    %242 = vmatpush1.msra.mxu0 0.0
    %243 = vmatprep.subr.mxu0 0.0
    %244 = vmatpush1.msra.mxu0 0.0
    %245 = vmatprep.subr.mxu0 0.0
    %246 = vmatpush1.msra.mxu0 0.0
    %247 = vmatprep.subr.mxu0 0.0
    %248 = vmatpush1.msra.mxu0 0.0
    %249 = vmatprep.subr.mxu0 0.0
    %250 = vmatpush1.msra.mxu0 0.0
    %251 = vmatprep.subr.mxu0 0.0
    %252 = vmatpush1.msra.mxu0 0.0
    %253 = vmatprep.subr.mxu0 0.0
    %254 = vmatpush1.msra.mxu0 0.0
    %255 = vmatprep.subr.mxu0 0.0
    %256 = vmatpush1.msra.mxu0 0.0
    %257 = vmatprep.subr.mxu0 0.0
    %258 = vmatpush1.msra.mxu0 0.0
    %259 = vmatprep.subr.mxu0 0.0
    %260 = vmatpush1.msra.mxu0 0.0
    %261 = vmatprep.subr.mxu0 0.0
    %262 = vmatpush1.msra.mxu0 0.0
    %263 = vmatprep.subr.mxu0 0.0
    %264 = vmatpush1.msra.mxu0 0.0
    %265 = vmatprep.subr.mxu0 0.0
    %266 = vmatpush1.msra.mxu0 0.0
    %267 = vmatprep.subr.mxu0 0.0
    %268 = vmatpush1.msra.mxu0 0.0
    %269 = vmatprep.subr.mxu0 0.0
    %270 = vmatpush1.msra.mxu0 0.0
    %271 = vmatprep.mubr.f32.mxu0 0.0
    %272 = vmatmul.mubr.f32.gmra.mrb[0].mxu0 %v112
    %v273 = vpop.f32.mrb[0].mxu0
    %v274 = vadd.f32 %v108, %v273
    %v275 = vpop.f32.mrb[0].mxu0
    %276 = vmatprep.mubr.f32.mxu0 0.0
    %277 = vmatmul.mubr.f32.gmra.mrb[0].mxu0 %v115
    %v278 = vpop.f32.mrb[0].mxu0
    %v279 = vadd.f32 %v108, %v278
    %v280 = vpop.f32.mrb[0].mxu0
    %281 = vmatprep.mubr.f32.mxu0 0.0
    %282 = vmatmul.mubr.f32.gmra.mrb[0].mxu0 %v118
    %v283 = vpop.f32.mrb[0].mxu0
    %v284 = vadd.f32 %v108, %v283
    %v285 = vpop.f32.mrb[0].mxu0
    %286 = vmatprep.mubr.f32.mxu0 0.0
    %287 = vmatmul.mubr.f32.gmra.mrb[0].mxu0 %v121
    %v288 = vpop.f32.mrb[0].mxu0
    %v289 = vadd.f32 %v108, %v288
    %v290 = vpop.f32.mrb[0].mxu0
    %291 = vmatprep.mubr.f32.mxu0 0.0
    %292 = vmatmul.mubr.f32.gmra.mrb[0].mxu0 %v124
    %v293 = vpop.f32.mrb[0].mxu0
    %v294 = vadd.f32 %v108, %v293
    %v295 = vpop.f32.mrb[0].mxu0
    %296 = vmatprep.mubr.f32.mxu0 0.0
    %297 = vmatmul.mubr.f32.gmra.mrb[0].mxu0 %v127
    %v298 = vpop.f32.mrb[0].mxu0
    %v299 = vadd.f32 %v108, %v298
    %v300 = vpop.f32.mrb[0].mxu0
    %301 = vmatprep.mubr.f32.mxu0 0.0
    %302 = vmatmul.mubr.f32.gmra.mrb[0].mxu0 %v130
    %v303 = vpop.f32.mrb[0].mxu0
    %v304 = vadd.f32 %v108, %v303
    %v305 = vpop.f32.mrb[0].mxu0
    %306 = vmatprep.mubr.f32.mxu0 0.0
    %307 = vmatmul.mubr.f32.gmra.mrb[0].mxu0 %v133
    %v308 = vpop.f32.mrb[0].mxu0
    %v309 = vadd.f32 %v108, %v308
    %v310 = vpop.f32.mrb[0].mxu0
    %311 = vmatprep.mubr.f32.mxu0 0.0
    %312 = vmatmul.mubr.f32.gmra.mrb[0].mxu0 %v136
    %v313 = vpop.f32.mrb[0].mxu0
    %v314 = vadd.f32 %v108, %v313
    %v315 = vpop.f32.mrb[0].mxu0
    %316 = vmatprep.mubr.f32.mxu0 0.0
    %317 = vmatmul.mubr.f32.gmra.mrb[0].mxu0 %v139
    %v318 = vpop.f32.mrb[0].mxu0
    %v319 = vadd.f32 %v108, %v318
    %v320 = vpop.f32.mrb[0].mxu0
    %321 = vmatprep.mubr.f32.mxu0 0.0
    %322 = vmatmul.mubr.f32.gmra.mrb[0].mxu0 %v142
    %v323 = vpop.f32.mrb[0].mxu0
    %v324 = vadd.f32 %v108, %v323
    %v325 = vpop.f32.mrb[0].mxu0
    %326 = vmatprep.mubr.f32.mxu0 0.0
    %327 = vmatmul.mubr.f32.gmra.mrb[0].mxu0 %v145
    %v328 = vpop.f32.mrb[0].mxu0
    %v329 = vadd.f32 %v108, %v328
    %v330 = vpop.f32.mrb[0].mxu0
    %331 = vmatprep.mubr.f32.mxu0 0.0
    %332 = vmatmul.mubr.f32.gmra.mrb[0].mxu0 %v148
    %v333 = vpop.f32.mrb[0].mxu0
    %v334 = vadd.f32 %v108, %v333
    %v335 = vpop.f32.mrb[0].mxu0
    %336 = vmatprep.mubr.f32.mxu0 0.0
    %337 = vmatmul.mubr.f32.gmra.mrb[0].mxu0 %v151
    %v338 = vpop.f32.mrb[0].mxu0
    %v339 = vadd.f32 %v108, %v338
    %v340 = vpop.f32.mrb[0].mxu0
    %341 = vmatprep.mubr.f32.mxu0 0.0
    %342 = vmatmul.mubr.f32.gmra.mrb[0].mxu0 %v154
    %v343 = vpop.f32.mrb[0].mxu0
    %v344 = vadd.f32 %v108, %v343
    %v345 = vpop.f32.mrb[0].mxu0
    %346 = vmatprep.mubr.f32.mxu0 0.0
    %347 = vmatmul.mubr.f32.gmra.mrb[0].mxu0 %v157
    %v348 = vpop.f32.mrb[0].mxu0
    %v349 = vadd.f32 %v108, %v348
    %v350 = vpop.f32.mrb[0].mxu0
    %351 = vmatprep.mubr.f32.mxu0 0.0
    %352 = vmatmul.mubr.f32.gmra.mrb[0].mxu0 %v160
    %v353 = vpop.f32.mrb[0].mxu0
    %v354 = vadd.f32 %v108, %v353
    %v355 = vpop.f32.mrb[0].mxu0
    %356 = vmatprep.mubr.f32.mxu0 0.0
    %357 = vmatmul.mubr.f32.gmra.mrb[0].mxu0 %v163
    %v358 = vpop.f32.mrb[0].mxu0
    %v359 = vadd.f32 %v108, %v358
    %v360 = vpop.f32.mrb[0].mxu0
    %361 = vmatprep.mubr.f32.mxu0 0.0
    %362 = vmatmul.mubr.f32.gmra.mrb[0].mxu0 %v166
    %v363 = vpop.f32.mrb[0].mxu0
    %v364 = vadd.f32 %v108, %v363
    %v365 = vpop.f32.mrb[0].mxu0
    %366 = vmatprep.mubr.f32.mxu0 0.0
    %367 = vmatmul.mubr.f32.gmra.mrb[0].mxu0 %v169
    %v368 = vpop.f32.mrb[0].mxu0
    %v369 = vadd.f32 %v108, %v368
    %v370 = vpop.f32.mrb[0].mxu0
    %371 = vmatprep.mubr.f32.mxu0 0.0
    %372 = vmatmul.mubr.f32.gmra.mrb[0].mxu0 %v172
    %v373 = vpop.f32.mrb[0].mxu0
    %v374 = vadd.f32 %v108, %v373
    %v375 = vpop.f32.mrb[0].mxu0
    %376 = vmatprep.mubr.f32.mxu0 0.0
    %377 = vmatmul.mubr.f32.gmra.mrb[0].mxu0 %v175
    %v378 = vpop.f32.mrb[0].mxu0
    %v379 = vadd.f32 %v108, %v378
    %v380 = vpop.f32.mrb[0].mxu0
    %381 = vmatprep.mubr.f32.mxu0 0.0
    %382 = vmatmul.mubr.f32.gmra.mrb[0].mxu0 %v178
    %v383 = vpop.f32.mrb[0].mxu0
    %v384 = vadd.f32 %v108, %v383
    %v385 = vpop.f32.mrb[0].mxu0
    %386 = vmatprep.mubr.f32.mxu0 0.0
    %387 = vmatmul.mubr.f32.gmra.mrb[0].mxu0 %v181
    %v388 = vpop.f32.mrb[0].mxu0
    %v389 = vadd.f32 %v108, %v388
    %v390 = vpop.f32.mrb[0].mxu0
    %391 = vmatprep.mubr.f32.mxu0 0.0
    %392 = vmatmul.mubr.f32.gmra.mrb[0].mxu0 %v184
    %v393 = vpop.f32.mrb[0].mxu0
    %v394 = vadd.f32 %v108, %v393
    %v395 = vpop.f32.mrb[0].mxu0
    %396 = vmatprep.mubr.f32.mxu0 0.0
    %397 = vmatmul.mubr.f32.gmra.mrb[0].mxu0 %v187
    %v398 = vpop.f32.mrb[0].mxu0
    %v399 = vadd.f32 %v108, %v398
    %v400 = vpop.f32.mrb[0].mxu0
    %401 = vmatprep.mubr.f32.mxu0 0.0
    %402 = vmatmul.mubr.f32.gmra.mrb[0].mxu0 %v190
    %v403 = vpop.f32.mrb[0].mxu0
    %v404 = vadd.f32 %v108, %v403
    %v405 = vpop.f32.mrb[0].mxu0
    %406 = vmatprep.mubr.f32.mxu0 0.0
    %407 = vmatmul.mubr.f32.gmra.mrb[0].mxu0 %v193
    %v408 = vpop.f32.mrb[0].mxu0
    %v409 = vadd.f32 %v108, %v408
    %v410 = vpop.f32.mrb[0].mxu0
    %411 = vmatprep.mubr.f32.mxu0 0.0
    %412 = vmatmul.mubr.f32.gmra.mrb[0].mxu0 %v196
    %v413 = vpop.f32.mrb[0].mxu0
    %v414 = vadd.f32 %v108, %v413
    %v415 = vpop.f32.mrb[0].mxu0
    %416 = vmatprep.mubr.f32.mxu0 0.0
    %417 = vmatmul.mubr.f32.gmra.mrb[0].mxu0 %v199
    %v418 = vpop.f32.mrb[0].mxu0
    %v419 = vadd.f32 %v108, %v418
    %v420 = vpop.f32.mrb[0].mxu0
    %421 = vmatprep.mubr.f32.mxu0 0.0
    %422 = vmatmul.mubr.f32.gmra.mrb[0].mxu0 %v202
    %v423 = vpop.f32.mrb[0].mxu0
    %v424 = vadd.f32 %v108, %v423
    %v425 = vpop.f32.mrb[0].mxu0
    %426 = vmatprep.mubr.f32.mxu0 0.0
    %427 = vmatmul.mubr.f32.gmra.mrb[0].mxu0 %v205
    %v428 = vpop.f32.mrb[0].mxu0
    %v429 = vadd.f32 %v108, %v428
    %v430 = vpop.f32.mrb[0].mxu0
    %431 = vdwg.mxu0
    %v432 = vmax.f32 %v274, 0.0
    %v433 = vmax.f32 %v279, 0.0
    %v434 = vmax.f32 %v284, 0.0
    %v435 = vmax.f32 %v289, 0.0
    %v436 = vmax.f32 %v294, 0.0
    %v437 = vmax.f32 %v299, 0.0
    %v438 = vmax.f32 %v304, 0.0
    %v439 = vmax.f32 %v309, 0.0
    %v440 = vmax.f32 %v314, 0.0
    %v441 = vmax.f32 %v319, 0.0
    %v442 = vmax.f32 %v324, 0.0
    %v443 = vmax.f32 %v329, 0.0
    %v444 = vmax.f32 %v334, 0.0
    %v445 = vmax.f32 %v339, 0.0
    %v446 = vmax.f32 %v344, 0.0
    %v447 = vmax.f32 %v349, 0.0
    %v448 = vmax.f32 %v354, 0.0
    %v449 = vmax.f32 %v359, 0.0
    %v450 = vmax.f32 %v364, 0.0
    %v451 = vmax.f32 %v369, 0.0
    %v452 = vmax.f32 %v374, 0.0
    %v453 = vmax.f32 %v379, 0.0
    %v454 = vmax.f32 %v384, 0.0
    %v455 = vmax.f32 %v389, 0.0
    %v456 = vmax.f32 %v394, 0.0
    %v457 = vmax.f32 %v399, 0.0
    %v458 = vmax.f32 %v404, 0.0
    %v459 = vmax.f32 %v409, 0.0
    %v460 = vmax.f32 %v414, 0.0
    %v461 = vmax.f32 %v419, 0.0
    %v462 = vmax.f32 %v424, 0.0
    %v463 = vmax.f32 %v429, 0.0
    %464 = vst.msk [vmem:[%s10] sm:$0xff] %vm110, %v432
    %465 = vst.msk [vmem:[%s10 + $0x8] sm:$0xff] %vm110, %v433
    %466 = vst.msk [vmem:[%s10 + $0x10] sm:$0xff] %vm110, %v434
    %467 = vst.msk [vmem:[%s10 + $0x18] sm:$0xff] %vm110, %v435
    %468 = vst.msk [vmem:[%s10 + $0x20] sm:$0xff] %vm110, %v436
    %469 = vst.msk [vmem:[%s10 + $0x28] sm:$0xff] %vm110, %v437
    %470 = vst.msk [vmem:[%s10 + $0x30] sm:$0xff] %vm110, %v438
    %471 = vst.msk [vmem:[%s10 + $0x38] sm:$0xff] %vm110, %v439
    %472 = vst.msk [vmem:[%s10 + $0x40] sm:$0xff] %vm110, %v440
    %473 = vst.msk [vmem:[%s10 + $0x48] sm:$0xff] %vm110, %v441
    %474 = vst.msk [vmem:[%s10 + $0x50] sm:$0xff] %vm110, %v442
    %475 = vst.msk [vmem:[%s10 + $0x58] sm:$0xff] %vm110, %v443
    %476 = vst.msk [vmem:[%s10 + $0x60] sm:$0xff] %vm110, %v444
    %477 = vst.msk [vmem:[%s10 + $0x68] sm:$0xff] %vm110, %v445
    %478 = vst.msk [vmem:[%s10 + $0x70] sm:$0xff] %vm110, %v446
    %479 = vst.msk [vmem:[%s10 + $0x78] sm:$0xff] %vm110, %v447
    %480 = vst.msk [vmem:[%s10 + $0x80] sm:$0xff] %vm110, %v448
    %481 = vst.msk [vmem:[%s10 + $0x88] sm:$0xff] %vm110, %v449
    %482 = vst.msk [vmem:[%s10 + $0x90] sm:$0xff] %vm110, %v450
    %483 = vst.msk [vmem:[%s10 + $0x98] sm:$0xff] %vm110, %v451
    %484 = vst.msk [vmem:[%s10 + $0xa0] sm:$0xff] %vm110, %v452
    %485 = vst.msk [vmem:[%s10 + $0xa8] sm:$0xff] %vm110, %v453
    %486 = vst.msk [vmem:[%s10 + $0xb0] sm:$0xff] %vm110, %v454
    %487 = vst.msk [vmem:[%s10 + $0xb8] sm:$0xff] %vm110, %v455
    %488 = vst.msk [vmem:[%s10 + $0xc0] sm:$0xff] %vm110, %v456
    %489 = vst.msk [vmem:[%s10 + $0xc8] sm:$0xff] %vm110, %v457
    %490 = vst.msk [vmem:[%s10 + $0xd0] sm:$0xff] %vm110, %v458
    %491 = vst.msk [vmem:[%s10 + $0xd8] sm:$0xff] %vm110, %v459
    %492 = vst.msk [vmem:[%s10 + $0xe0] sm:$0xff] %vm110, %v460
    %493 = vst.msk [vmem:[%s10 + $0xe8] sm:$0xff] %vm110, %v461
    %494 = vst.msk [vmem:[%s10 + $0xf0] sm:$0xff] %vm110, %v462
    %495 = vst.msk [vmem:[%s10 + $0xf8] sm:$0xff] %vm110, %v463
    %v496 = vld [vmem:[%s6] sm:$0xff]
    %v497 = vld [vmem:[%s6 + $0x8] sm:$0xff]
    %v498 = vld [vmem:[%s7] sm:$0x3]
    %v499 = vld [vmem:[%s8] sm:$0xff]
    %v500 = vld [vmem:[%s8 + $0x8] sm:$0xff]
    %v501 = vld [vmem:[%s8 + $0x10] sm:$0xff]
    %v502 = vld [vmem:[%s8 + $0x18] sm:$0xff]
    %v503 = vld [vmem:[%s8 + $0x20] sm:$0xff]
    %v504 = vld [vmem:[%s8 + $0x28] sm:$0xff]
    %v505 = vld [vmem:[%s8 + $0x30] sm:$0xff]
    %v506 = vld [vmem:[%s8 + $0x38] sm:$0xff]
    %v507 = vld [vmem:[%s8 + $0x40] sm:$0xff]
    %v508 = vld [vmem:[%s8 + $0x48] sm:$0xff]
    %v509 = vld [vmem:[%s8 + $0x50] sm:$0xff]
    %v510 = vld [vmem:[%s8 + $0x58] sm:$0xff]
    %v511 = vld [vmem:[%s8 + $0x60] sm:$0xff]
    %v512 = vld [vmem:[%s8 + $0x68] sm:$0xff]
    %v513 = vld [vmem:[%s8 + $0x70] sm:$0xff]
    %v514 = vld [vmem:[%s8 + $0x78] sm:$0xff]
    %v515 = vld [vmem:[%s8 + $0x80] sm:$0xff]
    %v516 = vld [vmem:[%s8 + $0x88] sm:$0xff]
    %v517 = vld [vmem:[%s8 + $0x90] sm:$0xff]
    %v518 = vld [vmem:[%s8 + $0x98] sm:$0xff]
    %v519 = vld [vmem:[%s8 + $0xa0] sm:$0xff]
    %v520 = vld [vmem:[%s8 + $0xa8] sm:$0xff]
    %v521 = vld [vmem:[%s8 + $0xb0] sm:$0xff]
    %v522 = vld [vmem:[%s8 + $0xb8] sm:$0xff]
    %v523 = vld [vmem:[%s8 + $0xc0] sm:$0xff]
    %v524 = vld [vmem:[%s8 + $0xc8] sm:$0xff]
    %v525 = vld [vmem:[%s8 + $0xd0] sm:$0xff]
    %v526 = vld [vmem:[%s8 + $0xd8] sm:$0xff]
    %v527 = vld [vmem:[%s8 + $0xe0] sm:$0xff]
    %v528 = vld [vmem:[%s8 + $0xe8] sm:$0xff]
    %v529 = vld [vmem:[%s8 + $0xf0] sm:$0xff]
    %v530 = vld [vmem:[%s8 + $0xf8] sm:$0xff]
    %v532 = vlaneseq
    %v533 = vshrl.u32 %v532, 7
    %v534 = vsub.s32 0, %v533
    %v535 = vrot.slane %v498, %v534
    %v536 = vlaneseq
    %v537 = vshrl.u32 %v536, 7
    %v538 = vsub.s32 1, %v537
    %v539 = vrot.slane %v498, %v538
    %vm542 = vcmask 64512
    %v544 = vsel %vm542, %v35, 0
    %v547 = vsel %vm542, %v36, 0
    %v550 = vsel %vm542, %v37, 0
    %v553 = vsel %vm542, %v38, 0
    %v556 = vsel %vm542, %v39, 0
    %v559 = vsel %vm542, %v40, 0
    %v562 = vsel %vm542, %v41, 0
    %v565 = vsel %vm542, %v42, 0
    %v568 = vsel %vm542, %v43, 0
    %v571 = vsel %vm542, %v44, 0
    %v574 = vsel %vm542, %v45, 0
    %v577 = vsel %vm542, %v46, 0
    %v580 = vsel %vm542, %v47, 0
    %v583 = vsel %vm542, %v48, 0
    %v586 = vsel %vm542, %v49, 0
    %v589 = vsel %vm542, %v50, 0
    %v592 = vsel %vm542, %v51, 0
    %v595 = vsel %vm542, %v52, 0
    %v598 = vsel %vm542, %v53, 0
    %v601 = vsel %vm542, %v54, 0
    %v604 = vsel %vm542, %v55, 0
    %v607 = vsel %vm542, %v56, 0
    %v610 = vsel %vm542, %v57, 0
    %v613 = vsel %vm542, %v58, 0
    %v616 = vsel %vm542, %v59, 0
    %v619 = vsel %vm542, %v60, 0
    %v622 = vsel %vm542, %v61, 0
    %v625 = vsel %vm542, %v62, 0
    %v628 = vsel %vm542, %v63, 0
    %v631 = vsel %vm542, %v64, 0
    %v634 = vsel %vm542, %v65, 0
    %v637 = vsel %vm542, %v66, 0
    %639 = vmatprep.subr.mxu0 %v497
    %640 = vmatpush1.msra.mxu0 %v496
    %641 = vmatprep.subr.mxu0 0.0
    %642 = vmatpush1.msra.mxu0 0.0
    %643 = vmatprep.subr.mxu0 0.0
    %644 = vmatpush1.msra.mxu0 0.0
    %645 = vmatprep.subr.mxu0 0.0
    %646 = vmatpush1.msra.mxu0 0.0
    %647 = vmatprep.subr.mxu0 0.0
    %648 = vmatpush1.msra.mxu0 0.0
    %649 = vmatprep.subr.mxu0 0.0
    %650 = vmatpush1.msra.mxu0 0.0
    %651 = vmatprep.subr.mxu0 0.0
    %652 = vmatpush1.msra.mxu0 0.0
    %653 = vmatprep.subr.mxu0 0.0
    %654 = vmatpush1.msra.mxu0 0.0
    %655 = vmatprep.subr.mxu0 0.0
    %656 = vmatpush1.msra.mxu0 0.0
    %657 = vmatprep.subr.mxu0 0.0
    %658 = vmatpush1.msra.mxu0 0.0
    %659 = vmatprep.subr.mxu0 0.0
    %660 = vmatpush1.msra.mxu0 0.0
    %661 = vmatprep.subr.mxu0 0.0
    %662 = vmatpush1.msra.mxu0 0.0
    %663 = vmatprep.subr.mxu0 0.0
    %664 = vmatpush1.msra.mxu0 0.0
    %665 = vmatprep.subr.mxu0 0.0
    %666 = vmatpush1.msra.mxu0 0.0
    %667 = vmatprep.subr.mxu0 0.0
    %668 = vmatpush1.msra.mxu0 0.0
    %669 = vmatprep.subr.mxu0 0.0
    %670 = vmatpush1.msra.mxu0 0.0
    %671 = vmatprep.subr.mxu0 0.0
    %672 = vmatpush1.msra.mxu0 0.0
    %673 = vmatprep.subr.mxu0 0.0
    %674 = vmatpush1.msra.mxu0 0.0
    %675 = vmatprep.subr.mxu0 0.0
    %676 = vmatpush1.msra.mxu0 0.0
    %677 = vmatprep.subr.mxu0 0.0
    %678 = vmatpush1.msra.mxu0 0.0
    %679 = vmatprep.subr.mxu0 0.0
    %680 = vmatpush1.msra.mxu0 0.0
    %681 = vmatprep.subr.mxu0 0.0
    %682 = vmatpush1.msra.mxu0 0.0
    %683 = vmatprep.subr.mxu0 0.0
    %684 = vmatpush1.msra.mxu0 0.0
    %685 = vmatprep.subr.mxu0 0.0
    %686 = vmatpush1.msra.mxu0 0.0
    %687 = vmatprep.subr.mxu0 0.0
    %688 = vmatpush1.msra.mxu0 0.0
    %689 = vmatprep.subr.mxu0 0.0
    %690 = vmatpush1.msra.mxu0 0.0
    %691 = vmatprep.subr.mxu0 0.0
    %692 = vmatpush1.msra.mxu0 0.0
    %693 = vmatprep.subr.mxu0 0.0
    %694 = vmatpush1.msra.mxu0 0.0
    %695 = vmatprep.subr.mxu0 0.0
    %696 = vmatpush1.msra.mxu0 0.0
    %697 = vmatprep.subr.mxu0 0.0
    %698 = vmatpush1.msra.mxu0 0.0
    %699 = vmatprep.subr.mxu0 0.0
    %700 = vmatpush1.msra.mxu0 0.0
    %701 = vmatprep.subr.mxu0 0.0
    %702 = vmatpush1.msra.mxu0 0.0
    %703 = vmatprep.mubr.f32.mxu0 0.0
    %704 = vmatmul.mubr.f32.gmra.mrb[0].mxu0 %v544
    %v705 = vpop.f32.mrb[0].mxu0
    %v706 = vadd.f32 %v535, %v705
    %v707 = vpop.f32.mrb[0].mxu0
    %v708 = vadd.f32 %v539, %v707
    %709 = vmatprep.mubr.f32.mxu0 0.0
    %710 = vmatmul.mubr.f32.gmra.mrb[0].mxu0 %v547
    %v711 = vpop.f32.mrb[0].mxu0
    %v712 = vadd.f32 %v535, %v711
    %v713 = vpop.f32.mrb[0].mxu0
    %v714 = vadd.f32 %v539, %v713
    %715 = vmatprep.mubr.f32.mxu0 0.0
    %716 = vmatmul.mubr.f32.gmra.mrb[0].mxu0 %v550
    %v717 = vpop.f32.mrb[0].mxu0
    %v718 = vadd.f32 %v535, %v717
    %v719 = vpop.f32.mrb[0].mxu0
    %v720 = vadd.f32 %v539, %v719
    %721 = vmatprep.mubr.f32.mxu0 0.0
    %722 = vmatmul.mubr.f32.gmra.mrb[0].mxu0 %v553
    %v723 = vpop.f32.mrb[0].mxu0
    %v724 = vadd.f32 %v535, %v723
    %v725 = vpop.f32.mrb[0].mxu0
    %v726 = vadd.f32 %v539, %v725
    %727 = vmatprep.mubr.f32.mxu0 0.0
    %728 = vmatmul.mubr.f32.gmra.mrb[0].mxu0 %v556
    %v729 = vpop.f32.mrb[0].mxu0
    %v730 = vadd.f32 %v535, %v729
    %v731 = vpop.f32.mrb[0].mxu0
    %v732 = vadd.f32 %v539, %v731
    %733 = vmatprep.mubr.f32.mxu0 0.0
    %734 = vmatmul.mubr.f32.gmra.mrb[0].mxu0 %v559
    %v735 = vpop.f32.mrb[0].mxu0
    %v736 = vadd.f32 %v535, %v735
    %v737 = vpop.f32.mrb[0].mxu0
    %v738 = vadd.f32 %v539, %v737
    %739 = vmatprep.mubr.f32.mxu0 0.0
    %740 = vmatmul.mubr.f32.gmra.mrb[0].mxu0 %v562
    %v741 = vpop.f32.mrb[0].mxu0
    %v742 = vadd.f32 %v535, %v741
    %v743 = vpop.f32.mrb[0].mxu0
    %v744 = vadd.f32 %v539, %v743
    %745 = vmatprep.mubr.f32.mxu0 0.0
    %746 = vmatmul.mubr.f32.gmra.mrb[0].mxu0 %v565
    %v747 = vpop.f32.mrb[0].mxu0
    %v748 = vadd.f32 %v535, %v747
    %v749 = vpop.f32.mrb[0].mxu0
    %v750 = vadd.f32 %v539, %v749
    %751 = vmatprep.mubr.f32.mxu0 0.0
    %752 = vmatmul.mubr.f32.gmra.mrb[0].mxu0 %v568
    %v753 = vpop.f32.mrb[0].mxu0
    %v754 = vadd.f32 %v535, %v753
    %v755 = vpop.f32.mrb[0].mxu0
    %v756 = vadd.f32 %v539, %v755
    %757 = vmatprep.mubr.f32.mxu0 0.0
    %758 = vmatmul.mubr.f32.gmra.mrb[0].mxu0 %v571
    %v759 = vpop.f32.mrb[0].mxu0
    %v760 = vadd.f32 %v535, %v759
    %v761 = vpop.f32.mrb[0].mxu0
    %v762 = vadd.f32 %v539, %v761
    %763 = vmatprep.mubr.f32.mxu0 0.0
    %764 = vmatmul.mubr.f32.gmra.mrb[0].mxu0 %v574
    %v765 = vpop.f32.mrb[0].mxu0
    %v766 = vadd.f32 %v535, %v765
    %v767 = vpop.f32.mrb[0].mxu0
    %v768 = vadd.f32 %v539, %v767
    %769 = vmatprep.mubr.f32.mxu0 0.0
    %770 = vmatmul.mubr.f32.gmra.mrb[0].mxu0 %v577
    %v771 = vpop.f32.mrb[0].mxu0
    %v772 = vadd.f32 %v535, %v771
    %v773 = vpop.f32.mrb[0].mxu0
    %v774 = vadd.f32 %v539, %v773
    %775 = vmatprep.mubr.f32.mxu0 0.0
    %776 = vmatmul.mubr.f32.gmra.mrb[0].mxu0 %v580
    %v777 = vpop.f32.mrb[0].mxu0
    %v778 = vadd.f32 %v535, %v777
    %v779 = vpop.f32.mrb[0].mxu0
    %v780 = vadd.f32 %v539, %v779
    %781 = vmatprep.mubr.f32.mxu0 0.0
    %782 = vmatmul.mubr.f32.gmra.mrb[0].mxu0 %v583
    %v783 = vpop.f32.mrb[0].mxu0
    %v784 = vadd.f32 %v535, %v783
    %v785 = vpop.f32.mrb[0].mxu0
    %v786 = vadd.f32 %v539, %v785
    %787 = vmatprep.mubr.f32.mxu0 0.0
    %788 = vmatmul.mubr.f32.gmra.mrb[0].mxu0 %v586
    %v789 = vpop.f32.mrb[0].mxu0
    %v790 = vadd.f32 %v535, %v789
    %v791 = vpop.f32.mrb[0].mxu0
    %v792 = vadd.f32 %v539, %v791
    %793 = vmatprep.mubr.f32.mxu0 0.0
    %794 = vmatmul.mubr.f32.gmra.mrb[0].mxu0 %v589
    %v795 = vpop.f32.mrb[0].mxu0
    %v796 = vadd.f32 %v535, %v795
    %v797 = vpop.f32.mrb[0].mxu0
    %v798 = vadd.f32 %v539, %v797
    %799 = vmatprep.mubr.f32.mxu0 0.0
    %800 = vmatmul.mubr.f32.gmra.mrb[0].mxu0 %v592
    %v801 = vpop.f32.mrb[0].mxu0
    %v802 = vadd.f32 %v535, %v801
    %v803 = vpop.f32.mrb[0].mxu0
    %v804 = vadd.f32 %v539, %v803
    %805 = vmatprep.mubr.f32.mxu0 0.0
    %806 = vmatmul.mubr.f32.gmra.mrb[0].mxu0 %v595
    %v807 = vpop.f32.mrb[0].mxu0
    %v808 = vadd.f32 %v535, %v807
    %v809 = vpop.f32.mrb[0].mxu0
    %v810 = vadd.f32 %v539, %v809
    %811 = vmatprep.mubr.f32.mxu0 0.0
    %812 = vmatmul.mubr.f32.gmra.mrb[0].mxu0 %v598
    %v813 = vpop.f32.mrb[0].mxu0
    %v814 = vadd.f32 %v535, %v813
    %v815 = vpop.f32.mrb[0].mxu0
    %v816 = vadd.f32 %v539, %v815
    %817 = vmatprep.mubr.f32.mxu0 0.0
    %818 = vmatmul.mubr.f32.gmra.mrb[0].mxu0 %v601
    %v819 = vpop.f32.mrb[0].mxu0
    %v820 = vadd.f32 %v535, %v819
    %v821 = vpop.f32.mrb[0].mxu0
    %v822 = vadd.f32 %v539, %v821
    %823 = vmatprep.mubr.f32.mxu0 0.0
    %824 = vmatmul.mubr.f32.gmra.mrb[0].mxu0 %v604
    %v825 = vpop.f32.mrb[0].mxu0
    %v826 = vadd.f32 %v535, %v825
    %v827 = vpop.f32.mrb[0].mxu0
    %v828 = vadd.f32 %v539, %v827
    %829 = vmatprep.mubr.f32.mxu0 0.0
    %830 = vmatmul.mubr.f32.gmra.mrb[0].mxu0 %v607
    %v831 = vpop.f32.mrb[0].mxu0
    %v832 = vadd.f32 %v535, %v831
    %v833 = vpop.f32.mrb[0].mxu0
    %v834 = vadd.f32 %v539, %v833
    %835 = vmatprep.mubr.f32.mxu0 0.0
    %836 = vmatmul.mubr.f32.gmra.mrb[0].mxu0 %v610
    %v837 = vpop.f32.mrb[0].mxu0
    %v838 = vadd.f32 %v535, %v837
    %v839 = vpop.f32.mrb[0].mxu0
    %v840 = vadd.f32 %v539, %v839
    %841 = vmatprep.mubr.f32.mxu0 0.0
    %842 = vmatmul.mubr.f32.gmra.mrb[0].mxu0 %v613
    %v843 = vpop.f32.mrb[0].mxu0
    %v844 = vadd.f32 %v535, %v843
    %v845 = vpop.f32.mrb[0].mxu0
    %v846 = vadd.f32 %v539, %v845
    %847 = vmatprep.mubr.f32.mxu0 0.0
    %848 = vmatmul.mubr.f32.gmra.mrb[0].mxu0 %v616
    %v849 = vpop.f32.mrb[0].mxu0
    %v850 = vadd.f32 %v535, %v849
    %v851 = vpop.f32.mrb[0].mxu0
    %v852 = vadd.f32 %v539, %v851
    %853 = vmatprep.mubr.f32.mxu0 0.0
    %854 = vmatmul.mubr.f32.gmra.mrb[0].mxu0 %v619
    %v855 = vpop.f32.mrb[0].mxu0
    %v856 = vadd.f32 %v535, %v855
    %v857 = vpop.f32.mrb[0].mxu0
    %v858 = vadd.f32 %v539, %v857
    %859 = vmatprep.mubr.f32.mxu0 0.0
    %860 = vmatmul.mubr.f32.gmra.mrb[0].mxu0 %v622
    %v861 = vpop.f32.mrb[0].mxu0
    %v862 = vadd.f32 %v535, %v861
    %v863 = vpop.f32.mrb[0].mxu0
    %v864 = vadd.f32 %v539, %v863
    %865 = vmatprep.mubr.f32.mxu0 0.0
    %866 = vmatmul.mubr.f32.gmra.mrb[0].mxu0 %v625
    %v867 = vpop.f32.mrb[0].mxu0
    %v868 = vadd.f32 %v535, %v867
    %v869 = vpop.f32.mrb[0].mxu0
    %v870 = vadd.f32 %v539, %v869
    %871 = vmatprep.mubr.f32.mxu0 0.0
    %872 = vmatmul.mubr.f32.gmra.mrb[0].mxu0 %v628
    %v873 = vpop.f32.mrb[0].mxu0
    %v874 = vadd.f32 %v535, %v873
    %v875 = vpop.f32.mrb[0].mxu0
    %v876 = vadd.f32 %v539, %v875
    %877 = vmatprep.mubr.f32.mxu0 0.0
    %878 = vmatmul.mubr.f32.gmra.mrb[0].mxu0 %v631
    %v879 = vpop.f32.mrb[0].mxu0
    %v880 = vadd.f32 %v535, %v879
    %v881 = vpop.f32.mrb[0].mxu0
    %v882 = vadd.f32 %v539, %v881
    %883 = vmatprep.mubr.f32.mxu0 0.0
    %884 = vmatmul.mubr.f32.gmra.mrb[0].mxu0 %v634
    %v885 = vpop.f32.mrb[0].mxu0
    %v886 = vadd.f32 %v535, %v885
    %v887 = vpop.f32.mrb[0].mxu0
    %v888 = vadd.f32 %v539, %v887
    %889 = vmatprep.mubr.f32.mxu0 0.0
    %890 = vmatmul.mubr.f32.gmra.mrb[0].mxu0 %v637
    %v891 = vpop.f32.mrb[0].mxu0
    %v892 = vadd.f32 %v535, %v891
    %v893 = vpop.f32.mrb[0].mxu0
    %v894 = vadd.f32 %v539, %v893
    %895 = vdwg.mxu0
    %v896 = vlaneseq
    %v897 = vand.u32 %v896, 127
    %v898 = vadd.s32 %v897, 128
    %v899 = vmin.f32 %v706, %v708
    %900 = vmin.xlane.f32.xlu0 %v899
    %v901 = vpop.xlane.xlu0 %900
    %v902 = vmin.f32 %v712, %v714
    %903 = vmin.xlane.f32.xlu0 %v902
    %v904 = vpop.xlane.xlu0 %903
    %v905 = vmin.f32 %v718, %v720
    %906 = vmin.xlane.f32.xlu0 %v905
    %v907 = vpop.xlane.xlu0 %906
    %v908 = vmin.f32 %v724, %v726
    %909 = vmin.xlane.f32.xlu0 %v908
    %v910 = vpop.xlane.xlu0 %909
    %v911 = vmin.f32 %v730, %v732
    %912 = vmin.xlane.f32.xlu0 %v911
    %v913 = vpop.xlane.xlu0 %912
    %v914 = vmin.f32 %v736, %v738
    %915 = vmin.xlane.f32.xlu0 %v914
    %v916 = vpop.xlane.xlu0 %915
    %v917 = vmin.f32 %v742, %v744
    %918 = vmin.xlane.f32.xlu0 %v917
    %v919 = vpop.xlane.xlu0 %918
    %v920 = vmin.f32 %v748, %v750
    %921 = vmin.xlane.f32.xlu0 %v920
    %v922 = vpop.xlane.xlu0 %921
    %v923 = vmin.f32 %v754, %v756
    %924 = vmin.xlane.f32.xlu0 %v923
    %v925 = vpop.xlane.xlu0 %924
    %v926 = vmin.f32 %v760, %v762
    %927 = vmin.xlane.f32.xlu0 %v926
    %v928 = vpop.xlane.xlu0 %927
    %v929 = vmin.f32 %v766, %v768
    %930 = vmin.xlane.f32.xlu0 %v929
    %v931 = vpop.xlane.xlu0 %930
    %v932 = vmin.f32 %v772, %v774
    %933 = vmin.xlane.f32.xlu0 %v932
    %v934 = vpop.xlane.xlu0 %933
    %v935 = vmin.f32 %v778, %v780
    %936 = vmin.xlane.f32.xlu0 %v935
    %v937 = vpop.xlane.xlu0 %936
    %v938 = vmin.f32 %v784, %v786
    %939 = vmin.xlane.f32.xlu0 %v938
    %v940 = vpop.xlane.xlu0 %939
    %v941 = vmin.f32 %v790, %v792
    %942 = vmin.xlane.f32.xlu0 %v941
    %v943 = vpop.xlane.xlu0 %942
    %v944 = vmin.f32 %v796, %v798
    %945 = vmin.xlane.f32.xlu0 %v944
    %v946 = vpop.xlane.xlu0 %945
    %v947 = vmin.f32 %v802, %v804
    %948 = vmin.xlane.f32.xlu0 %v947
    %v949 = vpop.xlane.xlu0 %948
    %v950 = vmin.f32 %v808, %v810
    %951 = vmin.xlane.f32.xlu0 %v950
    %v952 = vpop.xlane.xlu0 %951
    %v953 = vmin.f32 %v814, %v816
    %954 = vmin.xlane.f32.xlu0 %v953
    %v955 = vpop.xlane.xlu0 %954
    %v956 = vmin.f32 %v820, %v822
    %957 = vmin.xlane.f32.xlu0 %v956
    %v958 = vpop.xlane.xlu0 %957
    %v959 = vmin.f32 %v826, %v828
    %960 = vmin.xlane.f32.xlu0 %v959
    %v961 = vpop.xlane.xlu0 %960
    %v962 = vmin.f32 %v832, %v834
    %963 = vmin.xlane.f32.xlu0 %v962
    %v964 = vpop.xlane.xlu0 %963
    %v965 = vmin.f32 %v838, %v840
    %966 = vmin.xlane.f32.xlu0 %v965
    %v967 = vpop.xlane.xlu0 %966
    %v968 = vmin.f32 %v844, %v846
    %969 = vmin.xlane.f32.xlu0 %v968
    %v970 = vpop.xlane.xlu0 %969
    %v971 = vmin.f32 %v850, %v852
    %972 = vmin.xlane.f32.xlu0 %v971
    %v973 = vpop.xlane.xlu0 %972
    %v974 = vmin.f32 %v856, %v858
    %975 = vmin.xlane.f32.xlu0 %v974
    %v976 = vpop.xlane.xlu0 %975
    %v977 = vmin.f32 %v862, %v864
    %978 = vmin.xlane.f32.xlu0 %v977
    %v979 = vpop.xlane.xlu0 %978
    %v980 = vmin.f32 %v868, %v870
    %981 = vmin.xlane.f32.xlu0 %v980
    %v982 = vpop.xlane.xlu0 %981
    %v983 = vmin.f32 %v874, %v876
    %984 = vmin.xlane.f32.xlu0 %v983
    %v985 = vpop.xlane.xlu0 %984
    %v986 = vmin.f32 %v880, %v882
    %987 = vmin.xlane.f32.xlu0 %v986
    %v988 = vpop.xlane.xlu0 %987
    %v989 = vmin.f32 %v886, %v888
    %990 = vmin.xlane.f32.xlu0 %v989
    %v991 = vpop.xlane.xlu0 %990
    %v992 = vmin.f32 %v892, %v894
    %993 = vmin.xlane.f32.xlu0 %v992
    %v994 = vpop.xlane.xlu0 %993
    %vm995 = vcmp.le.f32.partialorder %v706, %v901
    %vm996 = vcmp.le.f32.partialorder %v708, %v901
    %vm997 = vcmp.le.f32.partialorder %v712, %v904
    %vm998 = vcmp.le.f32.partialorder %v714, %v904
    %vm999 = vcmp.le.f32.partialorder %v718, %v907
    %vm1000 = vcmp.le.f32.partialorder %v720, %v907
    %vm1001 = vcmp.le.f32.partialorder %v724, %v910
    %vm1002 = vcmp.le.f32.partialorder %v726, %v910
    %vm1003 = vcmp.le.f32.partialorder %v730, %v913
    %vm1004 = vcmp.le.f32.partialorder %v732, %v913
    %vm1005 = vcmp.le.f32.partialorder %v736, %v916
    %vm1006 = vcmp.le.f32.partialorder %v738, %v916
    %vm1007 = vcmp.le.f32.partialorder %v742, %v919
    %vm1008 = vcmp.le.f32.partialorder %v744, %v919
    %vm1009 = vcmp.le.f32.partialorder %v748, %v922
    %vm1010 = vcmp.le.f32.partialorder %v750, %v922
    %vm1011 = vcmp.le.f32.partialorder %v754, %v925
    %vm1012 = vcmp.le.f32.partialorder %v756, %v925
    %vm1013 = vcmp.le.f32.partialorder %v760, %v928
    %vm1014 = vcmp.le.f32.partialorder %v762, %v928
    %vm1015 = vcmp.le.f32.partialorder %v766, %v931
    %vm1016 = vcmp.le.f32.partialorder %v768, %v931
    %vm1017 = vcmp.le.f32.partialorder %v772, %v934
    %vm1018 = vcmp.le.f32.partialorder %v774, %v934
    %vm1019 = vcmp.le.f32.partialorder %v778, %v937
    %vm1020 = vcmp.le.f32.partialorder %v780, %v937
    %vm1021 = vcmp.le.f32.partialorder %v784, %v940
    %vm1022 = vcmp.le.f32.partialorder %v786, %v940
    %vm1023 = vcmp.le.f32.partialorder %v790, %v943
    %vm1024 = vcmp.le.f32.partialorder %v792, %v943
    %vm1025 = vcmp.le.f32.partialorder %v796, %v946
    %vm1026 = vcmp.le.f32.partialorder %v798, %v946
    %vm1027 = vcmp.le.f32.partialorder %v802, %v949
    %vm1028 = vcmp.le.f32.partialorder %v804, %v949
    %vm1029 = vcmp.le.f32.partialorder %v808, %v952
    %vm1030 = vcmp.le.f32.partialorder %v810, %v952
    %vm1031 = vcmp.le.f32.partialorder %v814, %v955
    %vm1032 = vcmp.le.f32.partialorder %v816, %v955
    %vm1033 = vcmp.le.f32.partialorder %v820, %v958
    %vm1034 = vcmp.le.f32.partialorder %v822, %v958
    %vm1035 = vcmp.le.f32.partialorder %v826, %v961
    %vm1036 = vcmp.le.f32.partialorder %v828, %v961
    %vm1037 = vcmp.le.f32.partialorder %v832, %v964
    %vm1038 = vcmp.le.f32.partialorder %v834, %v964
    %vm1039 = vcmp.le.f32.partialorder %v838, %v967
    %vm1040 = vcmp.le.f32.partialorder %v840, %v967
    %vm1041 = vcmp.le.f32.partialorder %v844, %v970
    %vm1042 = vcmp.le.f32.partialorder %v846, %v970
    %vm1043 = vcmp.le.f32.partialorder %v850, %v973
    %vm1044 = vcmp.le.f32.partialorder %v852, %v973
    %vm1045 = vcmp.le.f32.partialorder %v856, %v976
    %vm1046 = vcmp.le.f32.partialorder %v858, %v976
    %vm1047 = vcmp.le.f32.partialorder %v862, %v979
    %vm1048 = vcmp.le.f32.partialorder %v864, %v979
    %vm1049 = vcmp.le.f32.partialorder %v868, %v982
    %vm1050 = vcmp.le.f32.partialorder %v870, %v982
    %vm1051 = vcmp.le.f32.partialorder %v874, %v985
    %vm1052 = vcmp.le.f32.partialorder %v876, %v985
    %vm1053 = vcmp.le.f32.partialorder %v880, %v988
    %vm1054 = vcmp.le.f32.partialorder %v882, %v988
    %vm1055 = vcmp.le.f32.partialorder %v886, %v991
    %vm1056 = vcmp.le.f32.partialorder %v888, %v991
    %vm1057 = vcmp.le.f32.partialorder %v892, %v994
    %vm1058 = vcmp.le.f32.partialorder %v894, %v994
    %v1059 = vsel %vm995, %v897, 256
    %v1060 = vsel %vm996, %v898, 256
    %v1061 = vsel %vm997, %v897, 256
    %v1062 = vsel %vm998, %v898, 256
    %v1063 = vsel %vm999, %v897, 256
    %v1064 = vsel %vm1000, %v898, 256
    %v1065 = vsel %vm1001, %v897, 256
    %v1066 = vsel %vm1002, %v898, 256
    %v1067 = vsel %vm1003, %v897, 256
    %v1068 = vsel %vm1004, %v898, 256
    %v1069 = vsel %vm1005, %v897, 256
    %v1070 = vsel %vm1006, %v898, 256
    %v1071 = vsel %vm1007, %v897, 256
    %v1072 = vsel %vm1008, %v898, 256
    %v1073 = vsel %vm1009, %v897, 256
    %v1074 = vsel %vm1010, %v898, 256
    %v1075 = vsel %vm1011, %v897, 256
    %v1076 = vsel %vm1012, %v898, 256
    %v1077 = vsel %vm1013, %v897, 256
    %v1078 = vsel %vm1014, %v898, 256
    %v1079 = vsel %vm1015, %v897, 256
    %v1080 = vsel %vm1016, %v898, 256
    %v1081 = vsel %vm1017, %v897, 256
    %v1082 = vsel %vm1018, %v898, 256
    %v1083 = vsel %vm1019, %v897, 256
    %v1084 = vsel %vm1020, %v898, 256
    %v1085 = vsel %vm1021, %v897, 256
    %v1086 = vsel %vm1022, %v898, 256
    %v1087 = vsel %vm1023, %v897, 256
    %v1088 = vsel %vm1024, %v898, 256
    %v1089 = vsel %vm1025, %v897, 256
    %v1090 = vsel %vm1026, %v898, 256
    %v1091 = vsel %vm1027, %v897, 256
    %v1092 = vsel %vm1028, %v898, 256
    %v1093 = vsel %vm1029, %v897, 256
    %v1094 = vsel %vm1030, %v898, 256
    %v1095 = vsel %vm1031, %v897, 256
    %v1096 = vsel %vm1032, %v898, 256
    %v1097 = vsel %vm1033, %v897, 256
    %v1098 = vsel %vm1034, %v898, 256
    %v1099 = vsel %vm1035, %v897, 256
    %v1100 = vsel %vm1036, %v898, 256
    %v1101 = vsel %vm1037, %v897, 256
    %v1102 = vsel %vm1038, %v898, 256
    %v1103 = vsel %vm1039, %v897, 256
    %v1104 = vsel %vm1040, %v898, 256
    %v1105 = vsel %vm1041, %v897, 256
    %v1106 = vsel %vm1042, %v898, 256
    %v1107 = vsel %vm1043, %v897, 256
    %v1108 = vsel %vm1044, %v898, 256
    %v1109 = vsel %vm1045, %v897, 256
    %v1110 = vsel %vm1046, %v898, 256
    %v1111 = vsel %vm1047, %v897, 256
    %v1112 = vsel %vm1048, %v898, 256
    %v1113 = vsel %vm1049, %v897, 256
    %v1114 = vsel %vm1050, %v898, 256
    %v1115 = vsel %vm1051, %v897, 256
    %v1116 = vsel %vm1052, %v898, 256
    %v1117 = vsel %vm1053, %v897, 256
    %v1118 = vsel %vm1054, %v898, 256
    %v1119 = vsel %vm1055, %v897, 256
    %v1120 = vsel %vm1056, %v898, 256
    %v1121 = vsel %vm1057, %v897, 256
    %v1122 = vsel %vm1058, %v898, 256
    %vm1123 = vcmp.lt.s32.totalorder %v1059, %v1060
    %v1124 = vsel %vm1123, %v1059, %v1060
    %v1125 = vand.u32 %v1124, 65535
    %v1126 = vshra.s32 %v1124, 16
    %v1127 = vcvt.s32.f32 %v1125
    %v1128 = vcvt.s32.f32 %v1126
    %1129 = vmin.xlane.f32.xlu0 %v1128
    %v1130 = vpop.xlane.xlu0 %1129
    %vm1131 = vcmp.eq.f32.partialorder %v1128, %v1130
    %v1132 = vsel %vm1131, %v1127, inf
    %1133 = vmin.xlane.f32.xlu0 %v1132
    %v1134 = vpop.xlane.xlu0 %1133
    %v1135 = vcvt.f32.s32 %v1134
    %v1136 = vcvt.f32.s32 %v1130
    %v1137 = vshll.u32 %v1136, 16
    %v1138 = vadd.s32 %v1137, %v1135
    %vm1139 = vcmp.lt.s32.totalorder %v1061, %v1062
    %v1140 = vsel %vm1139, %v1061, %v1062
    %v1141 = vand.u32 %v1140, 65535
    %v1142 = vshra.s32 %v1140, 16
    %v1143 = vcvt.s32.f32 %v1141
    %v1144 = vcvt.s32.f32 %v1142
    %1145 = vmin.xlane.f32.xlu0 %v1144
    %v1146 = vpop.xlane.xlu0 %1145
    %vm1147 = vcmp.eq.f32.partialorder %v1144, %v1146
    %v1148 = vsel %vm1147, %v1143, inf
    %1149 = vmin.xlane.f32.xlu0 %v1148
    %v1150 = vpop.xlane.xlu0 %1149
    %v1151 = vcvt.f32.s32 %v1150
    %v1152 = vcvt.f32.s32 %v1146
    %v1153 = vshll.u32 %v1152, 16
    %v1154 = vadd.s32 %v1153, %v1151
    %vm1155 = vcmp.lt.s32.totalorder %v1063, %v1064
    %v1156 = vsel %vm1155, %v1063, %v1064
    %v1157 = vand.u32 %v1156, 65535
    %v1158 = vshra.s32 %v1156, 16
    %v1159 = vcvt.s32.f32 %v1157
    %v1160 = vcvt.s32.f32 %v1158
    %1161 = vmin.xlane.f32.xlu0 %v1160
    %v1162 = vpop.xlane.xlu0 %1161
    %vm1163 = vcmp.eq.f32.partialorder %v1160, %v1162
    %v1164 = vsel %vm1163, %v1159, inf
    %1165 = vmin.xlane.f32.xlu0 %v1164
    %v1166 = vpop.xlane.xlu0 %1165
    %v1167 = vcvt.f32.s32 %v1166
    %v1168 = vcvt.f32.s32 %v1162
    %v1169 = vshll.u32 %v1168, 16
    %v1170 = vadd.s32 %v1169, %v1167
    %vm1171 = vcmp.lt.s32.totalorder %v1065, %v1066
    %v1172 = vsel %vm1171, %v1065, %v1066
    %v1173 = vand.u32 %v1172, 65535
    %v1174 = vshra.s32 %v1172, 16
    %v1175 = vcvt.s32.f32 %v1173
    %v1176 = vcvt.s32.f32 %v1174
    %1177 = vmin.xlane.f32.xlu0 %v1176
    %v1178 = vpop.xlane.xlu0 %1177
    %vm1179 = vcmp.eq.f32.partialorder %v1176, %v1178
    %v1180 = vsel %vm1179, %v1175, inf
    %1181 = vmin.xlane.f32.xlu0 %v1180
    %v1182 = vpop.xlane.xlu0 %1181
    %v1183 = vcvt.f32.s32 %v1182
    %v1184 = vcvt.f32.s32 %v1178
    %v1185 = vshll.u32 %v1184, 16
    %v1186 = vadd.s32 %v1185, %v1183
    %vm1187 = vcmp.lt.s32.totalorder %v1067, %v1068
    %v1188 = vsel %vm1187, %v1067, %v1068
    %v1189 = vand.u32 %v1188, 65535
    %v1190 = vshra.s32 %v1188, 16
    %v1191 = vcvt.s32.f32 %v1189
    %v1192 = vcvt.s32.f32 %v1190
    %1193 = vmin.xlane.f32.xlu0 %v1192
    %v1194 = vpop.xlane.xlu0 %1193
    %vm1195 = vcmp.eq.f32.partialorder %v1192, %v1194
    %v1196 = vsel %vm1195, %v1191, inf
    %1197 = vmin.xlane.f32.xlu0 %v1196
    %v1198 = vpop.xlane.xlu0 %1197
    %v1199 = vcvt.f32.s32 %v1198
    %v1200 = vcvt.f32.s32 %v1194
    %v1201 = vshll.u32 %v1200, 16
    %v1202 = vadd.s32 %v1201, %v1199
    %vm1203 = vcmp.lt.s32.totalorder %v1069, %v1070
    %v1204 = vsel %vm1203, %v1069, %v1070
    %v1205 = vand.u32 %v1204, 65535
    %v1206 = vshra.s32 %v1204, 16
    %v1207 = vcvt.s32.f32 %v1205
    %v1208 = vcvt.s32.f32 %v1206
    %1209 = vmin.xlane.f32.xlu0 %v1208
    %v1210 = vpop.xlane.xlu0 %1209
    %vm1211 = vcmp.eq.f32.partialorder %v1208, %v1210
    %v1212 = vsel %vm1211, %v1207, inf
    %1213 = vmin.xlane.f32.xlu0 %v1212
    %v1214 = vpop.xlane.xlu0 %1213
    %v1215 = vcvt.f32.s32 %v1214
    %v1216 = vcvt.f32.s32 %v1210
    %v1217 = vshll.u32 %v1216, 16
    %v1218 = vadd.s32 %v1217, %v1215
    %vm1219 = vcmp.lt.s32.totalorder %v1071, %v1072
    %v1220 = vsel %vm1219, %v1071, %v1072
    %v1221 = vand.u32 %v1220, 65535
    %v1222 = vshra.s32 %v1220, 16
    %v1223 = vcvt.s32.f32 %v1221
    %v1224 = vcvt.s32.f32 %v1222
    %1225 = vmin.xlane.f32.xlu0 %v1224
    %v1226 = vpop.xlane.xlu0 %1225
    %vm1227 = vcmp.eq.f32.partialorder %v1224, %v1226
    %v1228 = vsel %vm1227, %v1223, inf
    %1229 = vmin.xlane.f32.xlu0 %v1228
    %v1230 = vpop.xlane.xlu0 %1229
    %v1231 = vcvt.f32.s32 %v1230
    %v1232 = vcvt.f32.s32 %v1226
    %v1233 = vshll.u32 %v1232, 16
    %v1234 = vadd.s32 %v1233, %v1231
    %vm1235 = vcmp.lt.s32.totalorder %v1073, %v1074
    %v1236 = vsel %vm1235, %v1073, %v1074
    %v1237 = vand.u32 %v1236, 65535
    %v1238 = vshra.s32 %v1236, 16
    %v1239 = vcvt.s32.f32 %v1237
    %v1240 = vcvt.s32.f32 %v1238
    %1241 = vmin.xlane.f32.xlu0 %v1240
    %v1242 = vpop.xlane.xlu0 %1241
    %vm1243 = vcmp.eq.f32.partialorder %v1240, %v1242
    %v1244 = vsel %vm1243, %v1239, inf
    %1245 = vmin.xlane.f32.xlu0 %v1244
    %v1246 = vpop.xlane.xlu0 %1245
    %v1247 = vcvt.f32.s32 %v1246
    %v1248 = vcvt.f32.s32 %v1242
    %v1249 = vshll.u32 %v1248, 16
    %v1250 = vadd.s32 %v1249, %v1247
    %vm1251 = vcmp.lt.s32.totalorder %v1075, %v1076
    %v1252 = vsel %vm1251, %v1075, %v1076
    %v1253 = vand.u32 %v1252, 65535
    %v1254 = vshra.s32 %v1252, 16
    %v1255 = vcvt.s32.f32 %v1253
    %v1256 = vcvt.s32.f32 %v1254
    %1257 = vmin.xlane.f32.xlu0 %v1256
    %v1258 = vpop.xlane.xlu0 %1257
    %vm1259 = vcmp.eq.f32.partialorder %v1256, %v1258
    %v1260 = vsel %vm1259, %v1255, inf
    %1261 = vmin.xlane.f32.xlu0 %v1260
    %v1262 = vpop.xlane.xlu0 %1261
    %v1263 = vcvt.f32.s32 %v1262
    %v1264 = vcvt.f32.s32 %v1258
    %v1265 = vshll.u32 %v1264, 16
    %v1266 = vadd.s32 %v1265, %v1263
    %vm1267 = vcmp.lt.s32.totalorder %v1077, %v1078
    %v1268 = vsel %vm1267, %v1077, %v1078
    %v1269 = vand.u32 %v1268, 65535
    %v1270 = vshra.s32 %v1268, 16
    %v1271 = vcvt.s32.f32 %v1269
    %v1272 = vcvt.s32.f32 %v1270
    %1273 = vmin.xlane.f32.xlu0 %v1272
    %v1274 = vpop.xlane.xlu0 %1273
    %vm1275 = vcmp.eq.f32.partialorder %v1272, %v1274
    %v1276 = vsel %vm1275, %v1271, inf
    %1277 = vmin.xlane.f32.xlu0 %v1276
    %v1278 = vpop.xlane.xlu0 %1277
    %v1279 = vcvt.f32.s32 %v1278
    %v1280 = vcvt.f32.s32 %v1274
    %v1281 = vshll.u32 %v1280, 16
    %v1282 = vadd.s32 %v1281, %v1279
    %vm1283 = vcmp.lt.s32.totalorder %v1079, %v1080
    %v1284 = vsel %vm1283, %v1079, %v1080
    %v1285 = vand.u32 %v1284, 65535
    %v1286 = vshra.s32 %v1284, 16
    %v1287 = vcvt.s32.f32 %v1285
    %v1288 = vcvt.s32.f32 %v1286
    %1289 = vmin.xlane.f32.xlu0 %v1288
    %v1290 = vpop.xlane.xlu0 %1289
    %vm1291 = vcmp.eq.f32.partialorder %v1288, %v1290
    %v1292 = vsel %vm1291, %v1287, inf
    %1293 = vmin.xlane.f32.xlu0 %v1292
    %v1294 = vpop.xlane.xlu0 %1293
    %v1295 = vcvt.f32.s32 %v1294
    %v1296 = vcvt.f32.s32 %v1290
    %v1297 = vshll.u32 %v1296, 16
    %v1298 = vadd.s32 %v1297, %v1295
    %vm1299 = vcmp.lt.s32.totalorder %v1081, %v1082
    %v1300 = vsel %vm1299, %v1081, %v1082
    %v1301 = vand.u32 %v1300, 65535
    %v1302 = vshra.s32 %v1300, 16
    %v1303 = vcvt.s32.f32 %v1301
    %v1304 = vcvt.s32.f32 %v1302
    %1305 = vmin.xlane.f32.xlu0 %v1304
    %v1306 = vpop.xlane.xlu0 %1305
    %vm1307 = vcmp.eq.f32.partialorder %v1304, %v1306
    %v1308 = vsel %vm1307, %v1303, inf
    %1309 = vmin.xlane.f32.xlu0 %v1308
    %v1310 = vpop.xlane.xlu0 %1309
    %v1311 = vcvt.f32.s32 %v1310
    %v1312 = vcvt.f32.s32 %v1306
    %v1313 = vshll.u32 %v1312, 16
    %v1314 = vadd.s32 %v1313, %v1311
    %vm1315 = vcmp.lt.s32.totalorder %v1083, %v1084
    %v1316 = vsel %vm1315, %v1083, %v1084
    %v1317 = vand.u32 %v1316, 65535
    %v1318 = vshra.s32 %v1316, 16
    %v1319 = vcvt.s32.f32 %v1317
    %v1320 = vcvt.s32.f32 %v1318
    %1321 = vmin.xlane.f32.xlu0 %v1320
    %v1322 = vpop.xlane.xlu0 %1321
    %vm1323 = vcmp.eq.f32.partialorder %v1320, %v1322
    %v1324 = vsel %vm1323, %v1319, inf
    %1325 = vmin.xlane.f32.xlu0 %v1324
    %v1326 = vpop.xlane.xlu0 %1325
    %v1327 = vcvt.f32.s32 %v1326
    %v1328 = vcvt.f32.s32 %v1322
    %v1329 = vshll.u32 %v1328, 16
    %v1330 = vadd.s32 %v1329, %v1327
    %vm1331 = vcmp.lt.s32.totalorder %v1085, %v1086
    %v1332 = vsel %vm1331, %v1085, %v1086
    %v1333 = vand.u32 %v1332, 65535
    %v1334 = vshra.s32 %v1332, 16
    %v1335 = vcvt.s32.f32 %v1333
    %v1336 = vcvt.s32.f32 %v1334
    %1337 = vmin.xlane.f32.xlu0 %v1336
    %v1338 = vpop.xlane.xlu0 %1337
    %vm1339 = vcmp.eq.f32.partialorder %v1336, %v1338
    %v1340 = vsel %vm1339, %v1335, inf
    %1341 = vmin.xlane.f32.xlu0 %v1340
    %v1342 = vpop.xlane.xlu0 %1341
    %v1343 = vcvt.f32.s32 %v1342
    %v1344 = vcvt.f32.s32 %v1338
    %v1345 = vshll.u32 %v1344, 16
    %v1346 = vadd.s32 %v1345, %v1343
    %vm1347 = vcmp.lt.s32.totalorder %v1087, %v1088
    %v1348 = vsel %vm1347, %v1087, %v1088
    %v1349 = vand.u32 %v1348, 65535
    %v1350 = vshra.s32 %v1348, 16
    %v1351 = vcvt.s32.f32 %v1349
    %v1352 = vcvt.s32.f32 %v1350
    %1353 = vmin.xlane.f32.xlu0 %v1352
    %v1354 = vpop.xlane.xlu0 %1353
    %vm1355 = vcmp.eq.f32.partialorder %v1352, %v1354
    %v1356 = vsel %vm1355, %v1351, inf
    %1357 = vmin.xlane.f32.xlu0 %v1356
    %v1358 = vpop.xlane.xlu0 %1357
    %v1359 = vcvt.f32.s32 %v1358
    %v1360 = vcvt.f32.s32 %v1354
    %v1361 = vshll.u32 %v1360, 16
    %v1362 = vadd.s32 %v1361, %v1359
    %vm1363 = vcmp.lt.s32.totalorder %v1089, %v1090
    %v1364 = vsel %vm1363, %v1089, %v1090
    %v1365 = vand.u32 %v1364, 65535
    %v1366 = vshra.s32 %v1364, 16
    %v1367 = vcvt.s32.f32 %v1365
    %v1368 = vcvt.s32.f32 %v1366
    %1369 = vmin.xlane.f32.xlu0 %v1368
    %v1370 = vpop.xlane.xlu0 %1369
    %vm1371 = vcmp.eq.f32.partialorder %v1368, %v1370
    %v1372 = vsel %vm1371, %v1367, inf
    %1373 = vmin.xlane.f32.xlu0 %v1372
    %v1374 = vpop.xlane.xlu0 %1373
    %v1375 = vcvt.f32.s32 %v1374
    %v1376 = vcvt.f32.s32 %v1370
    %v1377 = vshll.u32 %v1376, 16
    %v1378 = vadd.s32 %v1377, %v1375
    %vm1379 = vcmp.lt.s32.totalorder %v1091, %v1092
    %v1380 = vsel %vm1379, %v1091, %v1092
    %v1381 = vand.u32 %v1380, 65535
    %v1382 = vshra.s32 %v1380, 16
    %v1383 = vcvt.s32.f32 %v1381
    %v1384 = vcvt.s32.f32 %v1382
    %1385 = vmin.xlane.f32.xlu0 %v1384
    %v1386 = vpop.xlane.xlu0 %1385
    %vm1387 = vcmp.eq.f32.partialorder %v1384, %v1386
    %v1388 = vsel %vm1387, %v1383, inf
    %1389 = vmin.xlane.f32.xlu0 %v1388
    %v1390 = vpop.xlane.xlu0 %1389
    %v1391 = vcvt.f32.s32 %v1390
    %v1392 = vcvt.f32.s32 %v1386
    %v1393 = vshll.u32 %v1392, 16
    %v1394 = vadd.s32 %v1393, %v1391
    %vm1395 = vcmp.lt.s32.totalorder %v1093, %v1094
    %v1396 = vsel %vm1395, %v1093, %v1094
    %v1397 = vand.u32 %v1396, 65535
    %v1398 = vshra.s32 %v1396, 16
    %v1399 = vcvt.s32.f32 %v1397
    %v1400 = vcvt.s32.f32 %v1398
    %1401 = vmin.xlane.f32.xlu0 %v1400
    %v1402 = vpop.xlane.xlu0 %1401
    %vm1403 = vcmp.eq.f32.partialorder %v1400, %v1402
    %v1404 = vsel %vm1403, %v1399, inf
    %1405 = vmin.xlane.f32.xlu0 %v1404
    %v1406 = vpop.xlane.xlu0 %1405
    %v1407 = vcvt.f32.s32 %v1406
    %v1408 = vcvt.f32.s32 %v1402
    %v1409 = vshll.u32 %v1408, 16
    %v1410 = vadd.s32 %v1409, %v1407
    %vm1411 = vcmp.lt.s32.totalorder %v1095, %v1096
    %v1412 = vsel %vm1411, %v1095, %v1096
    %v1413 = vand.u32 %v1412, 65535
    %v1414 = vshra.s32 %v1412, 16
    %v1415 = vcvt.s32.f32 %v1413
    %v1416 = vcvt.s32.f32 %v1414
    %1417 = vmin.xlane.f32.xlu0 %v1416
    %v1418 = vpop.xlane.xlu0 %1417
    %vm1419 = vcmp.eq.f32.partialorder %v1416, %v1418
    %v1420 = vsel %vm1419, %v1415, inf
    %1421 = vmin.xlane.f32.xlu0 %v1420
    %v1422 = vpop.xlane.xlu0 %1421
    %v1423 = vcvt.f32.s32 %v1422
    %v1424 = vcvt.f32.s32 %v1418
    %v1425 = vshll.u32 %v1424, 16
    %v1426 = vadd.s32 %v1425, %v1423
    %vm1427 = vcmp.lt.s32.totalorder %v1097, %v1098
    %v1428 = vsel %vm1427, %v1097, %v1098
    %v1429 = vand.u32 %v1428, 65535
    %v1430 = vshra.s32 %v1428, 16
    %v1431 = vcvt.s32.f32 %v1429
    %v1432 = vcvt.s32.f32 %v1430
    %1433 = vmin.xlane.f32.xlu0 %v1432
    %v1434 = vpop.xlane.xlu0 %1433
    %vm1435 = vcmp.eq.f32.partialorder %v1432, %v1434
    %v1436 = vsel %vm1435, %v1431, inf
    %1437 = vmin.xlane.f32.xlu0 %v1436
    %v1438 = vpop.xlane.xlu0 %1437
    %v1439 = vcvt.f32.s32 %v1438
    %v1440 = vcvt.f32.s32 %v1434
    %v1441 = vshll.u32 %v1440, 16
    %v1442 = vadd.s32 %v1441, %v1439
    %vm1443 = vcmp.lt.s32.totalorder %v1099, %v1100
    %v1444 = vsel %vm1443, %v1099, %v1100
    %v1445 = vand.u32 %v1444, 65535
    %v1446 = vshra.s32 %v1444, 16
    %v1447 = vcvt.s32.f32 %v1445
    %v1448 = vcvt.s32.f32 %v1446
    %1449 = vmin.xlane.f32.xlu0 %v1448
    %v1450 = vpop.xlane.xlu0 %1449
    %vm1451 = vcmp.eq.f32.partialorder %v1448, %v1450
    %v1452 = vsel %vm1451, %v1447, inf
    %1453 = vmin.xlane.f32.xlu0 %v1452
    %v1454 = vpop.xlane.xlu0 %1453
    %v1455 = vcvt.f32.s32 %v1454
    %v1456 = vcvt.f32.s32 %v1450
    %v1457 = vshll.u32 %v1456, 16
    %v1458 = vadd.s32 %v1457, %v1455
    %vm1459 = vcmp.lt.s32.totalorder %v1101, %v1102
    %v1460 = vsel %vm1459, %v1101, %v1102
    %v1461 = vand.u32 %v1460, 65535
    %v1462 = vshra.s32 %v1460, 16
    %v1463 = vcvt.s32.f32 %v1461
    %v1464 = vcvt.s32.f32 %v1462
    %1465 = vmin.xlane.f32.xlu0 %v1464
    %v1466 = vpop.xlane.xlu0 %1465
    %vm1467 = vcmp.eq.f32.partialorder %v1464, %v1466
    %v1468 = vsel %vm1467, %v1463, inf
    %1469 = vmin.xlane.f32.xlu0 %v1468
    %v1470 = vpop.xlane.xlu0 %1469
    %v1471 = vcvt.f32.s32 %v1470
    %v1472 = vcvt.f32.s32 %v1466
    %v1473 = vshll.u32 %v1472, 16
    %v1474 = vadd.s32 %v1473, %v1471
    %vm1475 = vcmp.lt.s32.totalorder %v1103, %v1104
    %v1476 = vsel %vm1475, %v1103, %v1104
    %v1477 = vand.u32 %v1476, 65535
    %v1478 = vshra.s32 %v1476, 16
    %v1479 = vcvt.s32.f32 %v1477
    %v1480 = vcvt.s32.f32 %v1478
    %1481 = vmin.xlane.f32.xlu0 %v1480
    %v1482 = vpop.xlane.xlu0 %1481
    %vm1483 = vcmp.eq.f32.partialorder %v1480, %v1482
    %v1484 = vsel %vm1483, %v1479, inf
    %1485 = vmin.xlane.f32.xlu0 %v1484
    %v1486 = vpop.xlane.xlu0 %1485
    %v1487 = vcvt.f32.s32 %v1486
    %v1488 = vcvt.f32.s32 %v1482
    %v1489 = vshll.u32 %v1488, 16
    %v1490 = vadd.s32 %v1489, %v1487
    %vm1491 = vcmp.lt.s32.totalorder %v1105, %v1106
    %v1492 = vsel %vm1491, %v1105, %v1106
    %v1493 = vand.u32 %v1492, 65535
    %v1494 = vshra.s32 %v1492, 16
    %v1495 = vcvt.s32.f32 %v1493
    %v1496 = vcvt.s32.f32 %v1494
    %1497 = vmin.xlane.f32.xlu0 %v1496
    %v1498 = vpop.xlane.xlu0 %1497
    %vm1499 = vcmp.eq.f32.partialorder %v1496, %v1498
    %v1500 = vsel %vm1499, %v1495, inf
    %1501 = vmin.xlane.f32.xlu0 %v1500
    %v1502 = vpop.xlane.xlu0 %1501
    %v1503 = vcvt.f32.s32 %v1502
    %v1504 = vcvt.f32.s32 %v1498
    %v1505 = vshll.u32 %v1504, 16
    %v1506 = vadd.s32 %v1505, %v1503
    %vm1507 = vcmp.lt.s32.totalorder %v1107, %v1108
    %v1508 = vsel %vm1507, %v1107, %v1108
    %v1509 = vand.u32 %v1508, 65535
    %v1510 = vshra.s32 %v1508, 16
    %v1511 = vcvt.s32.f32 %v1509
    %v1512 = vcvt.s32.f32 %v1510
    %1513 = vmin.xlane.f32.xlu0 %v1512
    %v1514 = vpop.xlane.xlu0 %1513
    %vm1515 = vcmp.eq.f32.partialorder %v1512, %v1514
    %v1516 = vsel %vm1515, %v1511, inf
    %1517 = vmin.xlane.f32.xlu0 %v1516
    %v1518 = vpop.xlane.xlu0 %1517
    %v1519 = vcvt.f32.s32 %v1518
    %v1520 = vcvt.f32.s32 %v1514
    %v1521 = vshll.u32 %v1520, 16
    %v1522 = vadd.s32 %v1521, %v1519
    %vm1523 = vcmp.lt.s32.totalorder %v1109, %v1110
    %v1524 = vsel %vm1523, %v1109, %v1110
    %v1525 = vand.u32 %v1524, 65535
    %v1526 = vshra.s32 %v1524, 16
    %v1527 = vcvt.s32.f32 %v1525
    %v1528 = vcvt.s32.f32 %v1526
    %1529 = vmin.xlane.f32.xlu0 %v1528
    %v1530 = vpop.xlane.xlu0 %1529
    %vm1531 = vcmp.eq.f32.partialorder %v1528, %v1530
    %v1532 = vsel %vm1531, %v1527, inf
    %1533 = vmin.xlane.f32.xlu0 %v1532
    %v1534 = vpop.xlane.xlu0 %1533
    %v1535 = vcvt.f32.s32 %v1534
    %v1536 = vcvt.f32.s32 %v1530
    %v1537 = vshll.u32 %v1536, 16
    %v1538 = vadd.s32 %v1537, %v1535
    %vm1539 = vcmp.lt.s32.totalorder %v1111, %v1112
    %v1540 = vsel %vm1539, %v1111, %v1112
    %v1541 = vand.u32 %v1540, 65535
    %v1542 = vshra.s32 %v1540, 16
    %v1543 = vcvt.s32.f32 %v1541
    %v1544 = vcvt.s32.f32 %v1542
    %1545 = vmin.xlane.f32.xlu0 %v1544
    %v1546 = vpop.xlane.xlu0 %1545
    %vm1547 = vcmp.eq.f32.partialorder %v1544, %v1546
    %v1548 = vsel %vm1547, %v1543, inf
    %1549 = vmin.xlane.f32.xlu0 %v1548
    %v1550 = vpop.xlane.xlu0 %1549
    %v1551 = vcvt.f32.s32 %v1550
    %v1552 = vcvt.f32.s32 %v1546
    %v1553 = vshll.u32 %v1552, 16
    %v1554 = vadd.s32 %v1553, %v1551
    %vm1555 = vcmp.lt.s32.totalorder %v1113, %v1114
    %v1556 = vsel %vm1555, %v1113, %v1114
    %v1557 = vand.u32 %v1556, 65535
    %v1558 = vshra.s32 %v1556, 16
    %v1559 = vcvt.s32.f32 %v1557
    %v1560 = vcvt.s32.f32 %v1558
    %1561 = vmin.xlane.f32.xlu0 %v1560
    %v1562 = vpop.xlane.xlu0 %1561
    %vm1563 = vcmp.eq.f32.partialorder %v1560, %v1562
    %v1564 = vsel %vm1563, %v1559, inf
    %1565 = vmin.xlane.f32.xlu0 %v1564
    %v1566 = vpop.xlane.xlu0 %1565
    %v1567 = vcvt.f32.s32 %v1566
    %v1568 = vcvt.f32.s32 %v1562
    %v1569 = vshll.u32 %v1568, 16
    %v1570 = vadd.s32 %v1569, %v1567
    %vm1571 = vcmp.lt.s32.totalorder %v1115, %v1116
    %v1572 = vsel %vm1571, %v1115, %v1116
    %v1573 = vand.u32 %v1572, 65535
    %v1574 = vshra.s32 %v1572, 16
    %v1575 = vcvt.s32.f32 %v1573
    %v1576 = vcvt.s32.f32 %v1574
    %1577 = vmin.xlane.f32.xlu0 %v1576
    %v1578 = vpop.xlane.xlu0 %1577
    %vm1579 = vcmp.eq.f32.partialorder %v1576, %v1578
    %v1580 = vsel %vm1579, %v1575, inf
    %1581 = vmin.xlane.f32.xlu0 %v1580
    %v1582 = vpop.xlane.xlu0 %1581
    %v1583 = vcvt.f32.s32 %v1582
    %v1584 = vcvt.f32.s32 %v1578
    %v1585 = vshll.u32 %v1584, 16
    %v1586 = vadd.s32 %v1585, %v1583
    %vm1587 = vcmp.lt.s32.totalorder %v1117, %v1118
    %v1588 = vsel %vm1587, %v1117, %v1118
    %v1589 = vand.u32 %v1588, 65535
    %v1590 = vshra.s32 %v1588, 16
    %v1591 = vcvt.s32.f32 %v1589
    %v1592 = vcvt.s32.f32 %v1590
    %1593 = vmin.xlane.f32.xlu0 %v1592
    %v1594 = vpop.xlane.xlu0 %1593
    %vm1595 = vcmp.eq.f32.partialorder %v1592, %v1594
    %v1596 = vsel %vm1595, %v1591, inf
    %1597 = vmin.xlane.f32.xlu0 %v1596
    %v1598 = vpop.xlane.xlu0 %1597
    %v1599 = vcvt.f32.s32 %v1598
    %v1600 = vcvt.f32.s32 %v1594
    %v1601 = vshll.u32 %v1600, 16
    %v1602 = vadd.s32 %v1601, %v1599
    %vm1603 = vcmp.lt.s32.totalorder %v1119, %v1120
    %v1604 = vsel %vm1603, %v1119, %v1120
    %v1605 = vand.u32 %v1604, 65535
    %v1606 = vshra.s32 %v1604, 16
    %v1607 = vcvt.s32.f32 %v1605
    %v1608 = vcvt.s32.f32 %v1606
    %1609 = vmin.xlane.f32.xlu0 %v1608
    %v1610 = vpop.xlane.xlu0 %1609
    %vm1611 = vcmp.eq.f32.partialorder %v1608, %v1610
    %v1612 = vsel %vm1611, %v1607, inf
    %1613 = vmin.xlane.f32.xlu0 %v1612
    %v1614 = vpop.xlane.xlu0 %1613
    %v1615 = vcvt.f32.s32 %v1614
    %v1616 = vcvt.f32.s32 %v1610
    %v1617 = vshll.u32 %v1616, 16
    %v1618 = vadd.s32 %v1617, %v1615
    %vm1619 = vcmp.lt.s32.totalorder %v1121, %v1122
    %v1620 = vsel %vm1619, %v1121, %v1122
    %v1621 = vand.u32 %v1620, 65535
    %v1622 = vshra.s32 %v1620, 16
    %v1623 = vcvt.s32.f32 %v1621
    %v1624 = vcvt.s32.f32 %v1622
    %1625 = vmin.xlane.f32.xlu0 %v1624
    %v1626 = vpop.xlane.xlu0 %1625
    %vm1627 = vcmp.eq.f32.partialorder %v1624, %v1626
    %v1628 = vsel %vm1627, %v1623, inf
    %1629 = vmin.xlane.f32.xlu0 %v1628
    %v1630 = vpop.xlane.xlu0 %1629
    %v1631 = vcvt.f32.s32 %v1630
    %v1632 = vcvt.f32.s32 %v1626
    %v1633 = vshll.u32 %v1632, 16
    %v1634 = vadd.s32 %v1633, %v1631
    %vm1635 = vcmp.eq.s32.totalorder %v897, %v1138
    %vm1636 = vcmp.eq.s32.totalorder %v898, %v1138
    %vm1637 = vcmp.eq.s32.totalorder %v897, %v1154
    %vm1638 = vcmp.eq.s32.totalorder %v898, %v1154
    %vm1639 = vcmp.eq.s32.totalorder %v897, %v1170
    %vm1640 = vcmp.eq.s32.totalorder %v898, %v1170
    %vm1641 = vcmp.eq.s32.totalorder %v897, %v1186
    %vm1642 = vcmp.eq.s32.totalorder %v898, %v1186
    %vm1643 = vcmp.eq.s32.totalorder %v897, %v1202
    %vm1644 = vcmp.eq.s32.totalorder %v898, %v1202
    %vm1645 = vcmp.eq.s32.totalorder %v897, %v1218
    %vm1646 = vcmp.eq.s32.totalorder %v898, %v1218
    %vm1647 = vcmp.eq.s32.totalorder %v897, %v1234
    %vm1648 = vcmp.eq.s32.totalorder %v898, %v1234
    %vm1649 = vcmp.eq.s32.totalorder %v897, %v1250
    %vm1650 = vcmp.eq.s32.totalorder %v898, %v1250
    %vm1651 = vcmp.eq.s32.totalorder %v897, %v1266
    %vm1652 = vcmp.eq.s32.totalorder %v898, %v1266
    %vm1653 = vcmp.eq.s32.totalorder %v897, %v1282
    %vm1654 = vcmp.eq.s32.totalorder %v898, %v1282
    %vm1655 = vcmp.eq.s32.totalorder %v897, %v1298
    %vm1656 = vcmp.eq.s32.totalorder %v898, %v1298
    %vm1657 = vcmp.eq.s32.totalorder %v897, %v1314
    %vm1658 = vcmp.eq.s32.totalorder %v898, %v1314
    %vm1659 = vcmp.eq.s32.totalorder %v897, %v1330
    %vm1660 = vcmp.eq.s32.totalorder %v898, %v1330
    %vm1661 = vcmp.eq.s32.totalorder %v897, %v1346
    %vm1662 = vcmp.eq.s32.totalorder %v898, %v1346
    %vm1663 = vcmp.eq.s32.totalorder %v897, %v1362
    %vm1664 = vcmp.eq.s32.totalorder %v898, %v1362
    %vm1665 = vcmp.eq.s32.totalorder %v897, %v1378
    %vm1666 = vcmp.eq.s32.totalorder %v898, %v1378
    %vm1667 = vcmp.eq.s32.totalorder %v897, %v1394
    %vm1668 = vcmp.eq.s32.totalorder %v898, %v1394
    %vm1669 = vcmp.eq.s32.totalorder %v897, %v1410
    %vm1670 = vcmp.eq.s32.totalorder %v898, %v1410
    %vm1671 = vcmp.eq.s32.totalorder %v897, %v1426
    %vm1672 = vcmp.eq.s32.totalorder %v898, %v1426
    %vm1673 = vcmp.eq.s32.totalorder %v897, %v1442
    %vm1674 = vcmp.eq.s32.totalorder %v898, %v1442
    %vm1675 = vcmp.eq.s32.totalorder %v897, %v1458
    %vm1676 = vcmp.eq.s32.totalorder %v898, %v1458
    %vm1677 = vcmp.eq.s32.totalorder %v897, %v1474
    %vm1678 = vcmp.eq.s32.totalorder %v898, %v1474
    %vm1679 = vcmp.eq.s32.totalorder %v897, %v1490
    %vm1680 = vcmp.eq.s32.totalorder %v898, %v1490
    %vm1681 = vcmp.eq.s32.totalorder %v897, %v1506
    %vm1682 = vcmp.eq.s32.totalorder %v898, %v1506
    %vm1683 = vcmp.eq.s32.totalorder %v897, %v1522
    %vm1684 = vcmp.eq.s32.totalorder %v898, %v1522
    %vm1685 = vcmp.eq.s32.totalorder %v897, %v1538
    %vm1686 = vcmp.eq.s32.totalorder %v898, %v1538
    %vm1687 = vcmp.eq.s32.totalorder %v897, %v1554
    %vm1688 = vcmp.eq.s32.totalorder %v898, %v1554
    %vm1689 = vcmp.eq.s32.totalorder %v897, %v1570
    %vm1690 = vcmp.eq.s32.totalorder %v898, %v1570
    %vm1691 = vcmp.eq.s32.totalorder %v897, %v1586
    %vm1692 = vcmp.eq.s32.totalorder %v898, %v1586
    %vm1693 = vcmp.eq.s32.totalorder %v897, %v1602
    %vm1694 = vcmp.eq.s32.totalorder %v898, %v1602
    %vm1695 = vcmp.eq.s32.totalorder %v897, %v1618
    %vm1696 = vcmp.eq.s32.totalorder %v898, %v1618
    %vm1697 = vcmp.eq.s32.totalorder %v897, %v1634
    %vm1698 = vcmp.eq.s32.totalorder %v898, %v1634
    %v1699 = vsel %vm1635, 1, 0
    %v1700 = vsel %vm1636, 1, 0
    %v1701 = vsel %vm1637, 1, 0
    %v1702 = vsel %vm1638, 1, 0
    %v1703 = vsel %vm1639, 1, 0
    %v1704 = vsel %vm1640, 1, 0
    %v1705 = vsel %vm1641, 1, 0
    %v1706 = vsel %vm1642, 1, 0
    %v1707 = vsel %vm1643, 1, 0
    %v1708 = vsel %vm1644, 1, 0
    %v1709 = vsel %vm1645, 1, 0
    %v1710 = vsel %vm1646, 1, 0
    %v1711 = vsel %vm1647, 1, 0
    %v1712 = vsel %vm1648, 1, 0
    %v1713 = vsel %vm1649, 1, 0
    %v1714 = vsel %vm1650, 1, 0
    %v1715 = vsel %vm1651, 1, 0
    %v1716 = vsel %vm1652, 1, 0
    %v1717 = vsel %vm1653, 1, 0
    %v1718 = vsel %vm1654, 1, 0
    %v1719 = vsel %vm1655, 1, 0
    %v1720 = vsel %vm1656, 1, 0
    %v1721 = vsel %vm1657, 1, 0
    %v1722 = vsel %vm1658, 1, 0
    %v1723 = vsel %vm1659, 1, 0
    %v1724 = vsel %vm1660, 1, 0
    %v1725 = vsel %vm1661, 1, 0
    %v1726 = vsel %vm1662, 1, 0
    %v1727 = vsel %vm1663, 1, 0
    %v1728 = vsel %vm1664, 1, 0
    %v1729 = vsel %vm1665, 1, 0
    %v1730 = vsel %vm1666, 1, 0
    %v1731 = vsel %vm1667, 1, 0
    %v1732 = vsel %vm1668, 1, 0
    %v1733 = vsel %vm1669, 1, 0
    %v1734 = vsel %vm1670, 1, 0
    %v1735 = vsel %vm1671, 1, 0
    %v1736 = vsel %vm1672, 1, 0
    %v1737 = vsel %vm1673, 1, 0
    %v1738 = vsel %vm1674, 1, 0
    %v1739 = vsel %vm1675, 1, 0
    %v1740 = vsel %vm1676, 1, 0
    %v1741 = vsel %vm1677, 1, 0
    %v1742 = vsel %vm1678, 1, 0
    %v1743 = vsel %vm1679, 1, 0
    %v1744 = vsel %vm1680, 1, 0
    %v1745 = vsel %vm1681, 1, 0
    %v1746 = vsel %vm1682, 1, 0
    %v1747 = vsel %vm1683, 1, 0
    %v1748 = vsel %vm1684, 1, 0
    %v1749 = vsel %vm1685, 1, 0
    %v1750 = vsel %vm1686, 1, 0
    %v1751 = vsel %vm1687, 1, 0
    %v1752 = vsel %vm1688, 1, 0
    %v1753 = vsel %vm1689, 1, 0
    %v1754 = vsel %vm1690, 1, 0
    %v1755 = vsel %vm1691, 1, 0
    %v1756 = vsel %vm1692, 1, 0
    %v1757 = vsel %vm1693, 1, 0
    %v1758 = vsel %vm1694, 1, 0
    %v1759 = vsel %vm1695, 1, 0
    %v1760 = vsel %vm1696, 1, 0
    %v1761 = vsel %vm1697, 1, 0
    %v1762 = vsel %vm1698, 1, 0
    %v1763 = vcvt.s32.f32 %v1699
    %v1764 = vcvt.s32.f32 %v1700
    %v1765 = vcvt.s32.f32 %v1701
    %v1766 = vcvt.s32.f32 %v1702
    %v1767 = vcvt.s32.f32 %v1703
    %v1768 = vcvt.s32.f32 %v1704
    %v1769 = vcvt.s32.f32 %v1705
    %v1770 = vcvt.s32.f32 %v1706
    %v1771 = vcvt.s32.f32 %v1707
    %v1772 = vcvt.s32.f32 %v1708
    %v1773 = vcvt.s32.f32 %v1709
    %v1774 = vcvt.s32.f32 %v1710
    %v1775 = vcvt.s32.f32 %v1711
    %v1776 = vcvt.s32.f32 %v1712
    %v1777 = vcvt.s32.f32 %v1713
    %v1778 = vcvt.s32.f32 %v1714
    %v1779 = vcvt.s32.f32 %v1715
    %v1780 = vcvt.s32.f32 %v1716
    %v1781 = vcvt.s32.f32 %v1717
    %v1782 = vcvt.s32.f32 %v1718
    %v1783 = vcvt.s32.f32 %v1719
    %v1784 = vcvt.s32.f32 %v1720
    %v1785 = vcvt.s32.f32 %v1721
    %v1786 = vcvt.s32.f32 %v1722
    %v1787 = vcvt.s32.f32 %v1723
    %v1788 = vcvt.s32.f32 %v1724
    %v1789 = vcvt.s32.f32 %v1725
    %v1790 = vcvt.s32.f32 %v1726
    %v1791 = vcvt.s32.f32 %v1727
    %v1792 = vcvt.s32.f32 %v1728
    %v1793 = vcvt.s32.f32 %v1729
    %v1794 = vcvt.s32.f32 %v1730
    %v1795 = vcvt.s32.f32 %v1731
    %v1796 = vcvt.s32.f32 %v1732
    %v1797 = vcvt.s32.f32 %v1733
    %v1798 = vcvt.s32.f32 %v1734
    %v1799 = vcvt.s32.f32 %v1735
    %v1800 = vcvt.s32.f32 %v1736
    %v1801 = vcvt.s32.f32 %v1737
    %v1802 = vcvt.s32.f32 %v1738
    %v1803 = vcvt.s32.f32 %v1739
    %v1804 = vcvt.s32.f32 %v1740
    %v1805 = vcvt.s32.f32 %v1741
    %v1806 = vcvt.s32.f32 %v1742
    %v1807 = vcvt.s32.f32 %v1743
    %v1808 = vcvt.s32.f32 %v1744
    %v1809 = vcvt.s32.f32 %v1745
    %v1810 = vcvt.s32.f32 %v1746
    %v1811 = vcvt.s32.f32 %v1747
    %v1812 = vcvt.s32.f32 %v1748
    %v1813 = vcvt.s32.f32 %v1749
    %v1814 = vcvt.s32.f32 %v1750
    %v1815 = vcvt.s32.f32 %v1751
    %v1816 = vcvt.s32.f32 %v1752
    %v1817 = vcvt.s32.f32 %v1753
    %v1818 = vcvt.s32.f32 %v1754
    %v1819 = vcvt.s32.f32 %v1755
    %v1820 = vcvt.s32.f32 %v1756
    %v1821 = vcvt.s32.f32 %v1757
    %v1822 = vcvt.s32.f32 %v1758
    %v1823 = vcvt.s32.f32 %v1759
    %v1824 = vcvt.s32.f32 %v1760
    %v1825 = vcvt.s32.f32 %v1761
    %v1826 = vcvt.s32.f32 %v1762
    %1827 = vmatprep.subr.mxu0 0.0
    %1828 = vmatpush1.msra.mxu0 %v499
    %1829 = vmatprep.subr.mxu0 0.0
    %1830 = vmatpush1.msra.mxu0 %v500
    %1831 = vmatprep.subr.mxu0 0.0
    %1832 = vmatpush1.msra.mxu0 %v501
    %1833 = vmatprep.subr.mxu0 0.0
    %1834 = vmatpush1.msra.mxu0 %v502
    %1835 = vmatprep.subr.mxu0 0.0
    %1836 = vmatpush1.msra.mxu0 %v503
    %1837 = vmatprep.subr.mxu0 0.0
    %1838 = vmatpush1.msra.mxu0 %v504
    %1839 = vmatprep.subr.mxu0 0.0
    %1840 = vmatpush1.msra.mxu0 %v505
    %1841 = vmatprep.subr.mxu0 0.0
    %1842 = vmatpush1.msra.mxu0 %v506
    %1843 = vmatprep.subr.mxu0 0.0
    %1844 = vmatpush1.msra.mxu0 %v507
    %1845 = vmatprep.subr.mxu0 0.0
    %1846 = vmatpush1.msra.mxu0 %v508
    %1847 = vmatprep.subr.mxu0 0.0
    %1848 = vmatpush1.msra.mxu0 %v509
    %1849 = vmatprep.subr.mxu0 0.0
    %1850 = vmatpush1.msra.mxu0 %v510
    %1851 = vmatprep.subr.mxu0 0.0
    %1852 = vmatpush1.msra.mxu0 %v511
    %1853 = vmatprep.subr.mxu0 0.0
    %1854 = vmatpush1.msra.mxu0 %v512
    %1855 = vmatprep.subr.mxu0 0.0
    %1856 = vmatpush1.msra.mxu0 %v513
    %1857 = vmatprep.subr.mxu0 0.0
    %1858 = vmatpush1.msra.mxu0 %v514
    %1859 = vmatprep.subr.mxu0 0.0
    %1860 = vmatpush1.msra.mxu0 %v515
    %1861 = vmatprep.subr.mxu0 0.0
    %1862 = vmatpush1.msra.mxu0 %v516
    %1863 = vmatprep.subr.mxu0 0.0
    %1864 = vmatpush1.msra.mxu0 %v517
    %1865 = vmatprep.subr.mxu0 0.0
    %1866 = vmatpush1.msra.mxu0 %v518
    %1867 = vmatprep.subr.mxu0 0.0
    %1868 = vmatpush1.msra.mxu0 %v519
    %1869 = vmatprep.subr.mxu0 0.0
    %1870 = vmatpush1.msra.mxu0 %v520
    %1871 = vmatprep.subr.mxu0 0.0
    %1872 = vmatpush1.msra.mxu0 %v521
    %1873 = vmatprep.subr.mxu0 0.0
    %1874 = vmatpush1.msra.mxu0 %v522
    %1875 = vmatprep.subr.mxu0 0.0
    %1876 = vmatpush1.msra.mxu0 %v523
    %1877 = vmatprep.subr.mxu0 0.0
    %1878 = vmatpush1.msra.mxu0 %v524
    %1879 = vmatprep.subr.mxu0 0.0
    %1880 = vmatpush1.msra.mxu0 %v525
    %1881 = vmatprep.subr.mxu0 0.0
    %1882 = vmatpush1.msra.mxu0 %v526
    %1883 = vmatprep.subr.mxu0 0.0
    %1884 = vmatpush1.msra.mxu0 %v527
    %1885 = vmatprep.subr.mxu0 0.0
    %1886 = vmatpush1.msra.mxu0 %v528
    %1887 = vmatprep.subr.mxu0 0.0
    %1888 = vmatpush1.msra.mxu0 %v529
    %1889 = vmatprep.subr.mxu0 0.0
    %1890 = vmatpush1.msra.mxu0 %v530
    %1891 = vmatprep.mubr.f32.mxu0 %v1764
    %1892 = vmatmul.mubr.f32.gmra.mrb[0].mxu0 %v1763
    %v1893 = vpop.f32.mrb[0].mxu0
    %v1894 = vadd.f32 0.0, %v1893
    %v1895 = vpop.f32.mrb[0].mxu0
    %1896 = vmatprep.mubr.f32.mxu0 %v1766
    %1897 = vmatmul.mubr.f32.gmra.mrb[0].mxu0 %v1765
    %v1898 = vpop.f32.mrb[0].mxu0
    %v1899 = vadd.f32 0.0, %v1898
    %v1900 = vpop.f32.mrb[0].mxu0
    %1901 = vmatprep.mubr.f32.mxu0 %v1768
    %1902 = vmatmul.mubr.f32.gmra.mrb[0].mxu0 %v1767
    %v1903 = vpop.f32.mrb[0].mxu0
    %v1904 = vadd.f32 0.0, %v1903
    %v1905 = vpop.f32.mrb[0].mxu0
    %1906 = vmatprep.mubr.f32.mxu0 %v1770
    %1907 = vmatmul.mubr.f32.gmra.mrb[0].mxu0 %v1769
    %v1908 = vpop.f32.mrb[0].mxu0
    %v1909 = vadd.f32 0.0, %v1908
    %v1910 = vpop.f32.mrb[0].mxu0
    %1911 = vmatprep.mubr.f32.mxu0 %v1772
    %1912 = vmatmul.mubr.f32.gmra.mrb[0].mxu0 %v1771
    %v1913 = vpop.f32.mrb[0].mxu0
    %v1914 = vadd.f32 0.0, %v1913
    %v1915 = vpop.f32.mrb[0].mxu0
    %1916 = vmatprep.mubr.f32.mxu0 %v1774
    %1917 = vmatmul.mubr.f32.gmra.mrb[0].mxu0 %v1773
    %v1918 = vpop.f32.mrb[0].mxu0
    %v1919 = vadd.f32 0.0, %v1918
    %v1920 = vpop.f32.mrb[0].mxu0
    %1921 = vmatprep.mubr.f32.mxu0 %v1776
    %1922 = vmatmul.mubr.f32.gmra.mrb[0].mxu0 %v1775
    %v1923 = vpop.f32.mrb[0].mxu0
    %v1924 = vadd.f32 0.0, %v1923
    %v1925 = vpop.f32.mrb[0].mxu0
    %1926 = vmatprep.mubr.f32.mxu0 %v1778
    %1927 = vmatmul.mubr.f32.gmra.mrb[0].mxu0 %v1777
    %v1928 = vpop.f32.mrb[0].mxu0
    %v1929 = vadd.f32 0.0, %v1928
    %v1930 = vpop.f32.mrb[0].mxu0
    %1931 = vmatprep.mubr.f32.mxu0 %v1780
    %1932 = vmatmul.mubr.f32.gmra.mrb[0].mxu0 %v1779
    %v1933 = vpop.f32.mrb[0].mxu0
    %v1934 = vadd.f32 0.0, %v1933
    %v1935 = vpop.f32.mrb[0].mxu0
    %1936 = vmatprep.mubr.f32.mxu0 %v1782
    %1937 = vmatmul.mubr.f32.gmra.mrb[0].mxu0 %v1781
    %v1938 = vpop.f32.mrb[0].mxu0
    %v1939 = vadd.f32 0.0, %v1938
    %v1940 = vpop.f32.mrb[0].mxu0
    %1941 = vmatprep.mubr.f32.mxu0 %v1784
    %1942 = vmatmul.mubr.f32.gmra.mrb[0].mxu0 %v1783
    %v1943 = vpop.f32.mrb[0].mxu0
    %v1944 = vadd.f32 0.0, %v1943
    %v1945 = vpop.f32.mrb[0].mxu0
    %1946 = vmatprep.mubr.f32.mxu0 %v1786
    %1947 = vmatmul.mubr.f32.gmra.mrb[0].mxu0 %v1785
    %v1948 = vpop.f32.mrb[0].mxu0
    %v1949 = vadd.f32 0.0, %v1948
    %v1950 = vpop.f32.mrb[0].mxu0
    %1951 = vmatprep.mubr.f32.mxu0 %v1788
    %1952 = vmatmul.mubr.f32.gmra.mrb[0].mxu0 %v1787
    %v1953 = vpop.f32.mrb[0].mxu0
    %v1954 = vadd.f32 0.0, %v1953
    %v1955 = vpop.f32.mrb[0].mxu0
    %1956 = vmatprep.mubr.f32.mxu0 %v1790
    %1957 = vmatmul.mubr.f32.gmra.mrb[0].mxu0 %v1789
    %v1958 = vpop.f32.mrb[0].mxu0
    %v1959 = vadd.f32 0.0, %v1958
    %v1960 = vpop.f32.mrb[0].mxu0
    %1961 = vmatprep.mubr.f32.mxu0 %v1792
    %1962 = vmatmul.mubr.f32.gmra.mrb[0].mxu0 %v1791
    %v1963 = vpop.f32.mrb[0].mxu0
    %v1964 = vadd.f32 0.0, %v1963
    %v1965 = vpop.f32.mrb[0].mxu0
    %1966 = vmatprep.mubr.f32.mxu0 %v1794
    %1967 = vmatmul.mubr.f32.gmra.mrb[0].mxu0 %v1793
    %v1968 = vpop.f32.mrb[0].mxu0
    %v1969 = vadd.f32 0.0, %v1968
    %v1970 = vpop.f32.mrb[0].mxu0
    %1971 = vmatprep.mubr.f32.mxu0 %v1796
    %1972 = vmatmul.mubr.f32.gmra.mrb[0].mxu0 %v1795
    %v1973 = vpop.f32.mrb[0].mxu0
    %v1974 = vadd.f32 0.0, %v1973
    %v1975 = vpop.f32.mrb[0].mxu0
    %1976 = vmatprep.mubr.f32.mxu0 %v1798
    %1977 = vmatmul.mubr.f32.gmra.mrb[0].mxu0 %v1797
    %v1978 = vpop.f32.mrb[0].mxu0
    %v1979 = vadd.f32 0.0, %v1978
    %v1980 = vpop.f32.mrb[0].mxu0
    %1981 = vmatprep.mubr.f32.mxu0 %v1800
    %1982 = vmatmul.mubr.f32.gmra.mrb[0].mxu0 %v1799
    %v1983 = vpop.f32.mrb[0].mxu0
    %v1984 = vadd.f32 0.0, %v1983
    %v1985 = vpop.f32.mrb[0].mxu0
    %1986 = vmatprep.mubr.f32.mxu0 %v1802
    %1987 = vmatmul.mubr.f32.gmra.mrb[0].mxu0 %v1801
    %v1988 = vpop.f32.mrb[0].mxu0
    %v1989 = vadd.f32 0.0, %v1988
    %v1990 = vpop.f32.mrb[0].mxu0
    %1991 = vmatprep.mubr.f32.mxu0 %v1804
    %1992 = vmatmul.mubr.f32.gmra.mrb[0].mxu0 %v1803
    %v1993 = vpop.f32.mrb[0].mxu0
    %v1994 = vadd.f32 0.0, %v1993
    %v1995 = vpop.f32.mrb[0].mxu0
    %1996 = vmatprep.mubr.f32.mxu0 %v1806
    %1997 = vmatmul.mubr.f32.gmra.mrb[0].mxu0 %v1805
    %v1998 = vpop.f32.mrb[0].mxu0
    %v1999 = vadd.f32 0.0, %v1998
    %v2000 = vpop.f32.mrb[0].mxu0
    %2001 = vmatprep.mubr.f32.mxu0 %v1808
    %2002 = vmatmul.mubr.f32.gmra.mrb[0].mxu0 %v1807
    %v2003 = vpop.f32.mrb[0].mxu0
    %v2004 = vadd.f32 0.0, %v2003
    %v2005 = vpop.f32.mrb[0].mxu0
    %2006 = vmatprep.mubr.f32.mxu0 %v1810
    %2007 = vmatmul.mubr.f32.gmra.mrb[0].mxu0 %v1809
    %v2008 = vpop.f32.mrb[0].mxu0
    %v2009 = vadd.f32 0.0, %v2008
    %v2010 = vpop.f32.mrb[0].mxu0
    %2011 = vmatprep.mubr.f32.mxu0 %v1812
    %2012 = vmatmul.mubr.f32.gmra.mrb[0].mxu0 %v1811
    %v2013 = vpop.f32.mrb[0].mxu0
    %v2014 = vadd.f32 0.0, %v2013
    %v2015 = vpop.f32.mrb[0].mxu0
    %2016 = vmatprep.mubr.f32.mxu0 %v1814
    %2017 = vmatmul.mubr.f32.gmra.mrb[0].mxu0 %v1813
    %v2018 = vpop.f32.mrb[0].mxu0
    %v2019 = vadd.f32 0.0, %v2018
    %v2020 = vpop.f32.mrb[0].mxu0
    %2021 = vmatprep.mubr.f32.mxu0 %v1816
    %2022 = vmatmul.mubr.f32.gmra.mrb[0].mxu0 %v1815
    %v2023 = vpop.f32.mrb[0].mxu0
    %v2024 = vadd.f32 0.0, %v2023
    %v2025 = vpop.f32.mrb[0].mxu0
    %2026 = vmatprep.mubr.f32.mxu0 %v1818
    %2027 = vmatmul.mubr.f32.gmra.mrb[0].mxu0 %v1817
    %v2028 = vpop.f32.mrb[0].mxu0
    %v2029 = vadd.f32 0.0, %v2028
    %v2030 = vpop.f32.mrb[0].mxu0
    %2031 = vmatprep.mubr.f32.mxu0 %v1820
    %2032 = vmatmul.mubr.f32.gmra.mrb[0].mxu0 %v1819
    %v2033 = vpop.f32.mrb[0].mxu0
    %v2034 = vadd.f32 0.0, %v2033
    %v2035 = vpop.f32.mrb[0].mxu0
    %2036 = vmatprep.mubr.f32.mxu0 %v1822
    %2037 = vmatmul.mubr.f32.gmra.mrb[0].mxu0 %v1821
    %v2038 = vpop.f32.mrb[0].mxu0
    %v2039 = vadd.f32 0.0, %v2038
    %v2040 = vpop.f32.mrb[0].mxu0
    %2041 = vmatprep.mubr.f32.mxu0 %v1824
    %2042 = vmatmul.mubr.f32.gmra.mrb[0].mxu0 %v1823
    %v2043 = vpop.f32.mrb[0].mxu0
    %v2044 = vadd.f32 0.0, %v2043
    %v2045 = vpop.f32.mrb[0].mxu0
    %2046 = vmatprep.mubr.f32.mxu0 %v1826
    %2047 = vmatmul.mubr.f32.gmra.mrb[0].mxu0 %v1825
    %v2048 = vpop.f32.mrb[0].mxu0
    %v2049 = vadd.f32 0.0, %v2048
    %v2050 = vpop.f32.mrb[0].mxu0
    %2051 = vdwg.mxu0
    %2084 = vrot.lane.b32.xlu0 %v1894, 32
    %v2085 = vpop.permute.xlu0 %2084
    %2086 = vrot.lane.b32.xlu0 %v1899, 32
    %v2087 = vpop.permute.xlu0 %2086
    %2088 = vrot.lane.b32.xlu0 %v1904, 32
    %v2089 = vpop.permute.xlu0 %2088
    %2090 = vrot.lane.b32.xlu0 %v1909, 32
    %v2091 = vpop.permute.xlu0 %2090
    %2092 = vrot.lane.b32.xlu0 %v1914, 32
    %v2093 = vpop.permute.xlu0 %2092
    %2094 = vrot.lane.b32.xlu0 %v1919, 32
    %v2095 = vpop.permute.xlu0 %2094
    %2096 = vrot.lane.b32.xlu0 %v1924, 32
    %v2097 = vpop.permute.xlu0 %2096
    %2098 = vrot.lane.b32.xlu0 %v1929, 32
    %v2099 = vpop.permute.xlu0 %2098
    %2100 = vrot.lane.b32.xlu0 %v1934, 32
    %v2101 = vpop.permute.xlu0 %2100
    %2102 = vrot.lane.b32.xlu0 %v1939, 32
    %v2103 = vpop.permute.xlu0 %2102
    %2104 = vrot.lane.b32.xlu0 %v1944, 32
    %v2105 = vpop.permute.xlu0 %2104
    %2106 = vrot.lane.b32.xlu0 %v1949, 32
    %v2107 = vpop.permute.xlu0 %2106
    %2108 = vrot.lane.b32.xlu0 %v1954, 32
    %v2109 = vpop.permute.xlu0 %2108
    %2110 = vrot.lane.b32.xlu0 %v1959, 32
    %v2111 = vpop.permute.xlu0 %2110
    %2112 = vrot.lane.b32.xlu0 %v1964, 32
    %v2113 = vpop.permute.xlu0 %2112
    %2114 = vrot.lane.b32.xlu0 %v1969, 32
    %v2115 = vpop.permute.xlu0 %2114
    %2116 = vrot.lane.b32.xlu0 %v1974, 32
    %v2117 = vpop.permute.xlu0 %2116
    %2118 = vrot.lane.b32.xlu0 %v1979, 32
    %v2119 = vpop.permute.xlu0 %2118
    %2120 = vrot.lane.b32.xlu0 %v1984, 32
    %v2121 = vpop.permute.xlu0 %2120
    %2122 = vrot.lane.b32.xlu0 %v1989, 32
    %v2123 = vpop.permute.xlu0 %2122
    %2124 = vrot.lane.b32.xlu0 %v1994, 32
    %v2125 = vpop.permute.xlu0 %2124
    %2126 = vrot.lane.b32.xlu0 %v1999, 32
    %v2127 = vpop.permute.xlu0 %2126
    %2128 = vrot.lane.b32.xlu0 %v2004, 32
    %v2129 = vpop.permute.xlu0 %2128
    %2130 = vrot.lane.b32.xlu0 %v2009, 32
    %v2131 = vpop.permute.xlu0 %2130
    %2132 = vrot.lane.b32.xlu0 %v2014, 32
    %v2133 = vpop.permute.xlu0 %2132
    %2134 = vrot.lane.b32.xlu0 %v2019, 32
    %v2135 = vpop.permute.xlu0 %2134
    %2136 = vrot.lane.b32.xlu0 %v2024, 32
    %v2137 = vpop.permute.xlu0 %2136
    %2138 = vrot.lane.b32.xlu0 %v2029, 32
    %v2139 = vpop.permute.xlu0 %2138
    %2140 = vrot.lane.b32.xlu0 %v2034, 32
    %v2141 = vpop.permute.xlu0 %2140
    %2142 = vrot.lane.b32.xlu0 %v2039, 32
    %v2143 = vpop.permute.xlu0 %2142
    %2144 = vrot.lane.b32.xlu0 %v2044, 32
    %v2145 = vpop.permute.xlu0 %2144
    %2146 = vrot.lane.b32.xlu0 %v2049, 32
    %v2147 = vpop.permute.xlu0 %2146
    %v2180 = vsel %vm110, %v432, %v2085
    %v2181 = vsel %vm110, %v433, %v2087
    %v2182 = vsel %vm110, %v434, %v2089
    %v2183 = vsel %vm110, %v435, %v2091
    %v2184 = vsel %vm110, %v436, %v2093
    %v2185 = vsel %vm110, %v437, %v2095
    %v2186 = vsel %vm110, %v438, %v2097
    %v2187 = vsel %vm110, %v439, %v2099
    %v2188 = vsel %vm110, %v440, %v2101
    %v2189 = vsel %vm110, %v441, %v2103
    %v2190 = vsel %vm110, %v442, %v2105
    %v2191 = vsel %vm110, %v443, %v2107
    %v2192 = vsel %vm110, %v444, %v2109
    %v2193 = vsel %vm110, %v445, %v2111
    %v2194 = vsel %vm110, %v446, %v2113
    %v2195 = vsel %vm110, %v447, %v2115
    %v2196 = vsel %vm110, %v448, %v2117
    %v2197 = vsel %vm110, %v449, %v2119
    %v2198 = vsel %vm110, %v450, %v2121
    %v2199 = vsel %vm110, %v451, %v2123
    %v2200 = vsel %vm110, %v452, %v2125
    %v2201 = vsel %vm110, %v453, %v2127
    %v2202 = vsel %vm110, %v454, %v2129
    %v2203 = vsel %vm110, %v455, %v2131
    %v2204 = vsel %vm110, %v456, %v2133
    %v2205 = vsel %vm110, %v457, %v2135
    %v2206 = vsel %vm110, %v458, %v2137
    %v2207 = vsel %vm110, %v459, %v2139
    %v2208 = vsel %vm110, %v460, %v2141
    %v2209 = vsel %vm110, %v461, %v2143
    %v2210 = vsel %vm110, %v462, %v2145
    %v2211 = vsel %vm110, %v463, %v2147
    %v2212 = vld [vmem:[%s1] sm:$0xff]
    %v2213 = vld [vmem:[%s1 + $0x8] sm:$0xff]
    %v2214 = vld [vmem:[%s1 + $0x10] sm:$0xff]
    %v2215 = vld [vmem:[%s1 + $0x18] sm:$0xff]
    %v2216 = vld [vmem:[%s1 + $0x20] sm:$0xff]
    %v2217 = vld [vmem:[%s1 + $0x28] sm:$0xff]
    %v2218 = vld [vmem:[%s1 + $0x30] sm:$0xff]
    %v2219 = vld [vmem:[%s1 + $0x38] sm:$0xff]
    %v2220 = vld [vmem:[%s2] sm:$0x1]
    %v2222 = vlaneseq
    %v2223 = vshrl.u32 %v2222, 7
    %v2224 = vsub.s32 0, %v2223
    %v2225 = vrot.slane %v2220, %v2224
    %vm2227 = vcmask 523264
    %v2229 = vsel %vm2227, %v2180, 0
    %v2232 = vsel %vm2227, %v2181, 0
    %v2235 = vsel %vm2227, %v2182, 0
    %v2238 = vsel %vm2227, %v2183, 0
    %v2241 = vsel %vm2227, %v2184, 0
    %v2244 = vsel %vm2227, %v2185, 0
    %v2247 = vsel %vm2227, %v2186, 0
    %v2250 = vsel %vm2227, %v2187, 0
    %v2253 = vsel %vm2227, %v2188, 0
    %v2256 = vsel %vm2227, %v2189, 0
    %v2259 = vsel %vm2227, %v2190, 0
    %v2262 = vsel %vm2227, %v2191, 0
    %v2265 = vsel %vm2227, %v2192, 0
    %v2268 = vsel %vm2227, %v2193, 0
    %v2271 = vsel %vm2227, %v2194, 0
    %v2274 = vsel %vm2227, %v2195, 0
    %v2277 = vsel %vm2227, %v2196, 0
    %v2280 = vsel %vm2227, %v2197, 0
    %v2283 = vsel %vm2227, %v2198, 0
    %v2286 = vsel %vm2227, %v2199, 0
    %v2289 = vsel %vm2227, %v2200, 0
    %v2292 = vsel %vm2227, %v2201, 0
    %v2295 = vsel %vm2227, %v2202, 0
    %v2298 = vsel %vm2227, %v2203, 0
    %v2301 = vsel %vm2227, %v2204, 0
    %v2304 = vsel %vm2227, %v2205, 0
    %v2307 = vsel %vm2227, %v2206, 0
    %v2310 = vsel %vm2227, %v2207, 0
    %v2313 = vsel %vm2227, %v2208, 0
    %v2316 = vsel %vm2227, %v2209, 0
    %v2319 = vsel %vm2227, %v2210, 0
    %v2322 = vsel %vm2227, %v2211, 0
    %2324 = vmatprep.subr.mxu0 0.0
    %2325 = vmatpush1.msra.mxu0 %v2212
    %2326 = vmatprep.subr.mxu0 0.0
    %2327 = vmatpush1.msra.mxu0 %v2213
    %2328 = vmatprep.subr.mxu0 0.0
    %2329 = vmatpush1.msra.mxu0 %v2214
    %2330 = vmatprep.subr.mxu0 0.0
    %2331 = vmatpush1.msra.mxu0 %v2215
    %2332 = vmatprep.subr.mxu0 0.0
    %2333 = vmatpush1.msra.mxu0 %v2216
    %2334 = vmatprep.subr.mxu0 0.0
    %2335 = vmatpush1.msra.mxu0 %v2217
    %2336 = vmatprep.subr.mxu0 0.0
    %2337 = vmatpush1.msra.mxu0 %v2218
    %2338 = vmatprep.subr.mxu0 0.0
    %2339 = vmatpush1.msra.mxu0 %v2219
    %2340 = vmatprep.subr.mxu0 0.0
    %2341 = vmatpush1.msra.mxu0 0.0
    %2342 = vmatprep.subr.mxu0 0.0
    %2343 = vmatpush1.msra.mxu0 0.0
    %2344 = vmatprep.subr.mxu0 0.0
    %2345 = vmatpush1.msra.mxu0 0.0
    %2346 = vmatprep.subr.mxu0 0.0
    %2347 = vmatpush1.msra.mxu0 0.0
    %2348 = vmatprep.subr.mxu0 0.0
    %2349 = vmatpush1.msra.mxu0 0.0
    %2350 = vmatprep.subr.mxu0 0.0
    %2351 = vmatpush1.msra.mxu0 0.0
    %2352 = vmatprep.subr.mxu0 0.0
    %2353 = vmatpush1.msra.mxu0 0.0
    %2354 = vmatprep.subr.mxu0 0.0
    %2355 = vmatpush1.msra.mxu0 0.0
    %2356 = vmatprep.subr.mxu0 0.0
    %2357 = vmatpush1.msra.mxu0 0.0
    %2358 = vmatprep.subr.mxu0 0.0
    %2359 = vmatpush1.msra.mxu0 0.0
    %2360 = vmatprep.subr.mxu0 0.0
    %2361 = vmatpush1.msra.mxu0 0.0
    %2362 = vmatprep.subr.mxu0 0.0
    %2363 = vmatpush1.msra.mxu0 0.0
    %2364 = vmatprep.subr.mxu0 0.0
    %2365 = vmatpush1.msra.mxu0 0.0
    %2366 = vmatprep.subr.mxu0 0.0
    %2367 = vmatpush1.msra.mxu0 0.0
    %2368 = vmatprep.subr.mxu0 0.0
    %2369 = vmatpush1.msra.mxu0 0.0
    %2370 = vmatprep.subr.mxu0 0.0
    %2371 = vmatpush1.msra.mxu0 0.0
    %2372 = vmatprep.subr.mxu0 0.0
    %2373 = vmatpush1.msra.mxu0 0.0
    %2374 = vmatprep.subr.mxu0 0.0
    %2375 = vmatpush1.msra.mxu0 0.0
    %2376 = vmatprep.subr.mxu0 0.0
    %2377 = vmatpush1.msra.mxu0 0.0
    %2378 = vmatprep.subr.mxu0 0.0
    %2379 = vmatpush1.msra.mxu0 0.0
    %2380 = vmatprep.subr.mxu0 0.0
    %2381 = vmatpush1.msra.mxu0 0.0
    %2382 = vmatprep.subr.mxu0 0.0
    %2383 = vmatpush1.msra.mxu0 0.0
    %2384 = vmatprep.subr.mxu0 0.0
    %2385 = vmatpush1.msra.mxu0 0.0
    %2386 = vmatprep.subr.mxu0 0.0
    %2387 = vmatpush1.msra.mxu0 0.0
    %2388 = vmatprep.mubr.f32.mxu0 0.0
    %2389 = vmatmul.mubr.f32.gmra.mrb[0].mxu0 %v2229
    %v2390 = vpop.f32.mrb[0].mxu0
    %v2391 = vadd.f32 %v2225, %v2390
    %v2392 = vpop.f32.mrb[0].mxu0
    %2393 = vmatprep.mubr.f32.mxu0 0.0
    %2394 = vmatmul.mubr.f32.gmra.mrb[0].mxu0 %v2232
    %v2395 = vpop.f32.mrb[0].mxu0
    %v2396 = vadd.f32 %v2225, %v2395
    %v2397 = vpop.f32.mrb[0].mxu0
    %2398 = vmatprep.mubr.f32.mxu0 0.0
    %2399 = vmatmul.mubr.f32.gmra.mrb[0].mxu0 %v2235
    %v2400 = vpop.f32.mrb[0].mxu0
    %v2401 = vadd.f32 %v2225, %v2400
    %v2402 = vpop.f32.mrb[0].mxu0
    %2403 = vmatprep.mubr.f32.mxu0 0.0
    %2404 = vmatmul.mubr.f32.gmra.mrb[0].mxu0 %v2238
    %v2405 = vpop.f32.mrb[0].mxu0
    %v2406 = vadd.f32 %v2225, %v2405
    %v2407 = vpop.f32.mrb[0].mxu0
    %2408 = vmatprep.mubr.f32.mxu0 0.0
    %2409 = vmatmul.mubr.f32.gmra.mrb[0].mxu0 %v2241
    %v2410 = vpop.f32.mrb[0].mxu0
    %v2411 = vadd.f32 %v2225, %v2410
    %v2412 = vpop.f32.mrb[0].mxu0
    %2413 = vmatprep.mubr.f32.mxu0 0.0
    %2414 = vmatmul.mubr.f32.gmra.mrb[0].mxu0 %v2244
    %v2415 = vpop.f32.mrb[0].mxu0
    %v2416 = vadd.f32 %v2225, %v2415
    %v2417 = vpop.f32.mrb[0].mxu0
    %2418 = vmatprep.mubr.f32.mxu0 0.0
    %2419 = vmatmul.mubr.f32.gmra.mrb[0].mxu0 %v2247
    %v2420 = vpop.f32.mrb[0].mxu0
    %v2421 = vadd.f32 %v2225, %v2420
    %v2422 = vpop.f32.mrb[0].mxu0
    %2423 = vmatprep.mubr.f32.mxu0 0.0
    %2424 = vmatmul.mubr.f32.gmra.mrb[0].mxu0 %v2250
    %v2425 = vpop.f32.mrb[0].mxu0
    %v2426 = vadd.f32 %v2225, %v2425
    %v2427 = vpop.f32.mrb[0].mxu0
    %2428 = vmatprep.mubr.f32.mxu0 0.0
    %2429 = vmatmul.mubr.f32.gmra.mrb[0].mxu0 %v2253
    %v2430 = vpop.f32.mrb[0].mxu0
    %v2431 = vadd.f32 %v2225, %v2430
    %v2432 = vpop.f32.mrb[0].mxu0
    %2433 = vmatprep.mubr.f32.mxu0 0.0
    %2434 = vmatmul.mubr.f32.gmra.mrb[0].mxu0 %v2256
    %v2435 = vpop.f32.mrb[0].mxu0
    %v2436 = vadd.f32 %v2225, %v2435
    %v2437 = vpop.f32.mrb[0].mxu0
    %2438 = vmatprep.mubr.f32.mxu0 0.0
    %2439 = vmatmul.mubr.f32.gmra.mrb[0].mxu0 %v2259
    %v2440 = vpop.f32.mrb[0].mxu0
    %v2441 = vadd.f32 %v2225, %v2440
    %v2442 = vpop.f32.mrb[0].mxu0
    %2443 = vmatprep.mubr.f32.mxu0 0.0
    %2444 = vmatmul.mubr.f32.gmra.mrb[0].mxu0 %v2262
    %v2445 = vpop.f32.mrb[0].mxu0
    %v2446 = vadd.f32 %v2225, %v2445
    %v2447 = vpop.f32.mrb[0].mxu0
    %2448 = vmatprep.mubr.f32.mxu0 0.0
    %2449 = vmatmul.mubr.f32.gmra.mrb[0].mxu0 %v2265
    %v2450 = vpop.f32.mrb[0].mxu0
    %v2451 = vadd.f32 %v2225, %v2450
    %v2452 = vpop.f32.mrb[0].mxu0
    %2453 = vmatprep.mubr.f32.mxu0 0.0
    %2454 = vmatmul.mubr.f32.gmra.mrb[0].mxu0 %v2268
    %v2455 = vpop.f32.mrb[0].mxu0
    %v2456 = vadd.f32 %v2225, %v2455
    %v2457 = vpop.f32.mrb[0].mxu0
    %2458 = vmatprep.mubr.f32.mxu0 0.0
    %2459 = vmatmul.mubr.f32.gmra.mrb[0].mxu0 %v2271
    %v2460 = vpop.f32.mrb[0].mxu0
    %v2461 = vadd.f32 %v2225, %v2460
    %v2462 = vpop.f32.mrb[0].mxu0
    %2463 = vmatprep.mubr.f32.mxu0 0.0
    %2464 = vmatmul.mubr.f32.gmra.mrb[0].mxu0 %v2274
    %v2465 = vpop.f32.mrb[0].mxu0
    %v2466 = vadd.f32 %v2225, %v2465
    %v2467 = vpop.f32.mrb[0].mxu0
    %2468 = vmatprep.mubr.f32.mxu0 0.0
    %2469 = vmatmul.mubr.f32.gmra.mrb[0].mxu0 %v2277
    %v2470 = vpop.f32.mrb[0].mxu0
    %v2471 = vadd.f32 %v2225, %v2470
    %v2472 = vpop.f32.mrb[0].mxu0
    %2473 = vmatprep.mubr.f32.mxu0 0.0
    %2474 = vmatmul.mubr.f32.gmra.mrb[0].mxu0 %v2280
    %v2475 = vpop.f32.mrb[0].mxu0
    %v2476 = vadd.f32 %v2225, %v2475
    %v2477 = vpop.f32.mrb[0].mxu0
    %2478 = vmatprep.mubr.f32.mxu0 0.0
    %2479 = vmatmul.mubr.f32.gmra.mrb[0].mxu0 %v2283
    %v2480 = vpop.f32.mrb[0].mxu0
    %v2481 = vadd.f32 %v2225, %v2480
    %v2482 = vpop.f32.mrb[0].mxu0
    %2483 = vmatprep.mubr.f32.mxu0 0.0
    %2484 = vmatmul.mubr.f32.gmra.mrb[0].mxu0 %v2286
    %v2485 = vpop.f32.mrb[0].mxu0
    %v2486 = vadd.f32 %v2225, %v2485
    %v2487 = vpop.f32.mrb[0].mxu0
    %2488 = vmatprep.mubr.f32.mxu0 0.0
    %2489 = vmatmul.mubr.f32.gmra.mrb[0].mxu0 %v2289
    %v2490 = vpop.f32.mrb[0].mxu0
    %v2491 = vadd.f32 %v2225, %v2490
    %v2492 = vpop.f32.mrb[0].mxu0
    %2493 = vmatprep.mubr.f32.mxu0 0.0
    %2494 = vmatmul.mubr.f32.gmra.mrb[0].mxu0 %v2292
    %v2495 = vpop.f32.mrb[0].mxu0
    %v2496 = vadd.f32 %v2225, %v2495
    %v2497 = vpop.f32.mrb[0].mxu0
    %2498 = vmatprep.mubr.f32.mxu0 0.0
    %2499 = vmatmul.mubr.f32.gmra.mrb[0].mxu0 %v2295
    %v2500 = vpop.f32.mrb[0].mxu0
    %v2501 = vadd.f32 %v2225, %v2500
    %v2502 = vpop.f32.mrb[0].mxu0
    %2503 = vmatprep.mubr.f32.mxu0 0.0
    %2504 = vmatmul.mubr.f32.gmra.mrb[0].mxu0 %v2298
    %v2505 = vpop.f32.mrb[0].mxu0
    %v2506 = vadd.f32 %v2225, %v2505
    %v2507 = vpop.f32.mrb[0].mxu0
    %2508 = vmatprep.mubr.f32.mxu0 0.0
    %2509 = vmatmul.mubr.f32.gmra.mrb[0].mxu0 %v2301
    %v2510 = vpop.f32.mrb[0].mxu0
    %v2511 = vadd.f32 %v2225, %v2510
    %v2512 = vpop.f32.mrb[0].mxu0
    %2513 = vmatprep.mubr.f32.mxu0 0.0
    %2514 = vmatmul.mubr.f32.gmra.mrb[0].mxu0 %v2304
    %v2515 = vpop.f32.mrb[0].mxu0
    %v2516 = vadd.f32 %v2225, %v2515
    %v2517 = vpop.f32.mrb[0].mxu0
    %2518 = vmatprep.mubr.f32.mxu0 0.0
    %2519 = vmatmul.mubr.f32.gmra.mrb[0].mxu0 %v2307
    %v2520 = vpop.f32.mrb[0].mxu0
    %v2521 = vadd.f32 %v2225, %v2520
    %v2522 = vpop.f32.mrb[0].mxu0
    %2523 = vmatprep.mubr.f32.mxu0 0.0
    %2524 = vmatmul.mubr.f32.gmra.mrb[0].mxu0 %v2310
    %v2525 = vpop.f32.mrb[0].mxu0
    %v2526 = vadd.f32 %v2225, %v2525
    %v2527 = vpop.f32.mrb[0].mxu0
    %2528 = vmatprep.mubr.f32.mxu0 0.0
    %2529 = vmatmul.mubr.f32.gmra.mrb[0].mxu0 %v2313
    %v2530 = vpop.f32.mrb[0].mxu0
    %v2531 = vadd.f32 %v2225, %v2530
    %v2532 = vpop.f32.mrb[0].mxu0
    %2533 = vmatprep.mubr.f32.mxu0 0.0
    %2534 = vmatmul.mubr.f32.gmra.mrb[0].mxu0 %v2316
    %v2535 = vpop.f32.mrb[0].mxu0
    %v2536 = vadd.f32 %v2225, %v2535
    %v2537 = vpop.f32.mrb[0].mxu0
    %2538 = vmatprep.mubr.f32.mxu0 0.0
    %2539 = vmatmul.mubr.f32.gmra.mrb[0].mxu0 %v2319
    %v2540 = vpop.f32.mrb[0].mxu0
    %v2541 = vadd.f32 %v2225, %v2540
    %v2542 = vpop.f32.mrb[0].mxu0
    %2543 = vmatprep.mubr.f32.mxu0 0.0
    %2544 = vmatmul.mubr.f32.gmra.mrb[0].mxu0 %v2322
    %v2545 = vpop.f32.mrb[0].mxu0
    %v2546 = vadd.f32 %v2225, %v2545
    %v2547 = vpop.f32.mrb[0].mxu0
    %2548 = vdwg.mxu0
    %2549 = vst [vmem:[#allocation2] sm:$0xff] %v2391
    %2550 = vst [vmem:[#allocation2 + $0x8] sm:$0xff] %v2396
    %2551 = vst [vmem:[#allocation2 + $0x10] sm:$0xff] %v2401
    %2552 = vst [vmem:[#allocation2 + $0x18] sm:$0xff] %v2406
    %2553 = vst [vmem:[#allocation2 + $0x20] sm:$0xff] %v2411
    %2554 = vst [vmem:[#allocation2 + $0x28] sm:$0xff] %v2416
    %2555 = vst [vmem:[#allocation2 + $0x30] sm:$0xff] %v2421
    %2556 = vst [vmem:[#allocation2 + $0x38] sm:$0xff] %v2426
    %2557 = vst [vmem:[#allocation2 + $0x40] sm:$0xff] %v2431
    %2558 = vst [vmem:[#allocation2 + $0x48] sm:$0xff] %v2436
    %2559 = vst [vmem:[#allocation2 + $0x50] sm:$0xff] %v2441
    %2560 = vst [vmem:[#allocation2 + $0x58] sm:$0xff] %v2446
    %2561 = vst [vmem:[#allocation2 + $0x60] sm:$0xff] %v2451
    %2562 = vst [vmem:[#allocation2 + $0x68] sm:$0xff] %v2456
    %2563 = vst [vmem:[#allocation2 + $0x70] sm:$0xff] %v2461
    %2564 = vst [vmem:[#allocation2 + $0x78] sm:$0xff] %v2466
    %2565 = vst [vmem:[#allocation2 + $0x80] sm:$0xff] %v2471
    %2566 = vst [vmem:[#allocation2 + $0x88] sm:$0xff] %v2476
    %2567 = vst [vmem:[#allocation2 + $0x90] sm:$0xff] %v2481
    %2568 = vst [vmem:[#allocation2 + $0x98] sm:$0xff] %v2486
    %2569 = vst [vmem:[#allocation2 + $0xa0] sm:$0xff] %v2491
    %2570 = vst [vmem:[#allocation2 + $0xa8] sm:$0xff] %v2496
    %2571 = vst [vmem:[#allocation2 + $0xb0] sm:$0xff] %v2501
    %2572 = vst [vmem:[#allocation2 + $0xb8] sm:$0xff] %v2506
    %2573 = vst [vmem:[#allocation2 + $0xc0] sm:$0xff] %v2511
    %2574 = vst [vmem:[#allocation2 + $0xc8] sm:$0xff] %v2516
    %2575 = vst [vmem:[#allocation2 + $0xd0] sm:$0xff] %v2521
    %2576 = vst [vmem:[#allocation2 + $0xd8] sm:$0xff] %v2526
    %2577 = vst [vmem:[#allocation2 + $0xe0] sm:$0xff] %v2531
    %2578 = vst [vmem:[#allocation2 + $0xe8] sm:$0xff] %v2536
    %2579 = vst [vmem:[#allocation2 + $0xf0] sm:$0xff] %v2541
    %2580 = vst [vmem:[#allocation2 + $0xf8] sm:$0xff] %v2546
    // Predicated region
    $region38: #{tpu_custom_call.1} parent=1 // pred_check
      _
    $region39: #{tpu_custom_call.1} parent=1 // pred_check_branch
      %2582 = sbr.rel (0) target = $region41
    $region40: #{tpu_custom_call.1} parent=1 // pred_region
      %s2584 = ssub.s32 4096, 4096
      %2585 = vsyncadd [#allocation3], %s2584
      %s2586 = sshll.u32 [#allocation2], 4
      %s2587 = int_to_ptr.vmem [resolvable:$true] %s2586
      %2592 = dma.vmem_to_hbm [thread:$0]  %s2587, 4096, %s9, [#allocation3], 128, 128, 8
    $region41: #{tpu_custom_call.1} parent=1 // pred_fallthru
      _
    // Predicated region
    $region42: #{tpu_custom_call.1} parent=1 // pred_check
      _
    $region43: #{tpu_custom_call.1} parent=1 // pred_check_branch
      %2594 = sbr.rel (0) target = $region45
    $region44: #{tpu_custom_call.1} parent=1 // pred_region
      _
    $region45: #{tpu_custom_call.1} parent=1 // pred_fallthru
      _
    // Predicated region
    $region46: #{tpu_custom_call.1} parent=1 // pred_check
      _
    $region47: #{tpu_custom_call.1} parent=1 // pred_check_branch
      %2596 = sbr.rel (0) target = $region49
    $region48: #{tpu_custom_call.1} parent=1 // pred_region
      %2597 = dma.done [#allocation3], 4096
    $region49: #{tpu_custom_call.1} parent=1 // pred_fallthru
      _
    // Predicated region
    $region50: #{tpu_custom_call.1} parent=1 // pred_check
      _
    $region51: #{tpu_custom_call.1} parent=1 // pred_check_branch
      %2599 = sbr.rel (0) target = $region53
    $region52: #{tpu_custom_call.1} parent=1 // pred_region
      _
    $region53: #{tpu_custom_call.1} parent=1 // pred_fallthru
      _
    %2600 = vsyncpa [#allocation3], 1

// kernel: tpu_custom_call.1
$region0: #{tpu_custom_call.1}
  #allocation0 [shape = 'u32[]', space=smem, size = 0x4, offset = 0x4, fixed_abs, tag = 'smem constant byte address 0x4 - core index']
  #allocation1 [shape = 'u32[144,128]{1,0:T(1,128)}', space=vmem, size = 0x12000, scoped, tag = 'internal scratch']
  %s0 = inlined_call_operand.vmem [shape: f32[256,8], index: 0, kind: input, shape index: {}]
  %s1 = inlined_call_operand.vmem [shape: f32[64,128], index: 1, kind: input, shape index: {}]
  %s2 = inlined_call_operand.vmem [shape: f32[1,128], index: 2, kind: input, shape index: {}]
  %s3 = inlined_call_operand.vmem [shape: f32[256,32], index: 3, kind: input, shape index: {}]
  %s4 = inlined_call_operand.vmem [shape: f32[32,32], index: 4, kind: input, shape index: {}]
  %s5 = inlined_call_operand.vmem [shape: f32[1,32], index: 5, kind: input, shape index: {}]
  %s6 = inlined_call_operand.vmem [shape: f32[8,256], index: 6, kind: input, shape index: {}]
  %s7 = inlined_call_operand.vmem [shape: f32[1,256], index: 7, kind: input, shape index: {}]
  %s8 = inlined_call_operand.vmem [shape: f32[256,32], index: 8, kind: input, shape index: {}]
  %s9 = inlined_call_operand.hbm [shape: f32[256,128], index: 9, kind: output, shape index: {0}]
  %s10 = inlined_call_operand.vmem [shape: f32[256,32], index: 10, kind: output, shape index: {1}]
  %11 = xla_tuple %s9, %s10
  %s12 = sld [smem:[#allocation0]]
  $region54: #{tpu_custom_call.1} parent=0
    _
  %s14 = ssub.s32 1, %s12
  %s15 = scalar_select 0, %s14, %s12
  $region1: #{tpu_custom_call.1} parent=0
    #allocation2 [shape = 'u8[131072]{0}', space=vmem, size = 0x20000, scoped, tag = 'output window, operand 0, single buffered']
    #allocation3 [shape = 's32[1]{0}', space=sflag, size = 0x4, scoped, tag = 'scoped memory for tpu_custom_call.1']
    %16 = vsyncpa [#allocation3], 0
    // Predicated region
    $region2: #{tpu_custom_call.1} parent=1 // pred_check
      _
    $region3: #{tpu_custom_call.1} parent=1 // pred_check_branch
      %18 = sbr.rel (0) target = $region5
    $region4: #{tpu_custom_call.1} parent=1 // pred_region
      _
    $region5: #{tpu_custom_call.1} parent=1 // pred_fallthru
      _
    // Predicated region
    $region6: #{tpu_custom_call.1} parent=1 // pred_check
      _
    $region7: #{tpu_custom_call.1} parent=1 // pred_check_branch
      %20 = sbr.rel (0) target = $region9
    $region8: #{tpu_custom_call.1} parent=1 // pred_region
      _
    $region9: #{tpu_custom_call.1} parent=1 // pred_fallthru
      _
    // Predicated region
    $region10: #{tpu_custom_call.1} parent=1 // pred_check
      _
    $region11: #{tpu_custom_call.1} parent=1 // pred_check_branch
      %22 = sbr.rel (0) target = $region13
    $region12: #{tpu_custom_call.1} parent=1 // pred_region
      _
    $region13: #{tpu_custom_call.1} parent=1 // pred_fallthru
      _
    // Predicated region
    $region14: #{tpu_custom_call.1} parent=1 // pred_check
      _
    $region15: #{tpu_custom_call.1} parent=1 // pred_check_branch
      %24 = sbr.rel (0) target = $region17
    $region16: #{tpu_custom_call.1} parent=1 // pred_region
      _
    $region17: #{tpu_custom_call.1} parent=1 // pred_fallthru
      _
    // Predicated region
    $region18: #{tpu_custom_call.1} parent=1 // pred_check
      _
    $region19: #{tpu_custom_call.1} parent=1 // pred_check_branch
      %26 = sbr.rel (0) target = $region21
    $region20: #{tpu_custom_call.1} parent=1 // pred_region
      _
    $region21: #{tpu_custom_call.1} parent=1 // pred_fallthru
      _
    // Predicated region
    $region22: #{tpu_custom_call.1} parent=1 // pred_check
      _
    $region23: #{tpu_custom_call.1} parent=1 // pred_check_branch
      %28 = sbr.rel (0) target = $region25
    $region24: #{tpu_custom_call.1} parent=1 // pred_region
      _
    $region25: #{tpu_custom_call.1} parent=1 // pred_fallthru
      _
    // Predicated region
    $region26: #{tpu_custom_call.1} parent=1 // pred_check
      _
    $region27: #{tpu_custom_call.1} parent=1 // pred_check_branch
      %30 = sbr.rel (0) target = $region29
    $region28: #{tpu_custom_call.1} parent=1 // pred_region
      _
    $region29: #{tpu_custom_call.1} parent=1 // pred_fallthru
      _
    // Predicated region
    $region30: #{tpu_custom_call.1} parent=1 // pred_check
      _
    $region31: #{tpu_custom_call.1} parent=1 // pred_check_branch
      %32 = sbr.rel (0) target = $region33
    $region32: #{tpu_custom_call.1} parent=1 // pred_region
      _
    $region33: #{tpu_custom_call.1} parent=1 // pred_fallthru
      _
    // Predicated region
    $region34: #{tpu_custom_call.1} parent=1 // pred_check
      _
    $region35: #{tpu_custom_call.1} parent=1 // pred_check_branch
      %34 = sbr.rel (0) target = $region37
    $region36: #{tpu_custom_call.1} parent=1 // pred_region
      _
    $region37: #{tpu_custom_call.1} parent=1 // pred_fallthru
      _
    %v35 = vld [vmem:[%s0] sm:$0xff]
    %v36 = vld [vmem:[%s0 + $0x8] sm:$0xff]
    %v37 = vld [vmem:[%s0 + $0x10] sm:$0xff]
    %v38 = vld [vmem:[%s0 + $0x18] sm:$0xff]
    %v39 = vld [vmem:[%s0 + $0x20] sm:$0xff]
    %v40 = vld [vmem:[%s0 + $0x28] sm:$0xff]
    %v41 = vld [vmem:[%s0 + $0x30] sm:$0xff]
    %v42 = vld [vmem:[%s0 + $0x38] sm:$0xff]
    %v43 = vld [vmem:[%s0 + $0x40] sm:$0xff]
    %v44 = vld [vmem:[%s0 + $0x48] sm:$0xff]
    %v45 = vld [vmem:[%s0 + $0x50] sm:$0xff]
    %v46 = vld [vmem:[%s0 + $0x58] sm:$0xff]
    %v47 = vld [vmem:[%s0 + $0x60] sm:$0xff]
    %v48 = vld [vmem:[%s0 + $0x68] sm:$0xff]
    %v49 = vld [vmem:[%s0 + $0x70] sm:$0xff]
    %v50 = vld [vmem:[%s0 + $0x78] sm:$0xff]
    %v51 = vld [vmem:[%s0 + $0x80] sm:$0xff]
    %v52 = vld [vmem:[%s0 + $0x88] sm:$0xff]
    %v53 = vld [vmem:[%s0 + $0x90] sm:$0xff]
    %v54 = vld [vmem:[%s0 + $0x98] sm:$0xff]
    %v55 = vld [vmem:[%s0 + $0xa0] sm:$0xff]
    %v56 = vld [vmem:[%s0 + $0xa8] sm:$0xff]
    %v57 = vld [vmem:[%s0 + $0xb0] sm:$0xff]
    %v58 = vld [vmem:[%s0 + $0xb8] sm:$0xff]
    %v59 = vld [vmem:[%s0 + $0xc0] sm:$0xff]
    %v60 = vld [vmem:[%s0 + $0xc8] sm:$0xff]
    %v61 = vld [vmem:[%s0 + $0xd0] sm:$0xff]
    %v62 = vld [vmem:[%s0 + $0xd8] sm:$0xff]
    %v63 = vld [vmem:[%s0 + $0xe0] sm:$0xff]
    %v64 = vld [vmem:[%s0 + $0xe8] sm:$0xff]
    %v65 = vld [vmem:[%s0 + $0xf0] sm:$0xff]
    %v66 = vld [vmem:[%s0 + $0xf8] sm:$0xff]
    %v67 = vld [vmem:[%s3] sm:$0xff]
    %v68 = vld [vmem:[%s3 + $0x8] sm:$0xff]
    %v69 = vld [vmem:[%s3 + $0x10] sm:$0xff]
    %v70 = vld [vmem:[%s3 + $0x18] sm:$0xff]
    %v71 = vld [vmem:[%s3 + $0x20] sm:$0xff]
    %v72 = vld [vmem:[%s3 + $0x28] sm:$0xff]
    %v73 = vld [vmem:[%s3 + $0x30] sm:$0xff]
    %v74 = vld [vmem:[%s3 + $0x38] sm:$0xff]
    %v75 = vld [vmem:[%s3 + $0x40] sm:$0xff]
    %v76 = vld [vmem:[%s3 + $0x48] sm:$0xff]
    %v77 = vld [vmem:[%s3 + $0x50] sm:$0xff]
    %v78 = vld [vmem:[%s3 + $0x58] sm:$0xff]
    %v79 = vld [vmem:[%s3 + $0x60] sm:$0xff]
    %v80 = vld [vmem:[%s3 + $0x68] sm:$0xff]
    %v81 = vld [vmem:[%s3 + $0x70] sm:$0xff]
    %v82 = vld [vmem:[%s3 + $0x78] sm:$0xff]
    %v83 = vld [vmem:[%s3 + $0x80] sm:$0xff]
    %v84 = vld [vmem:[%s3 + $0x88] sm:$0xff]
    %v85 = vld [vmem:[%s3 + $0x90] sm:$0xff]
    %v86 = vld [vmem:[%s3 + $0x98] sm:$0xff]
    %v87 = vld [vmem:[%s3 + $0xa0] sm:$0xff]
    %v88 = vld [vmem:[%s3 + $0xa8] sm:$0xff]
    %v89 = vld [vmem:[%s3 + $0xb0] sm:$0xff]
    %v90 = vld [vmem:[%s3 + $0xb8] sm:$0xff]
    %v91 = vld [vmem:[%s3 + $0xc0] sm:$0xff]
    %v92 = vld [vmem:[%s3 + $0xc8] sm:$0xff]
    %v93 = vld [vmem:[%s3 + $0xd0] sm:$0xff]
    %v94 = vld [vmem:[%s3 + $0xd8] sm:$0xff]
    %v95 = vld [vmem:[%s3 + $0xe0] sm:$0xff]
    %v96 = vld [vmem:[%s3 + $0xe8] sm:$0xff]
    %v97 = vld [vmem:[%s3 + $0xf0] sm:$0xff]
    %v98 = vld [vmem:[%s3 + $0xf8] sm:$0xff]
    %v99 = vld [vmem:[%s4] sm:$0xff]
    %v100 = vld [vmem:[%s4 + $0x8] sm:$0xff]
    %v101 = vld [vmem:[%s4 + $0x10] sm:$0xff]
    %v102 = vld [vmem:[%s4 + $0x18] sm:$0xff]
    %v103 = vld [vmem:[%s5] sm:$0x1]
    %v105 = vlaneseq
    %v106 = vshrl.u32 %v105, 7
    %v107 = vsub.s32 0, %v106
    %v108 = vrot.slane %v103, %v107
    %vm110 = vcmask 261120
    %v112 = vsel %vm110, %v67, 0
    %v115 = vsel %vm110, %v68, 0
    %v118 = vsel %vm110, %v69, 0
    %v121 = vsel %vm110, %v70, 0
    %v124 = vsel %vm110, %v71, 0
    %v127 = vsel %vm110, %v72, 0
    %v130 = vsel %vm110, %v73, 0
    %v133 = vsel %vm110, %v74, 0
    %v136 = vsel %vm110, %v75, 0
    %v139 = vsel %vm110, %v76, 0
    %v142 = vsel %vm110, %v77, 0
    %v145 = vsel %vm110, %v78, 0
    %v148 = vsel %vm110, %v79, 0
    %v151 = vsel %vm110, %v80, 0
    %v154 = vsel %vm110, %v81, 0
    %v157 = vsel %vm110, %v82, 0
    %v160 = vsel %vm110, %v83, 0
    %v163 = vsel %vm110, %v84, 0
    %v166 = vsel %vm110, %v85, 0
    %v169 = vsel %vm110, %v86, 0
    %v172 = vsel %vm110, %v87, 0
    %v175 = vsel %vm110, %v88, 0
    %v178 = vsel %vm110, %v89, 0
    %v181 = vsel %vm110, %v90, 0
    %v184 = vsel %vm110, %v91, 0
    %v187 = vsel %vm110, %v92, 0
    %v190 = vsel %vm110, %v93, 0
    %v193 = vsel %vm110, %v94, 0
    %v196 = vsel %vm110, %v95, 0
    %v199 = vsel %vm110, %v96, 0
    %v202 = vsel %vm110, %v97, 0
    %v205 = vsel %vm110, %v98, 0
    %207 = vmatprep.subr.mxu0 0.0
    %208 = vmatpush1.msra.mxu0 %v99
    %209 = vmatprep.subr.mxu0 0.0
    %210 = vmatpush1.msra.mxu0 %v100
    %211 = vmatprep.subr.mxu0 0.0
    %212 = vmatpush1.msra.mxu0 %v101
    %213 = vmatprep.subr.mxu0 0.0
    %214 = vmatpush1.msra.mxu0 %v102
    %215 = vmatprep.subr.mxu0 0.0
    %216 = vmatpush1.msra.mxu0 0.0
    %217 = vmatprep.subr.mxu0 0.0
    %218 = vmatpush1.msra.mxu0 0.0
    %219 = vmatprep.subr.mxu0 0.0
    %220 = vmatpush1.msra.mxu0 0.0
    %221 = vmatprep.subr.mxu0 0.0
    %222 = vmatpush1.msra.mxu0 0.0
    %223 = vmatprep.subr.mxu0 0.0
    %224 = vmatpush1.msra.mxu0 0.0
    %225 = vmatprep.subr.mxu0 0.0
    %226 = vmatpush1.msra.mxu0 0.0
    %227 = vmatprep.subr.mxu0 0.0
    %228 = vmatpush1.msra.mxu0 0.0
    %229 = vmatprep.subr.mxu0 0.0
    %230 = vmatpush1.msra.mxu0 0.0
    %231 = vmatprep.subr.mxu0 0.0
    %232 = vmatpush1.msra.mxu0 0.0
    %233 = vmatprep.subr.mxu0 0.0
    %234 = vmatpush1.msra.mxu0 0.0
    %235 = vmatprep.subr.mxu0 0.0
    %236 = vmatpush1.msra.mxu0 0.0
    %237 = vmatprep.subr.mxu0 0.0
    %238 = vmatpush1.msra.mxu0 0.0
    %239 = vmatprep.subr.mxu0 0.0
    %240 = vmatpush1.msra.mxu0 0.0
    %241 = vmatprep.subr.mxu0 0.0
    %242 = vmatpush1.msra.mxu0 0.0
    %243 = vmatprep.subr.mxu0 0.0
    %244 = vmatpush1.msra.mxu0 0.0
    %245 = vmatprep.subr.mxu0 0.0
    %246 = vmatpush1.msra.mxu0 0.0
    %247 = vmatprep.subr.mxu0 0.0
    %248 = vmatpush1.msra.mxu0 0.0
    %249 = vmatprep.subr.mxu0 0.0
    %250 = vmatpush1.msra.mxu0 0.0
    %251 = vmatprep.subr.mxu0 0.0
    %252 = vmatpush1.msra.mxu0 0.0
    %253 = vmatprep.subr.mxu0 0.0
    %254 = vmatpush1.msra.mxu0 0.0
    %255 = vmatprep.subr.mxu0 0.0
    %256 = vmatpush1.msra.mxu0 0.0
    %257 = vmatprep.subr.mxu0 0.0
    %258 = vmatpush1.msra.mxu0 0.0
    %259 = vmatprep.subr.mxu0 0.0
    %260 = vmatpush1.msra.mxu0 0.0
    %261 = vmatprep.subr.mxu0 0.0
    %262 = vmatpush1.msra.mxu0 0.0
    %263 = vmatprep.subr.mxu0 0.0
    %264 = vmatpush1.msra.mxu0 0.0
    %265 = vmatprep.subr.mxu0 0.0
    %266 = vmatpush1.msra.mxu0 0.0
    %267 = vmatprep.subr.mxu0 0.0
    %268 = vmatpush1.msra.mxu0 0.0
    %269 = vmatprep.subr.mxu0 0.0
    %270 = vmatpush1.msra.mxu0 0.0
    %271 = vmatprep.mubr.f32.mxu0 0.0
    %272 = vmatmul.mubr.f32.gmra.mrb[0].mxu0 %v112
    %v273 = vpop.f32.mrb[0].mxu0
    %v274 = vadd.f32 %v108, %v273
    %v275 = vpop.f32.mrb[0].mxu0
    %276 = vmatprep.mubr.f32.mxu0 0.0
    %277 = vmatmul.mubr.f32.gmra.mrb[0].mxu0 %v115
    %v278 = vpop.f32.mrb[0].mxu0
    %v279 = vadd.f32 %v108, %v278
    %v280 = vpop.f32.mrb[0].mxu0
    %281 = vmatprep.mubr.f32.mxu0 0.0
    %282 = vmatmul.mubr.f32.gmra.mrb[0].mxu0 %v118
    %v283 = vpop.f32.mrb[0].mxu0
    %v284 = vadd.f32 %v108, %v283
    %v285 = vpop.f32.mrb[0].mxu0
    %286 = vmatprep.mubr.f32.mxu0 0.0
    %287 = vmatmul.mubr.f32.gmra.mrb[0].mxu0 %v121
    %v288 = vpop.f32.mrb[0].mxu0
    %v289 = vadd.f32 %v108, %v288
    %v290 = vpop.f32.mrb[0].mxu0
    %291 = vmatprep.mubr.f32.mxu0 0.0
    %292 = vmatmul.mubr.f32.gmra.mrb[0].mxu0 %v124
    %v293 = vpop.f32.mrb[0].mxu0
    %v294 = vadd.f32 %v108, %v293
    %v295 = vpop.f32.mrb[0].mxu0
    %296 = vmatprep.mubr.f32.mxu0 0.0
    %297 = vmatmul.mubr.f32.gmra.mrb[0].mxu0 %v127
    %v298 = vpop.f32.mrb[0].mxu0
    %v299 = vadd.f32 %v108, %v298
    %v300 = vpop.f32.mrb[0].mxu0
    %301 = vmatprep.mubr.f32.mxu0 0.0
    %302 = vmatmul.mubr.f32.gmra.mrb[0].mxu0 %v130
    %v303 = vpop.f32.mrb[0].mxu0
    %v304 = vadd.f32 %v108, %v303
    %v305 = vpop.f32.mrb[0].mxu0
    %306 = vmatprep.mubr.f32.mxu0 0.0
    %307 = vmatmul.mubr.f32.gmra.mrb[0].mxu0 %v133
    %v308 = vpop.f32.mrb[0].mxu0
    %v309 = vadd.f32 %v108, %v308
    %v310 = vpop.f32.mrb[0].mxu0
    %311 = vmatprep.mubr.f32.mxu0 0.0
    %312 = vmatmul.mubr.f32.gmra.mrb[0].mxu0 %v136
    %v313 = vpop.f32.mrb[0].mxu0
    %v314 = vadd.f32 %v108, %v313
    %v315 = vpop.f32.mrb[0].mxu0
    %316 = vmatprep.mubr.f32.mxu0 0.0
    %317 = vmatmul.mubr.f32.gmra.mrb[0].mxu0 %v139
    %v318 = vpop.f32.mrb[0].mxu0
    %v319 = vadd.f32 %v108, %v318
    %v320 = vpop.f32.mrb[0].mxu0
    %321 = vmatprep.mubr.f32.mxu0 0.0
    %322 = vmatmul.mubr.f32.gmra.mrb[0].mxu0 %v142
    %v323 = vpop.f32.mrb[0].mxu0
    %v324 = vadd.f32 %v108, %v323
    %v325 = vpop.f32.mrb[0].mxu0
    %326 = vmatprep.mubr.f32.mxu0 0.0
    %327 = vmatmul.mubr.f32.gmra.mrb[0].mxu0 %v145
    %v328 = vpop.f32.mrb[0].mxu0
    %v329 = vadd.f32 %v108, %v328
    %v330 = vpop.f32.mrb[0].mxu0
    %331 = vmatprep.mubr.f32.mxu0 0.0
    %332 = vmatmul.mubr.f32.gmra.mrb[0].mxu0 %v148
    %v333 = vpop.f32.mrb[0].mxu0
    %v334 = vadd.f32 %v108, %v333
    %v335 = vpop.f32.mrb[0].mxu0
    %336 = vmatprep.mubr.f32.mxu0 0.0
    %337 = vmatmul.mubr.f32.gmra.mrb[0].mxu0 %v151
    %v338 = vpop.f32.mrb[0].mxu0
    %v339 = vadd.f32 %v108, %v338
    %v340 = vpop.f32.mrb[0].mxu0
    %341 = vmatprep.mubr.f32.mxu0 0.0
    %342 = vmatmul.mubr.f32.gmra.mrb[0].mxu0 %v154
    %v343 = vpop.f32.mrb[0].mxu0
    %v344 = vadd.f32 %v108, %v343
    %v345 = vpop.f32.mrb[0].mxu0
    %346 = vmatprep.mubr.f32.mxu0 0.0
    %347 = vmatmul.mubr.f32.gmra.mrb[0].mxu0 %v157
    %v348 = vpop.f32.mrb[0].mxu0
    %v349 = vadd.f32 %v108, %v348
    %v350 = vpop.f32.mrb[0].mxu0
    %351 = vmatprep.mubr.f32.mxu0 0.0
    %352 = vmatmul.mubr.f32.gmra.mrb[0].mxu0 %v160
    %v353 = vpop.f32.mrb[0].mxu0
    %v354 = vadd.f32 %v108, %v353
    %v355 = vpop.f32.mrb[0].mxu0
    %356 = vmatprep.mubr.f32.mxu0 0.0
    %357 = vmatmul.mubr.f32.gmra.mrb[0].mxu0 %v163
    %v358 = vpop.f32.mrb[0].mxu0
    %v359 = vadd.f32 %v108, %v358
    %v360 = vpop.f32.mrb[0].mxu0
    %361 = vmatprep.mubr.f32.mxu0 0.0
    %362 = vmatmul.mubr.f32.gmra.mrb[0].mxu0 %v166
    %v363 = vpop.f32.mrb[0].mxu0
    %v364 = vadd.f32 %v108, %v363
    %v365 = vpop.f32.mrb[0].mxu0
    %366 = vmatprep.mubr.f32.mxu0 0.0
    %367 = vmatmul.mubr.f32.gmra.mrb[0].mxu0 %v169
    %v368 = vpop.f32.mrb[0].mxu0
    %v369 = vadd.f32 %v108, %v368
    %v370 = vpop.f32.mrb[0].mxu0
    %371 = vmatprep.mubr.f32.mxu0 0.0
    %372 = vmatmul.mubr.f32.gmra.mrb[0].mxu0 %v172
    %v373 = vpop.f32.mrb[0].mxu0
    %v374 = vadd.f32 %v108, %v373
    %v375 = vpop.f32.mrb[0].mxu0
    %376 = vmatprep.mubr.f32.mxu0 0.0
    %377 = vmatmul.mubr.f32.gmra.mrb[0].mxu0 %v175
    %v378 = vpop.f32.mrb[0].mxu0
    %v379 = vadd.f32 %v108, %v378
    %v380 = vpop.f32.mrb[0].mxu0
    %381 = vmatprep.mubr.f32.mxu0 0.0
    %382 = vmatmul.mubr.f32.gmra.mrb[0].mxu0 %v178
    %v383 = vpop.f32.mrb[0].mxu0
    %v384 = vadd.f32 %v108, %v383
    %v385 = vpop.f32.mrb[0].mxu0
    %386 = vmatprep.mubr.f32.mxu0 0.0
    %387 = vmatmul.mubr.f32.gmra.mrb[0].mxu0 %v181
    %v388 = vpop.f32.mrb[0].mxu0
    %v389 = vadd.f32 %v108, %v388
    %v390 = vpop.f32.mrb[0].mxu0
    %391 = vmatprep.mubr.f32.mxu0 0.0
    %392 = vmatmul.mubr.f32.gmra.mrb[0].mxu0 %v184
    %v393 = vpop.f32.mrb[0].mxu0
    %v394 = vadd.f32 %v108, %v393
    %v395 = vpop.f32.mrb[0].mxu0
    %396 = vmatprep.mubr.f32.mxu0 0.0
    %397 = vmatmul.mubr.f32.gmra.mrb[0].mxu0 %v187
    %v398 = vpop.f32.mrb[0].mxu0
    %v399 = vadd.f32 %v108, %v398
    %v400 = vpop.f32.mrb[0].mxu0
    %401 = vmatprep.mubr.f32.mxu0 0.0
    %402 = vmatmul.mubr.f32.gmra.mrb[0].mxu0 %v190
    %v403 = vpop.f32.mrb[0].mxu0
    %v404 = vadd.f32 %v108, %v403
    %v405 = vpop.f32.mrb[0].mxu0
    %406 = vmatprep.mubr.f32.mxu0 0.0
    %407 = vmatmul.mubr.f32.gmra.mrb[0].mxu0 %v193
    %v408 = vpop.f32.mrb[0].mxu0
    %v409 = vadd.f32 %v108, %v408
    %v410 = vpop.f32.mrb[0].mxu0
    %411 = vmatprep.mubr.f32.mxu0 0.0
    %412 = vmatmul.mubr.f32.gmra.mrb[0].mxu0 %v196
    %v413 = vpop.f32.mrb[0].mxu0
    %v414 = vadd.f32 %v108, %v413
    %v415 = vpop.f32.mrb[0].mxu0
    %416 = vmatprep.mubr.f32.mxu0 0.0
    %417 = vmatmul.mubr.f32.gmra.mrb[0].mxu0 %v199
    %v418 = vpop.f32.mrb[0].mxu0
    %v419 = vadd.f32 %v108, %v418
    %v420 = vpop.f32.mrb[0].mxu0
    %421 = vmatprep.mubr.f32.mxu0 0.0
    %422 = vmatmul.mubr.f32.gmra.mrb[0].mxu0 %v202
    %v423 = vpop.f32.mrb[0].mxu0
    %v424 = vadd.f32 %v108, %v423
    %v425 = vpop.f32.mrb[0].mxu0
    %426 = vmatprep.mubr.f32.mxu0 0.0
    %427 = vmatmul.mubr.f32.gmra.mrb[0].mxu0 %v205
    %v428 = vpop.f32.mrb[0].mxu0
    %v429 = vadd.f32 %v108, %v428
    %v430 = vpop.f32.mrb[0].mxu0
    %431 = vdwg.mxu0
    %v432 = vmax.f32 %v274, 0.0
    %v433 = vmax.f32 %v279, 0.0
    %v434 = vmax.f32 %v284, 0.0
    %v435 = vmax.f32 %v289, 0.0
    %v436 = vmax.f32 %v294, 0.0
    %v437 = vmax.f32 %v299, 0.0
    %v438 = vmax.f32 %v304, 0.0
    %v439 = vmax.f32 %v309, 0.0
    %v440 = vmax.f32 %v314, 0.0
    %v441 = vmax.f32 %v319, 0.0
    %v442 = vmax.f32 %v324, 0.0
    %v443 = vmax.f32 %v329, 0.0
    %v444 = vmax.f32 %v334, 0.0
    %v445 = vmax.f32 %v339, 0.0
    %v446 = vmax.f32 %v344, 0.0
    %v447 = vmax.f32 %v349, 0.0
    %v448 = vmax.f32 %v354, 0.0
    %v449 = vmax.f32 %v359, 0.0
    %v450 = vmax.f32 %v364, 0.0
    %v451 = vmax.f32 %v369, 0.0
    %v452 = vmax.f32 %v374, 0.0
    %v453 = vmax.f32 %v379, 0.0
    %v454 = vmax.f32 %v384, 0.0
    %v455 = vmax.f32 %v389, 0.0
    %v456 = vmax.f32 %v394, 0.0
    %v457 = vmax.f32 %v399, 0.0
    %v458 = vmax.f32 %v404, 0.0
    %v459 = vmax.f32 %v409, 0.0
    %v460 = vmax.f32 %v414, 0.0
    %v461 = vmax.f32 %v419, 0.0
    %v462 = vmax.f32 %v424, 0.0
    %v463 = vmax.f32 %v429, 0.0
    %464 = vst.msk [vmem:[%s10] sm:$0xff] %vm110, %v432
    %465 = vst.msk [vmem:[%s10 + $0x8] sm:$0xff] %vm110, %v433
    %466 = vst.msk [vmem:[%s10 + $0x10] sm:$0xff] %vm110, %v434
    %467 = vst.msk [vmem:[%s10 + $0x18] sm:$0xff] %vm110, %v435
    %468 = vst.msk [vmem:[%s10 + $0x20] sm:$0xff] %vm110, %v436
    %469 = vst.msk [vmem:[%s10 + $0x28] sm:$0xff] %vm110, %v437
    %470 = vst.msk [vmem:[%s10 + $0x30] sm:$0xff] %vm110, %v438
    %471 = vst.msk [vmem:[%s10 + $0x38] sm:$0xff] %vm110, %v439
    %472 = vst.msk [vmem:[%s10 + $0x40] sm:$0xff] %vm110, %v440
    %473 = vst.msk [vmem:[%s10 + $0x48] sm:$0xff] %vm110, %v441
    %474 = vst.msk [vmem:[%s10 + $0x50] sm:$0xff] %vm110, %v442
    %475 = vst.msk [vmem:[%s10 + $0x58] sm:$0xff] %vm110, %v443
    %476 = vst.msk [vmem:[%s10 + $0x60] sm:$0xff] %vm110, %v444
    %477 = vst.msk [vmem:[%s10 + $0x68] sm:$0xff] %vm110, %v445
    %478 = vst.msk [vmem:[%s10 + $0x70] sm:$0xff] %vm110, %v446
    %479 = vst.msk [vmem:[%s10 + $0x78] sm:$0xff] %vm110, %v447
    %480 = vst.msk [vmem:[%s10 + $0x80] sm:$0xff] %vm110, %v448
    %481 = vst.msk [vmem:[%s10 + $0x88] sm:$0xff] %vm110, %v449
    %482 = vst.msk [vmem:[%s10 + $0x90] sm:$0xff] %vm110, %v450
    %483 = vst.msk [vmem:[%s10 + $0x98] sm:$0xff] %vm110, %v451
    %484 = vst.msk [vmem:[%s10 + $0xa0] sm:$0xff] %vm110, %v452
    %485 = vst.msk [vmem:[%s10 + $0xa8] sm:$0xff] %vm110, %v453
    %486 = vst.msk [vmem:[%s10 + $0xb0] sm:$0xff] %vm110, %v454
    %487 = vst.msk [vmem:[%s10 + $0xb8] sm:$0xff] %vm110, %v455
    %488 = vst.msk [vmem:[%s10 + $0xc0] sm:$0xff] %vm110, %v456
    %489 = vst.msk [vmem:[%s10 + $0xc8] sm:$0xff] %vm110, %v457
    %490 = vst.msk [vmem:[%s10 + $0xd0] sm:$0xff] %vm110, %v458
    %491 = vst.msk [vmem:[%s10 + $0xd8] sm:$0xff] %vm110, %v459
    %492 = vst.msk [vmem:[%s10 + $0xe0] sm:$0xff] %vm110, %v460
    %493 = vst.msk [vmem:[%s10 + $0xe8] sm:$0xff] %vm110, %v461
    %494 = vst.msk [vmem:[%s10 + $0xf0] sm:$0xff] %vm110, %v462
    %495 = vst.msk [vmem:[%s10 + $0xf8] sm:$0xff] %vm110, %v463
    %v496 = vld [vmem:[%s6] sm:$0xff]
    %v497 = vld [vmem:[%s6 + $0x8] sm:$0xff]
    %v498 = vld [vmem:[%s7] sm:$0x3]
    %v499 = vld [vmem:[%s8] sm:$0xff]
    %v500 = vld [vmem:[%s8 + $0x8] sm:$0xff]
    %v501 = vld [vmem:[%s8 + $0x10] sm:$0xff]
    %v502 = vld [vmem:[%s8 + $0x18] sm:$0xff]
    %v503 = vld [vmem:[%s8 + $0x20] sm:$0xff]
    %v504 = vld [vmem:[%s8 + $0x28] sm:$0xff]
    %v505 = vld [vmem:[%s8 + $0x30] sm:$0xff]
    %v506 = vld [vmem:[%s8 + $0x38] sm:$0xff]
    %v507 = vld [vmem:[%s8 + $0x40] sm:$0xff]
    %v508 = vld [vmem:[%s8 + $0x48] sm:$0xff]
    %v509 = vld [vmem:[%s8 + $0x50] sm:$0xff]
    %v510 = vld [vmem:[%s8 + $0x58] sm:$0xff]
    %v511 = vld [vmem:[%s8 + $0x60] sm:$0xff]
    %v512 = vld [vmem:[%s8 + $0x68] sm:$0xff]
    %v513 = vld [vmem:[%s8 + $0x70] sm:$0xff]
    %v514 = vld [vmem:[%s8 + $0x78] sm:$0xff]
    %v515 = vld [vmem:[%s8 + $0x80] sm:$0xff]
    %v516 = vld [vmem:[%s8 + $0x88] sm:$0xff]
    %v517 = vld [vmem:[%s8 + $0x90] sm:$0xff]
    %v518 = vld [vmem:[%s8 + $0x98] sm:$0xff]
    %v519 = vld [vmem:[%s8 + $0xa0] sm:$0xff]
    %v520 = vld [vmem:[%s8 + $0xa8] sm:$0xff]
    %v521 = vld [vmem:[%s8 + $0xb0] sm:$0xff]
    %v522 = vld [vmem:[%s8 + $0xb8] sm:$0xff]
    %v523 = vld [vmem:[%s8 + $0xc0] sm:$0xff]
    %v524 = vld [vmem:[%s8 + $0xc8] sm:$0xff]
    %v525 = vld [vmem:[%s8 + $0xd0] sm:$0xff]
    %v526 = vld [vmem:[%s8 + $0xd8] sm:$0xff]
    %v527 = vld [vmem:[%s8 + $0xe0] sm:$0xff]
    %v528 = vld [vmem:[%s8 + $0xe8] sm:$0xff]
    %v529 = vld [vmem:[%s8 + $0xf0] sm:$0xff]
    %v530 = vld [vmem:[%s8 + $0xf8] sm:$0xff]
    %v532 = vlaneseq
    %v533 = vshrl.u32 %v532, 7
    %v534 = vsub.s32 0, %v533
    %v535 = vrot.slane %v498, %v534
    %v536 = vlaneseq
    %v537 = vshrl.u32 %v536, 7
    %v538 = vsub.s32 1, %v537
    %v539 = vrot.slane %v498, %v538
    %vm542 = vcmask 64512
    %v544 = vsel %vm542, %v35, 0
    %v547 = vsel %vm542, %v36, 0
    %v550 = vsel %vm542, %v37, 0
    %v553 = vsel %vm542, %v38, 0
    %v556 = vsel %vm542, %v39, 0
    %v559 = vsel %vm542, %v40, 0
    %v562 = vsel %vm542, %v41, 0
    %v565 = vsel %vm542, %v42, 0
    %v568 = vsel %vm542, %v43, 0
    %v571 = vsel %vm542, %v44, 0
    %v574 = vsel %vm542, %v45, 0
    %v577 = vsel %vm542, %v46, 0
    %v580 = vsel %vm542, %v47, 0
    %v583 = vsel %vm542, %v48, 0
    %v586 = vsel %vm542, %v49, 0
    %v589 = vsel %vm542, %v50, 0
    %v592 = vsel %vm542, %v51, 0
    %v595 = vsel %vm542, %v52, 0
    %v598 = vsel %vm542, %v53, 0
    %v601 = vsel %vm542, %v54, 0
    %v604 = vsel %vm542, %v55, 0
    %v607 = vsel %vm542, %v56, 0
    %v610 = vsel %vm542, %v57, 0
    %v613 = vsel %vm542, %v58, 0
    %v616 = vsel %vm542, %v59, 0
    %v619 = vsel %vm542, %v60, 0
    %v622 = vsel %vm542, %v61, 0
    %v625 = vsel %vm542, %v62, 0
    %v628 = vsel %vm542, %v63, 0
    %v631 = vsel %vm542, %v64, 0
    %v634 = vsel %vm542, %v65, 0
    %v637 = vsel %vm542, %v66, 0
    %639 = vmatprep.subr.mxu0 %v497
    %640 = vmatpush1.msra.mxu0 %v496
    %641 = vmatprep.subr.mxu0 0.0
    %642 = vmatpush1.msra.mxu0 0.0
    %643 = vmatprep.subr.mxu0 0.0
    %644 = vmatpush1.msra.mxu0 0.0
    %645 = vmatprep.subr.mxu0 0.0
    %646 = vmatpush1.msra.mxu0 0.0
    %647 = vmatprep.subr.mxu0 0.0
    %648 = vmatpush1.msra.mxu0 0.0
    %649 = vmatprep.subr.mxu0 0.0
    %650 = vmatpush1.msra.mxu0 0.0
    %651 = vmatprep.subr.mxu0 0.0
    %652 = vmatpush1.msra.mxu0 0.0
    %653 = vmatprep.subr.mxu0 0.0
    %654 = vmatpush1.msra.mxu0 0.0
    %655 = vmatprep.subr.mxu0 0.0
    %656 = vmatpush1.msra.mxu0 0.0
    %657 = vmatprep.subr.mxu0 0.0
    %658 = vmatpush1.msra.mxu0 0.0
    %659 = vmatprep.subr.mxu0 0.0
    %660 = vmatpush1.msra.mxu0 0.0
    %661 = vmatprep.subr.mxu0 0.0
    %662 = vmatpush1.msra.mxu0 0.0
    %663 = vmatprep.subr.mxu0 0.0
    %664 = vmatpush1.msra.mxu0 0.0
    %665 = vmatprep.subr.mxu0 0.0
    %666 = vmatpush1.msra.mxu0 0.0
    %667 = vmatprep.subr.mxu0 0.0
    %668 = vmatpush1.msra.mxu0 0.0
    %669 = vmatprep.subr.mxu0 0.0
    %670 = vmatpush1.msra.mxu0 0.0
    %671 = vmatprep.subr.mxu0 0.0
    %672 = vmatpush1.msra.mxu0 0.0
    %673 = vmatprep.subr.mxu0 0.0
    %674 = vmatpush1.msra.mxu0 0.0
    %675 = vmatprep.subr.mxu0 0.0
    %676 = vmatpush1.msra.mxu0 0.0
    %677 = vmatprep.subr.mxu0 0.0
    %678 = vmatpush1.msra.mxu0 0.0
    %679 = vmatprep.subr.mxu0 0.0
    %680 = vmatpush1.msra.mxu0 0.0
    %681 = vmatprep.subr.mxu0 0.0
    %682 = vmatpush1.msra.mxu0 0.0
    %683 = vmatprep.subr.mxu0 0.0
    %684 = vmatpush1.msra.mxu0 0.0
    %685 = vmatprep.subr.mxu0 0.0
    %686 = vmatpush1.msra.mxu0 0.0
    %687 = vmatprep.subr.mxu0 0.0
    %688 = vmatpush1.msra.mxu0 0.0
    %689 = vmatprep.subr.mxu0 0.0
    %690 = vmatpush1.msra.mxu0 0.0
    %691 = vmatprep.subr.mxu0 0.0
    %692 = vmatpush1.msra.mxu0 0.0
    %693 = vmatprep.subr.mxu0 0.0
    %694 = vmatpush1.msra.mxu0 0.0
    %695 = vmatprep.subr.mxu0 0.0
    %696 = vmatpush1.msra.mxu0 0.0
    %697 = vmatprep.subr.mxu0 0.0
    %698 = vmatpush1.msra.mxu0 0.0
    %699 = vmatprep.subr.mxu0 0.0
    %700 = vmatpush1.msra.mxu0 0.0
    %701 = vmatprep.subr.mxu0 0.0
    %702 = vmatpush1.msra.mxu0 0.0
    %703 = vmatprep.mubr.f32.mxu0 0.0
    %704 = vmatmul.mubr.f32.gmra.mrb[0].mxu0 %v544
    %v705 = vpop.f32.mrb[0].mxu0
    %v706 = vadd.f32 %v535, %v705
    %v707 = vpop.f32.mrb[0].mxu0
    %v708 = vadd.f32 %v539, %v707
    %709 = vmatprep.mubr.f32.mxu0 0.0
    %710 = vmatmul.mubr.f32.gmra.mrb[0].mxu0 %v547
    %v711 = vpop.f32.mrb[0].mxu0
    %v712 = vadd.f32 %v535, %v711
    %v713 = vpop.f32.mrb[0].mxu0
    %v714 = vadd.f32 %v539, %v713
    %715 = vmatprep.mubr.f32.mxu0 0.0
    %716 = vmatmul.mubr.f32.gmra.mrb[0].mxu0 %v550
    %v717 = vpop.f32.mrb[0].mxu0
    %v718 = vadd.f32 %v535, %v717
    %v719 = vpop.f32.mrb[0].mxu0
    %v720 = vadd.f32 %v539, %v719
    %721 = vmatprep.mubr.f32.mxu0 0.0
    %722 = vmatmul.mubr.f32.gmra.mrb[0].mxu0 %v553
    %v723 = vpop.f32.mrb[0].mxu0
    %v724 = vadd.f32 %v535, %v723
    %v725 = vpop.f32.mrb[0].mxu0
    %v726 = vadd.f32 %v539, %v725
    %727 = vmatprep.mubr.f32.mxu0 0.0
    %728 = vmatmul.mubr.f32.gmra.mrb[0].mxu0 %v556
    %v729 = vpop.f32.mrb[0].mxu0
    %v730 = vadd.f32 %v535, %v729
    %v731 = vpop.f32.mrb[0].mxu0
    %v732 = vadd.f32 %v539, %v731
    %733 = vmatprep.mubr.f32.mxu0 0.0
    %734 = vmatmul.mubr.f32.gmra.mrb[0].mxu0 %v559
    %v735 = vpop.f32.mrb[0].mxu0
    %v736 = vadd.f32 %v535, %v735
    %v737 = vpop.f32.mrb[0].mxu0
    %v738 = vadd.f32 %v539, %v737
    %739 = vmatprep.mubr.f32.mxu0 0.0
    %740 = vmatmul.mubr.f32.gmra.mrb[0].mxu0 %v562
    %v741 = vpop.f32.mrb[0].mxu0
    %v742 = vadd.f32 %v535, %v741
    %v743 = vpop.f32.mrb[0].mxu0
    %v744 = vadd.f32 %v539, %v743
    %745 = vmatprep.mubr.f32.mxu0 0.0
    %746 = vmatmul.mubr.f32.gmra.mrb[0].mxu0 %v565
    %v747 = vpop.f32.mrb[0].mxu0
    %v748 = vadd.f32 %v535, %v747
    %v749 = vpop.f32.mrb[0].mxu0
    %v750 = vadd.f32 %v539, %v749
    %751 = vmatprep.mubr.f32.mxu0 0.0
    %752 = vmatmul.mubr.f32.gmra.mrb[0].mxu0 %v568
    %v753 = vpop.f32.mrb[0].mxu0
    %v754 = vadd.f32 %v535, %v753
    %v755 = vpop.f32.mrb[0].mxu0
    %v756 = vadd.f32 %v539, %v755
    %757 = vmatprep.mubr.f32.mxu0 0.0
    %758 = vmatmul.mubr.f32.gmra.mrb[0].mxu0 %v571
    %v759 = vpop.f32.mrb[0].mxu0
    %v760 = vadd.f32 %v535, %v759
    %v761 = vpop.f32.mrb[0].mxu0
    %v762 = vadd.f32 %v539, %v761
    %763 = vmatprep.mubr.f32.mxu0 0.0
    %764 = vmatmul.mubr.f32.gmra.mrb[0].mxu0 %v574
    %v765 = vpop.f32.mrb[0].mxu0
    %v766 = vadd.f32 %v535, %v765
    %v767 = vpop.f32.mrb[0].mxu0
    %v768 = vadd.f32 %v539, %v767
    %769 = vmatprep.mubr.f32.mxu0 0.0
    %770 = vmatmul.mubr.f32.gmra.mrb[0].mxu0 %v577
    %v771 = vpop.f32.mrb[0].mxu0
    %v772 = vadd.f32 %v535, %v771
    %v773 = vpop.f32.mrb[0].mxu0
    %v774 = vadd.f32 %v539, %v773
    %775 = vmatprep.mubr.f32.mxu0 0.0
    %776 = vmatmul.mubr.f32.gmra.mrb[0].mxu0 %v580
    %v777 = vpop.f32.mrb[0].mxu0
    %v778 = vadd.f32 %v535, %v777
    %v779 = vpop.f32.mrb[0].mxu0
    %v780 = vadd.f32 %v539, %v779
    %781 = vmatprep.mubr.f32.mxu0 0.0
    %782 = vmatmul.mubr.f32.gmra.mrb[0].mxu0 %v583
    %v783 = vpop.f32.mrb[0].mxu0
    %v784 = vadd.f32 %v535, %v783
    %v785 = vpop.f32.mrb[0].mxu0
    %v786 = vadd.f32 %v539, %v785
    %787 = vmatprep.mubr.f32.mxu0 0.0
    %788 = vmatmul.mubr.f32.gmra.mrb[0].mxu0 %v586
    %v789 = vpop.f32.mrb[0].mxu0
    %v790 = vadd.f32 %v535, %v789
    %v791 = vpop.f32.mrb[0].mxu0
    %v792 = vadd.f32 %v539, %v791
    %793 = vmatprep.mubr.f32.mxu0 0.0
    %794 = vmatmul.mubr.f32.gmra.mrb[0].mxu0 %v589
    %v795 = vpop.f32.mrb[0].mxu0
    %v796 = vadd.f32 %v535, %v795
    %v797 = vpop.f32.mrb[0].mxu0
    %v798 = vadd.f32 %v539, %v797
    %799 = vmatprep.mubr.f32.mxu0 0.0
    %800 = vmatmul.mubr.f32.gmra.mrb[0].mxu0 %v592
    %v801 = vpop.f32.mrb[0].mxu0
    %v802 = vadd.f32 %v535, %v801
    %v803 = vpop.f32.mrb[0].mxu0
    %v804 = vadd.f32 %v539, %v803
    %805 = vmatprep.mubr.f32.mxu0 0.0
    %806 = vmatmul.mubr.f32.gmra.mrb[0].mxu0 %v595
    %v807 = vpop.f32.mrb[0].mxu0
    %v808 = vadd.f32 %v535, %v807
    %v809 = vpop.f32.mrb[0].mxu0
    %v810 = vadd.f32 %v539, %v809
    %811 = vmatprep.mubr.f32.mxu0 0.0
    %812 = vmatmul.mubr.f32.gmra.mrb[0].mxu0 %v598
    %v813 = vpop.f32.mrb[0].mxu0
    %v814 = vadd.f32 %v535, %v813
    %v815 = vpop.f32.mrb[0].mxu0
    %v816 = vadd.f32 %v539, %v815
    %817 = vmatprep.mubr.f32.mxu0 0.0
    %818 = vmatmul.mubr.f32.gmra.mrb[0].mxu0 %v601
    %v819 = vpop.f32.mrb[0].mxu0
    %v820 = vadd.f32 %v535, %v819
    %v821 = vpop.f32.mrb[0].mxu0
    %v822 = vadd.f32 %v539, %v821
    %823 = vmatprep.mubr.f32.mxu0 0.0
    %824 = vmatmul.mubr.f32.gmra.mrb[0].mxu0 %v604
    %v825 = vpop.f32.mrb[0].mxu0
    %v826 = vadd.f32 %v535, %v825
    %v827 = vpop.f32.mrb[0].mxu0
    %v828 = vadd.f32 %v539, %v827
    %829 = vmatprep.mubr.f32.mxu0 0.0
    %830 = vmatmul.mubr.f32.gmra.mrb[0].mxu0 %v607
    %v831 = vpop.f32.mrb[0].mxu0
    %v832 = vadd.f32 %v535, %v831
    %v833 = vpop.f32.mrb[0].mxu0
    %v834 = vadd.f32 %v539, %v833
    %835 = vmatprep.mubr.f32.mxu0 0.0
    %836 = vmatmul.mubr.f32.gmra.mrb[0].mxu0 %v610
    %v837 = vpop.f32.mrb[0].mxu0
    %v838 = vadd.f32 %v535, %v837
    %v839 = vpop.f32.mrb[0].mxu0
    %v840 = vadd.f32 %v539, %v839
    %841 = vmatprep.mubr.f32.mxu0 0.0
    %842 = vmatmul.mubr.f32.gmra.mrb[0].mxu0 %v613
    %v843 = vpop.f32.mrb[0].mxu0
    %v844 = vadd.f32 %v535, %v843
    %v845 = vpop.f32.mrb[0].mxu0
    %v846 = vadd.f32 %v539, %v845
    %847 = vmatprep.mubr.f32.mxu0 0.0
    %848 = vmatmul.mubr.f32.gmra.mrb[0].mxu0 %v616
    %v849 = vpop.f32.mrb[0].mxu0
    %v850 = vadd.f32 %v535, %v849
    %v851 = vpop.f32.mrb[0].mxu0
    %v852 = vadd.f32 %v539, %v851
    %853 = vmatprep.mubr.f32.mxu0 0.0
    %854 = vmatmul.mubr.f32.gmra.mrb[0].mxu0 %v619
    %v855 = vpop.f32.mrb[0].mxu0
    %v856 = vadd.f32 %v535, %v855
    %v857 = vpop.f32.mrb[0].mxu0
    %v858 = vadd.f32 %v539, %v857
    %859 = vmatprep.mubr.f32.mxu0 0.0
    %860 = vmatmul.mubr.f32.gmra.mrb[0].mxu0 %v622
    %v861 = vpop.f32.mrb[0].mxu0
    %v862 = vadd.f32 %v535, %v861
    %v863 = vpop.f32.mrb[0].mxu0
    %v864 = vadd.f32 %v539, %v863
    %865 = vmatprep.mubr.f32.mxu0 0.0
    %866 = vmatmul.mubr.f32.gmra.mrb[0].mxu0 %v625
    %v867 = vpop.f32.mrb[0].mxu0
    %v868 = vadd.f32 %v535, %v867
    %v869 = vpop.f32.mrb[0].mxu0
    %v870 = vadd.f32 %v539, %v869
    %871 = vmatprep.mubr.f32.mxu0 0.0
    %872 = vmatmul.mubr.f32.gmra.mrb[0].mxu0 %v628
    %v873 = vpop.f32.mrb[0].mxu0
    %v874 = vadd.f32 %v535, %v873
    %v875 = vpop.f32.mrb[0].mxu0
    %v876 = vadd.f32 %v539, %v875
    %877 = vmatprep.mubr.f32.mxu0 0.0
    %878 = vmatmul.mubr.f32.gmra.mrb[0].mxu0 %v631
    %v879 = vpop.f32.mrb[0].mxu0
    %v880 = vadd.f32 %v535, %v879
    %v881 = vpop.f32.mrb[0].mxu0
    %v882 = vadd.f32 %v539, %v881
    %883 = vmatprep.mubr.f32.mxu0 0.0
    %884 = vmatmul.mubr.f32.gmra.mrb[0].mxu0 %v634
    %v885 = vpop.f32.mrb[0].mxu0
    %v886 = vadd.f32 %v535, %v885
    %v887 = vpop.f32.mrb[0].mxu0
    %v888 = vadd.f32 %v539, %v887
    %889 = vmatprep.mubr.f32.mxu0 0.0
    %890 = vmatmul.mubr.f32.gmra.mrb[0].mxu0 %v637
    %v891 = vpop.f32.mrb[0].mxu0
    %v892 = vadd.f32 %v535, %v891
    %v893 = vpop.f32.mrb[0].mxu0
    %v894 = vadd.f32 %v539, %v893
    %895 = vdwg.mxu0
    %v896 = vlaneseq
    %v897 = vand.u32 %v896, 127
    %v898 = vadd.s32 %v897, 128
    %v899 = vmin.f32 %v706, %v708
    %900 = vmin.xlane.f32.xlu0 %v899
    %v901 = vpop.xlane.xlu0 %900
    %v902 = vmin.f32 %v712, %v714
    %903 = vmin.xlane.f32.xlu0 %v902
    %v904 = vpop.xlane.xlu0 %903
    %v905 = vmin.f32 %v718, %v720
    %906 = vmin.xlane.f32.xlu0 %v905
    %v907 = vpop.xlane.xlu0 %906
    %v908 = vmin.f32 %v724, %v726
    %909 = vmin.xlane.f32.xlu0 %v908
    %v910 = vpop.xlane.xlu0 %909
    %v911 = vmin.f32 %v730, %v732
    %912 = vmin.xlane.f32.xlu0 %v911
    %v913 = vpop.xlane.xlu0 %912
    %v914 = vmin.f32 %v736, %v738
    %915 = vmin.xlane.f32.xlu0 %v914
    %v916 = vpop.xlane.xlu0 %915
    %v917 = vmin.f32 %v742, %v744
    %918 = vmin.xlane.f32.xlu0 %v917
    %v919 = vpop.xlane.xlu0 %918
    %v920 = vmin.f32 %v748, %v750
    %921 = vmin.xlane.f32.xlu0 %v920
    %v922 = vpop.xlane.xlu0 %921
    %v923 = vmin.f32 %v754, %v756
    %924 = vmin.xlane.f32.xlu0 %v923
    %v925 = vpop.xlane.xlu0 %924
    %v926 = vmin.f32 %v760, %v762
    %927 = vmin.xlane.f32.xlu0 %v926
    %v928 = vpop.xlane.xlu0 %927
    %v929 = vmin.f32 %v766, %v768
    %930 = vmin.xlane.f32.xlu0 %v929
    %v931 = vpop.xlane.xlu0 %930
    %v932 = vmin.f32 %v772, %v774
    %933 = vmin.xlane.f32.xlu0 %v932
    %v934 = vpop.xlane.xlu0 %933
    %v935 = vmin.f32 %v778, %v780
    %936 = vmin.xlane.f32.xlu0 %v935
    %v937 = vpop.xlane.xlu0 %936
    %v938 = vmin.f32 %v784, %v786
    %939 = vmin.xlane.f32.xlu0 %v938
    %v940 = vpop.xlane.xlu0 %939
    %v941 = vmin.f32 %v790, %v792
    %942 = vmin.xlane.f32.xlu0 %v941
    %v943 = vpop.xlane.xlu0 %942
    %v944 = vmin.f32 %v796, %v798
    %945 = vmin.xlane.f32.xlu0 %v944
    %v946 = vpop.xlane.xlu0 %945
    %v947 = vmin.f32 %v802, %v804
    %948 = vmin.xlane.f32.xlu0 %v947
    %v949 = vpop.xlane.xlu0 %948
    %v950 = vmin.f32 %v808, %v810
    %951 = vmin.xlane.f32.xlu0 %v950
    %v952 = vpop.xlane.xlu0 %951
    %v953 = vmin.f32 %v814, %v816
    %954 = vmin.xlane.f32.xlu0 %v953
    %v955 = vpop.xlane.xlu0 %954
    %v956 = vmin.f32 %v820, %v822
    %957 = vmin.xlane.f32.xlu0 %v956
    %v958 = vpop.xlane.xlu0 %957
    %v959 = vmin.f32 %v826, %v828
    %960 = vmin.xlane.f32.xlu0 %v959
    %v961 = vpop.xlane.xlu0 %960
    %v962 = vmin.f32 %v832, %v834
    %963 = vmin.xlane.f32.xlu0 %v962
    %v964 = vpop.xlane.xlu0 %963
    %v965 = vmin.f32 %v838, %v840
    %966 = vmin.xlane.f32.xlu0 %v965
    %v967 = vpop.xlane.xlu0 %966
    %v968 = vmin.f32 %v844, %v846
    %969 = vmin.xlane.f32.xlu0 %v968
    %v970 = vpop.xlane.xlu0 %969
    %v971 = vmin.f32 %v850, %v852
    %972 = vmin.xlane.f32.xlu0 %v971
    %v973 = vpop.xlane.xlu0 %972
    %v974 = vmin.f32 %v856, %v858
    %975 = vmin.xlane.f32.xlu0 %v974
    %v976 = vpop.xlane.xlu0 %975
    %v977 = vmin.f32 %v862, %v864
    %978 = vmin.xlane.f32.xlu0 %v977
    %v979 = vpop.xlane.xlu0 %978
    %v980 = vmin.f32 %v868, %v870
    %981 = vmin.xlane.f32.xlu0 %v980
    %v982 = vpop.xlane.xlu0 %981
    %v983 = vmin.f32 %v874, %v876
    %984 = vmin.xlane.f32.xlu0 %v983
    %v985 = vpop.xlane.xlu0 %984
    %v986 = vmin.f32 %v880, %v882
    %987 = vmin.xlane.f32.xlu0 %v986
    %v988 = vpop.xlane.xlu0 %987
    %v989 = vmin.f32 %v886, %v888
    %990 = vmin.xlane.f32.xlu0 %v989
    %v991 = vpop.xlane.xlu0 %990
    %v992 = vmin.f32 %v892, %v894
    %993 = vmin.xlane.f32.xlu0 %v992
    %v994 = vpop.xlane.xlu0 %993
    %vm995 = vcmp.le.f32.partialorder %v706, %v901
    %vm996 = vcmp.le.f32.partialorder %v708, %v901
    %vm997 = vcmp.le.f32.partialorder %v712, %v904
    %vm998 = vcmp.le.f32.partialorder %v714, %v904
    %vm999 = vcmp.le.f32.partialorder %v718, %v907
    %vm1000 = vcmp.le.f32.partialorder %v720, %v907
    %vm1001 = vcmp.le.f32.partialorder %v724, %v910
    %vm1002 = vcmp.le.f32.partialorder %v726, %v910
    %vm1003 = vcmp.le.f32.partialorder %v730, %v913
    %vm1004 = vcmp.le.f32.partialorder %v732, %v913
    %vm1005 = vcmp.le.f32.partialorder %v736, %v916
    %vm1006 = vcmp.le.f32.partialorder %v738, %v916
    %vm1007 = vcmp.le.f32.partialorder %v742, %v919
    %vm1008 = vcmp.le.f32.partialorder %v744, %v919
    %vm1009 = vcmp.le.f32.partialorder %v748, %v922
    %vm1010 = vcmp.le.f32.partialorder %v750, %v922
    %vm1011 = vcmp.le.f32.partialorder %v754, %v925
    %vm1012 = vcmp.le.f32.partialorder %v756, %v925
    %vm1013 = vcmp.le.f32.partialorder %v760, %v928
    %vm1014 = vcmp.le.f32.partialorder %v762, %v928
    %vm1015 = vcmp.le.f32.partialorder %v766, %v931
    %vm1016 = vcmp.le.f32.partialorder %v768, %v931
    %vm1017 = vcmp.le.f32.partialorder %v772, %v934
    %vm1018 = vcmp.le.f32.partialorder %v774, %v934
    %vm1019 = vcmp.le.f32.partialorder %v778, %v937
    %vm1020 = vcmp.le.f32.partialorder %v780, %v937
    %vm1021 = vcmp.le.f32.partialorder %v784, %v940
    %vm1022 = vcmp.le.f32.partialorder %v786, %v940
    %vm1023 = vcmp.le.f32.partialorder %v790, %v943
    %vm1024 = vcmp.le.f32.partialorder %v792, %v943
    %vm1025 = vcmp.le.f32.partialorder %v796, %v946
    %vm1026 = vcmp.le.f32.partialorder %v798, %v946
    %vm1027 = vcmp.le.f32.partialorder %v802, %v949
    %vm1028 = vcmp.le.f32.partialorder %v804, %v949
    %vm1029 = vcmp.le.f32.partialorder %v808, %v952
    %vm1030 = vcmp.le.f32.partialorder %v810, %v952
    %vm1031 = vcmp.le.f32.partialorder %v814, %v955
    %vm1032 = vcmp.le.f32.partialorder %v816, %v955
    %vm1033 = vcmp.le.f32.partialorder %v820, %v958
    %vm1034 = vcmp.le.f32.partialorder %v822, %v958
    %vm1035 = vcmp.le.f32.partialorder %v826, %v961
    %vm1036 = vcmp.le.f32.partialorder %v828, %v961
    %vm1037 = vcmp.le.f32.partialorder %v832, %v964
    %vm1038 = vcmp.le.f32.partialorder %v834, %v964
    %vm1039 = vcmp.le.f32.partialorder %v838, %v967
    %vm1040 = vcmp.le.f32.partialorder %v840, %v967
    %vm1041 = vcmp.le.f32.partialorder %v844, %v970
    %vm1042 = vcmp.le.f32.partialorder %v846, %v970
    %vm1043 = vcmp.le.f32.partialorder %v850, %v973
    %vm1044 = vcmp.le.f32.partialorder %v852, %v973
    %vm1045 = vcmp.le.f32.partialorder %v856, %v976
    %vm1046 = vcmp.le.f32.partialorder %v858, %v976
    %vm1047 = vcmp.le.f32.partialorder %v862, %v979
    %vm1048 = vcmp.le.f32.partialorder %v864, %v979
    %vm1049 = vcmp.le.f32.partialorder %v868, %v982
    %vm1050 = vcmp.le.f32.partialorder %v870, %v982
    %vm1051 = vcmp.le.f32.partialorder %v874, %v985
    %vm1052 = vcmp.le.f32.partialorder %v876, %v985
    %vm1053 = vcmp.le.f32.partialorder %v880, %v988
    %vm1054 = vcmp.le.f32.partialorder %v882, %v988
    %vm1055 = vcmp.le.f32.partialorder %v886, %v991
    %vm1056 = vcmp.le.f32.partialorder %v888, %v991
    %vm1057 = vcmp.le.f32.partialorder %v892, %v994
    %vm1058 = vcmp.le.f32.partialorder %v894, %v994
    %v1059 = vsel %vm995, %v897, 256
    %v1060 = vsel %vm996, %v898, 256
    %v1061 = vsel %vm997, %v897, 256
    %v1062 = vsel %vm998, %v898, 256
    %v1063 = vsel %vm999, %v897, 256
    %v1064 = vsel %vm1000, %v898, 256
    %v1065 = vsel %vm1001, %v897, 256
    %v1066 = vsel %vm1002, %v898, 256
    %v1067 = vsel %vm1003, %v897, 256
    %v1068 = vsel %vm1004, %v898, 256
    %v1069 = vsel %vm1005, %v897, 256
    %v1070 = vsel %vm1006, %v898, 256
    %v1071 = vsel %vm1007, %v897, 256
    %v1072 = vsel %vm1008, %v898, 256
    %v1073 = vsel %vm1009, %v897, 256
    %v1074 = vsel %vm1010, %v898, 256
    %v1075 = vsel %vm1011, %v897, 256
    %v1076 = vsel %vm1012, %v898, 256
    %v1077 = vsel %vm1013, %v897, 256
    %v1078 = vsel %vm1014, %v898, 256
    %v1079 = vsel %vm1015, %v897, 256
    %v1080 = vsel %vm1016, %v898, 256
    %v1081 = vsel %vm1017, %v897, 256
    %v1082 = vsel %vm1018, %v898, 256
    %v1083 = vsel %vm1019, %v897, 256
    %v1084 = vsel %vm1020, %v898, 256
    %v1085 = vsel %vm1021, %v897, 256
    %v1086 = vsel %vm1022, %v898, 256
    %v1087 = vsel %vm1023, %v897, 256
    %v1088 = vsel %vm1024, %v898, 256
    %v1089 = vsel %vm1025, %v897, 256
    %v1090 = vsel %vm1026, %v898, 256
    %v1091 = vsel %vm1027, %v897, 256
    %v1092 = vsel %vm1028, %v898, 256
    %v1093 = vsel %vm1029, %v897, 256
    %v1094 = vsel %vm1030, %v898, 256
    %v1095 = vsel %vm1031, %v897, 256
    %v1096 = vsel %vm1032, %v898, 256
    %v1097 = vsel %vm1033, %v897, 256
    %v1098 = vsel %vm1034, %v898, 256
    %v1099 = vsel %vm1035, %v897, 256
    %v1100 = vsel %vm1036, %v898, 256
    %v1101 = vsel %vm1037, %v897, 256
    %v1102 = vsel %vm1038, %v898, 256
    %v1103 = vsel %vm1039, %v897, 256
    %v1104 = vsel %vm1040, %v898, 256
    %v1105 = vsel %vm1041, %v897, 256
    %v1106 = vsel %vm1042, %v898, 256
    %v1107 = vsel %vm1043, %v897, 256
    %v1108 = vsel %vm1044, %v898, 256
    %v1109 = vsel %vm1045, %v897, 256
    %v1110 = vsel %vm1046, %v898, 256
    %v1111 = vsel %vm1047, %v897, 256
    %v1112 = vsel %vm1048, %v898, 256
    %v1113 = vsel %vm1049, %v897, 256
    %v1114 = vsel %vm1050, %v898, 256
    %v1115 = vsel %vm1051, %v897, 256
    %v1116 = vsel %vm1052, %v898, 256
    %v1117 = vsel %vm1053, %v897, 256
    %v1118 = vsel %vm1054, %v898, 256
    %v1119 = vsel %vm1055, %v897, 256
    %v1120 = vsel %vm1056, %v898, 256
    %v1121 = vsel %vm1057, %v897, 256
    %v1122 = vsel %vm1058, %v898, 256
    %vm1123 = vcmp.lt.s32.totalorder %v1059, %v1060
    %v1124 = vsel %vm1123, %v1059, %v1060
    %v1125 = vand.u32 %v1124, 65535
    %v1126 = vshra.s32 %v1124, 16
    %v1127 = vcvt.s32.f32 %v1125
    %v1128 = vcvt.s32.f32 %v1126
    %1129 = vmin.xlane.f32.xlu0 %v1128
    %v1130 = vpop.xlane.xlu0 %1129
    %vm1131 = vcmp.eq.f32.partialorder %v1128, %v1130
    %v1132 = vsel %vm1131, %v1127, inf
    %1133 = vmin.xlane.f32.xlu0 %v1132
    %v1134 = vpop.xlane.xlu0 %1133
    %v1135 = vcvt.f32.s32 %v1134
    %v1136 = vcvt.f32.s32 %v1130
    %v1137 = vshll.u32 %v1136, 16
    %v1138 = vadd.s32 %v1137, %v1135
    %vm1139 = vcmp.lt.s32.totalorder %v1061, %v1062
    %v1140 = vsel %vm1139, %v1061, %v1062
    %v1141 = vand.u32 %v1140, 65535
    %v1142 = vshra.s32 %v1140, 16
    %v1143 = vcvt.s32.f32 %v1141
    %v1144 = vcvt.s32.f32 %v1142
    %1145 = vmin.xlane.f32.xlu0 %v1144
    %v1146 = vpop.xlane.xlu0 %1145
    %vm1147 = vcmp.eq.f32.partialorder %v1144, %v1146
    %v1148 = vsel %vm1147, %v1143, inf
    %1149 = vmin.xlane.f32.xlu0 %v1148
    %v1150 = vpop.xlane.xlu0 %1149
    %v1151 = vcvt.f32.s32 %v1150
    %v1152 = vcvt.f32.s32 %v1146
    %v1153 = vshll.u32 %v1152, 16
    %v1154 = vadd.s32 %v1153, %v1151
    %vm1155 = vcmp.lt.s32.totalorder %v1063, %v1064
    %v1156 = vsel %vm1155, %v1063, %v1064
    %v1157 = vand.u32 %v1156, 65535
    %v1158 = vshra.s32 %v1156, 16
    %v1159 = vcvt.s32.f32 %v1157
    %v1160 = vcvt.s32.f32 %v1158
    %1161 = vmin.xlane.f32.xlu0 %v1160
    %v1162 = vpop.xlane.xlu0 %1161
    %vm1163 = vcmp.eq.f32.partialorder %v1160, %v1162
    %v1164 = vsel %vm1163, %v1159, inf
    %1165 = vmin.xlane.f32.xlu0 %v1164
    %v1166 = vpop.xlane.xlu0 %1165
    %v1167 = vcvt.f32.s32 %v1166
    %v1168 = vcvt.f32.s32 %v1162
    %v1169 = vshll.u32 %v1168, 16
    %v1170 = vadd.s32 %v1169, %v1167
    %vm1171 = vcmp.lt.s32.totalorder %v1065, %v1066
    %v1172 = vsel %vm1171, %v1065, %v1066
    %v1173 = vand.u32 %v1172, 65535
    %v1174 = vshra.s32 %v1172, 16
    %v1175 = vcvt.s32.f32 %v1173
    %v1176 = vcvt.s32.f32 %v1174
    %1177 = vmin.xlane.f32.xlu0 %v1176
    %v1178 = vpop.xlane.xlu0 %1177
    %vm1179 = vcmp.eq.f32.partialorder %v1176, %v1178
    %v1180 = vsel %vm1179, %v1175, inf
    %1181 = vmin.xlane.f32.xlu0 %v1180
    %v1182 = vpop.xlane.xlu0 %1181
    %v1183 = vcvt.f32.s32 %v1182
    %v1184 = vcvt.f32.s32 %v1178
    %v1185 = vshll.u32 %v1184, 16
    %v1186 = vadd.s32 %v1185, %v1183
    %vm1187 = vcmp.lt.s32.totalorder %v1067, %v1068
    %v1188 = vsel %vm1187, %v1067, %v1068
    %v1189 = vand.u32 %v1188, 65535
    %v1190 = vshra.s32 %v1188, 16
    %v1191 = vcvt.s32.f32 %v1189
    %v1192 = vcvt.s32.f32 %v1190
    %1193 = vmin.xlane.f32.xlu0 %v1192
    %v1194 = vpop.xlane.xlu0 %1193
    %vm1195 = vcmp.eq.f32.partialorder %v1192, %v1194
    %v1196 = vsel %vm1195, %v1191, inf
    %1197 = vmin.xlane.f32.xlu0 %v1196
    %v1198 = vpop.xlane.xlu0 %1197
    %v1199 = vcvt.f32.s32 %v1198
    %v1200 = vcvt.f32.s32 %v1194
    %v1201 = vshll.u32 %v1200, 16
    %v1202 = vadd.s32 %v1201, %v1199
    %vm1203 = vcmp.lt.s32.totalorder %v1069, %v1070
    %v1204 = vsel %vm1203, %v1069, %v1070
    %v1205 = vand.u32 %v1204, 65535
    %v1206 = vshra.s32 %v1204, 16
    %v1207 = vcvt.s32.f32 %v1205
    %v1208 = vcvt.s32.f32 %v1206
    %1209 = vmin.xlane.f32.xlu0 %v1208
    %v1210 = vpop.xlane.xlu0 %1209
    %vm1211 = vcmp.eq.f32.partialorder %v1208, %v1210
    %v1212 = vsel %vm1211, %v1207, inf
    %1213 = vmin.xlane.f32.xlu0 %v1212
    %v1214 = vpop.xlane.xlu0 %1213
    %v1215 = vcvt.f32.s32 %v1214
    %v1216 = vcvt.f32.s32 %v1210
    %v1217 = vshll.u32 %v1216, 16
    %v1218 = vadd.s32 %v1217, %v1215
    %vm1219 = vcmp.lt.s32.totalorder %v1071, %v1072
    %v1220 = vsel %vm1219, %v1071, %v1072
    %v1221 = vand.u32 %v1220, 65535
    %v1222 = vshra.s32 %v1220, 16
    %v1223 = vcvt.s32.f32 %v1221
    %v1224 = vcvt.s32.f32 %v1222
    %1225 = vmin.xlane.f32.xlu0 %v1224
    %v1226 = vpop.xlane.xlu0 %1225
    %vm1227 = vcmp.eq.f32.partialorder %v1224, %v1226
    %v1228 = vsel %vm1227, %v1223, inf
    %1229 = vmin.xlane.f32.xlu0 %v1228
    %v1230 = vpop.xlane.xlu0 %1229
    %v1231 = vcvt.f32.s32 %v1230
    %v1232 = vcvt.f32.s32 %v1226
    %v1233 = vshll.u32 %v1232, 16
    %v1234 = vadd.s32 %v1233, %v1231
    %vm1235 = vcmp.lt.s32.totalorder %v1073, %v1074
    %v1236 = vsel %vm1235, %v1073, %v1074
    %v1237 = vand.u32 %v1236, 65535
    %v1238 = vshra.s32 %v1236, 16
    %v1239 = vcvt.s32.f32 %v1237
    %v1240 = vcvt.s32.f32 %v1238
    %1241 = vmin.xlane.f32.xlu0 %v1240
    %v1242 = vpop.xlane.xlu0 %1241
    %vm1243 = vcmp.eq.f32.partialorder %v1240, %v1242
    %v1244 = vsel %vm1243, %v1239, inf
    %1245 = vmin.xlane.f32.xlu0 %v1244
    %v1246 = vpop.xlane.xlu0 %1245
    %v1247 = vcvt.f32.s32 %v1246
    %v1248 = vcvt.f32.s32 %v1242
    %v1249 = vshll.u32 %v1248, 16
    %v1250 = vadd.s32 %v1249, %v1247
    %vm1251 = vcmp.lt.s32.totalorder %v1075, %v1076
    %v1252 = vsel %vm1251, %v1075, %v1076
    %v1253 = vand.u32 %v1252, 65535
    %v1254 = vshra.s32 %v1252, 16
    %v1255 = vcvt.s32.f32 %v1253
    %v1256 = vcvt.s32.f32 %v1254
    %1257 = vmin.xlane.f32.xlu0 %v1256
    %v1258 = vpop.xlane.xlu0 %1257
    %vm1259 = vcmp.eq.f32.partialorder %v1256, %v1258
    %v1260 = vsel %vm1259, %v1255, inf
    %1261 = vmin.xlane.f32.xlu0 %v1260
    %v1262 = vpop.xlane.xlu0 %1261
    %v1263 = vcvt.f32.s32 %v1262
    %v1264 = vcvt.f32.s32 %v1258
    %v1265 = vshll.u32 %v1264, 16
    %v1266 = vadd.s32 %v1265, %v1263
    %vm1267 = vcmp.lt.s32.totalorder %v1077, %v1078
    %v1268 = vsel %vm1267, %v1077, %v1078
    %v1269 = vand.u32 %v1268, 65535
    %v1270 = vshra.s32 %v1268, 16
    %v1271 = vcvt.s32.f32 %v1269
    %v1272 = vcvt.s32.f32 %v1270
    %1273 = vmin.xlane.f32.xlu0 %v1272
    %v1274 = vpop.xlane.xlu0 %1273
    %vm1275 = vcmp.eq.f32.partialorder %v1272, %v1274
    %v1276 = vsel %vm1275, %v1271, inf
    %1277 = vmin.xlane.f32.xlu0 %v1276
    %v1278 = vpop.xlane.xlu0 %1277
    %v1279 = vcvt.f32.s32 %v1278
    %v1280 = vcvt.f32.s32 %v1274
    %v1281 = vshll.u32 %v1280, 16
    %v1282 = vadd.s32 %v1281, %v1279
    %vm1283 = vcmp.lt.s32.totalorder %v1079, %v1080
    %v1284 = vsel %vm1283, %v1079, %v1080
    %v1285 = vand.u32 %v1284, 65535
    %v1286 = vshra.s32 %v1284, 16
    %v1287 = vcvt.s32.f32 %v1285
    %v1288 = vcvt.s32.f32 %v1286
    %1289 = vmin.xlane.f32.xlu0 %v1288
    %v1290 = vpop.xlane.xlu0 %1289
    %vm1291 = vcmp.eq.f32.partialorder %v1288, %v1290
    %v1292 = vsel %vm1291, %v1287, inf
    %1293 = vmin.xlane.f32.xlu0 %v1292
    %v1294 = vpop.xlane.xlu0 %1293
    %v1295 = vcvt.f32.s32 %v1294
    %v1296 = vcvt.f32.s32 %v1290
    %v1297 = vshll.u32 %v1296, 16
    %v1298 = vadd.s32 %v1297, %v1295
    %vm1299 = vcmp.lt.s32.totalorder %v1081, %v1082
    %v1300 = vsel %vm1299, %v1081, %v1082
    %v1301 = vand.u32 %v1300, 65535
    %v1302 = vshra.s32 %v1300, 16
    %v1303 = vcvt.s32.f32 %v1301
    %v1304 = vcvt.s32.f32 %v1302
    %1305 = vmin.xlane.f32.xlu0 %v1304
    %v1306 = vpop.xlane.xlu0 %1305
    %vm1307 = vcmp.eq.f32.partialorder %v1304, %v1306
    %v1308 = vsel %vm1307, %v1303, inf
    %1309 = vmin.xlane.f32.xlu0 %v1308
    %v1310 = vpop.xlane.xlu0 %1309
    %v1311 = vcvt.f32.s32 %v1310
    %v1312 = vcvt.f32.s32 %v1306
    %v1313 = vshll.u32 %v1312, 16
    %v1314 = vadd.s32 %v1313, %v1311
    %vm1315 = vcmp.lt.s32.totalorder %v1083, %v1084
    %v1316 = vsel %vm1315, %v1083, %v1084
    %v1317 = vand.u32 %v1316, 65535
    %v1318 = vshra.s32 %v1316, 16
    %v1319 = vcvt.s32.f32 %v1317
    %v1320 = vcvt.s32.f32 %v1318
    %1321 = vmin.xlane.f32.xlu0 %v1320
    %v1322 = vpop.xlane.xlu0 %1321
    %vm1323 = vcmp.eq.f32.partialorder %v1320, %v1322
    %v1324 = vsel %vm1323, %v1319, inf
    %1325 = vmin.xlane.f32.xlu0 %v1324
    %v1326 = vpop.xlane.xlu0 %1325
    %v1327 = vcvt.f32.s32 %v1326
    %v1328 = vcvt.f32.s32 %v1322
    %v1329 = vshll.u32 %v1328, 16
    %v1330 = vadd.s32 %v1329, %v1327
    %vm1331 = vcmp.lt.s32.totalorder %v1085, %v1086
    %v1332 = vsel %vm1331, %v1085, %v1086
    %v1333 = vand.u32 %v1332, 65535
    %v1334 = vshra.s32 %v1332, 16
    %v1335 = vcvt.s32.f32 %v1333
    %v1336 = vcvt.s32.f32 %v1334
    %1337 = vmin.xlane.f32.xlu0 %v1336
    %v1338 = vpop.xlane.xlu0 %1337
    %vm1339 = vcmp.eq.f32.partialorder %v1336, %v1338
    %v1340 = vsel %vm1339, %v1335, inf
    %1341 = vmin.xlane.f32.xlu0 %v1340
    %v1342 = vpop.xlane.xlu0 %1341
    %v1343 = vcvt.f32.s32 %v1342
    %v1344 = vcvt.f32.s32 %v1338
    %v1345 = vshll.u32 %v1344, 16
    %v1346 = vadd.s32 %v1345, %v1343
    %vm1347 = vcmp.lt.s32.totalorder %v1087, %v1088
    %v1348 = vsel %vm1347, %v1087, %v1088
    %v1349 = vand.u32 %v1348, 65535
    %v1350 = vshra.s32 %v1348, 16
    %v1351 = vcvt.s32.f32 %v1349
    %v1352 = vcvt.s32.f32 %v1350
    %1353 = vmin.xlane.f32.xlu0 %v1352
    %v1354 = vpop.xlane.xlu0 %1353
    %vm1355 = vcmp.eq.f32.partialorder %v1352, %v1354
    %v1356 = vsel %vm1355, %v1351, inf
    %1357 = vmin.xlane.f32.xlu0 %v1356
    %v1358 = vpop.xlane.xlu0 %1357
    %v1359 = vcvt.f32.s32 %v1358
    %v1360 = vcvt.f32.s32 %v1354
    %v1361 = vshll.u32 %v1360, 16
    %v1362 = vadd.s32 %v1361, %v1359
    %vm1363 = vcmp.lt.s32.totalorder %v1089, %v1090
    %v1364 = vsel %vm1363, %v1089, %v1090
    %v1365 = vand.u32 %v1364, 65535
    %v1366 = vshra.s32 %v1364, 16
    %v1367 = vcvt.s32.f32 %v1365
    %v1368 = vcvt.s32.f32 %v1366
    %1369 = vmin.xlane.f32.xlu0 %v1368
    %v1370 = vpop.xlane.xlu0 %1369
    %vm1371 = vcmp.eq.f32.partialorder %v1368, %v1370
    %v1372 = vsel %vm1371, %v1367, inf
    %1373 = vmin.xlane.f32.xlu0 %v1372
    %v1374 = vpop.xlane.xlu0 %1373
    %v1375 = vcvt.f32.s32 %v1374
    %v1376 = vcvt.f32.s32 %v1370
    %v1377 = vshll.u32 %v1376, 16
    %v1378 = vadd.s32 %v1377, %v1375
    %vm1379 = vcmp.lt.s32.totalorder %v1091, %v1092
    %v1380 = vsel %vm1379, %v1091, %v1092
    %v1381 = vand.u32 %v1380, 65535
    %v1382 = vshra.s32 %v1380, 16
    %v1383 = vcvt.s32.f32 %v1381
    %v1384 = vcvt.s32.f32 %v1382
    %1385 = vmin.xlane.f32.xlu0 %v1384
    %v1386 = vpop.xlane.xlu0 %1385
    %vm1387 = vcmp.eq.f32.partialorder %v1384, %v1386
    %v1388 = vsel %vm1387, %v1383, inf
    %1389 = vmin.xlane.f32.xlu0 %v1388
    %v1390 = vpop.xlane.xlu0 %1389
    %v1391 = vcvt.f32.s32 %v1390
    %v1392 = vcvt.f32.s32 %v1386
    %v1393 = vshll.u32 %v1392, 16
    %v1394 = vadd.s32 %v1393, %v1391
    %vm1395 = vcmp.lt.s32.totalorder %v1093, %v1094
    %v1396 = vsel %vm1395, %v1093, %v1094
    %v1397 = vand.u32 %v1396, 65535
    %v1398 = vshra.s32 %v1396, 16
    %v1399 = vcvt.s32.f32 %v1397
    %v1400 = vcvt.s32.f32 %v1398
    %1401 = vmin.xlane.f32.xlu0 %v1400
    %v1402 = vpop.xlane.xlu0 %1401
    %vm1403 = vcmp.eq.f32.partialorder %v1400, %v1402
    %v1404 = vsel %vm1403, %v1399, inf
    %1405 = vmin.xlane.f32.xlu0 %v1404
    %v1406 = vpop.xlane.xlu0 %1405
    %v1407 = vcvt.f32.s32 %v1406
    %v1408 = vcvt.f32.s32 %v1402
    %v1409 = vshll.u32 %v1408, 16
    %v1410 = vadd.s32 %v1409, %v1407
    %vm1411 = vcmp.lt.s32.totalorder %v1095, %v1096
    %v1412 = vsel %vm1411, %v1095, %v1096
    %v1413 = vand.u32 %v1412, 65535
    %v1414 = vshra.s32 %v1412, 16
    %v1415 = vcvt.s32.f32 %v1413
    %v1416 = vcvt.s32.f32 %v1414
    %1417 = vmin.xlane.f32.xlu0 %v1416
    %v1418 = vpop.xlane.xlu0 %1417
    %vm1419 = vcmp.eq.f32.partialorder %v1416, %v1418
    %v1420 = vsel %vm1419, %v1415, inf
    %1421 = vmin.xlane.f32.xlu0 %v1420
    %v1422 = vpop.xlane.xlu0 %1421
    %v1423 = vcvt.f32.s32 %v1422
    %v1424 = vcvt.f32.s32 %v1418
    %v1425 = vshll.u32 %v1424, 16
    %v1426 = vadd.s32 %v1425, %v1423
    %vm1427 = vcmp.lt.s32.totalorder %v1097, %v1098
    %v1428 = vsel %vm1427, %v1097, %v1098
    %v1429 = vand.u32 %v1428, 65535
    %v1430 = vshra.s32 %v1428, 16
    %v1431 = vcvt.s32.f32 %v1429
    %v1432 = vcvt.s32.f32 %v1430
    %1433 = vmin.xlane.f32.xlu0 %v1432
    %v1434 = vpop.xlane.xlu0 %1433
    %vm1435 = vcmp.eq.f32.partialorder %v1432, %v1434
    %v1436 = vsel %vm1435, %v1431, inf
    %1437 = vmin.xlane.f32.xlu0 %v1436
    %v1438 = vpop.xlane.xlu0 %1437
    %v1439 = vcvt.f32.s32 %v1438
    %v1440 = vcvt.f32.s32 %v1434
    %v1441 = vshll.u32 %v1440, 16
    %v1442 = vadd.s32 %v1441, %v1439
    %vm1443 = vcmp.lt.s32.totalorder %v1099, %v1100
    %v1444 = vsel %vm1443, %v1099, %v1100
    %v1445 = vand.u32 %v1444, 65535
    %v1446 = vshra.s32 %v1444, 16
    %v1447 = vcvt.s32.f32 %v1445
    %v1448 = vcvt.s32.f32 %v1446
    %1449 = vmin.xlane.f32.xlu0 %v1448
    %v1450 = vpop.xlane.xlu0 %1449
    %vm1451 = vcmp.eq.f32.partialorder %v1448, %v1450
    %v1452 = vsel %vm1451, %v1447, inf
    %1453 = vmin.xlane.f32.xlu0 %v1452
    %v1454 = vpop.xlane.xlu0 %1453
    %v1455 = vcvt.f32.s32 %v1454
    %v1456 = vcvt.f32.s32 %v1450
    %v1457 = vshll.u32 %v1456, 16
    %v1458 = vadd.s32 %v1457, %v1455
    %vm1459 = vcmp.lt.s32.totalorder %v1101, %v1102
    %v1460 = vsel %vm1459, %v1101, %v1102
    %v1461 = vand.u32 %v1460, 65535
    %v1462 = vshra.s32 %v1460, 16
    %v1463 = vcvt.s32.f32 %v1461
    %v1464 = vcvt.s32.f32 %v1462
    %1465 = vmin.xlane.f32.xlu0 %v1464
    %v1466 = vpop.xlane.xlu0 %1465
    %vm1467 = vcmp.eq.f32.partialorder %v1464, %v1466
    %v1468 = vsel %vm1467, %v1463, inf
    %1469 = vmin.xlane.f32.xlu0 %v1468
    %v1470 = vpop.xlane.xlu0 %1469
    %v1471 = vcvt.f32.s32 %v1470
    %v1472 = vcvt.f32.s32 %v1466
    %v1473 = vshll.u32 %v1472, 16
    %v1474 = vadd.s32 %v1473, %v1471
    %vm1475 = vcmp.lt.s32.totalorder %v1103, %v1104
    %v1476 = vsel %vm1475, %v1103, %v1104
    %v1477 = vand.u32 %v1476, 65535
    %v1478 = vshra.s32 %v1476, 16
    %v1479 = vcvt.s32.f32 %v1477
    %v1480 = vcvt.s32.f32 %v1478
    %1481 = vmin.xlane.f32.xlu0 %v1480
    %v1482 = vpop.xlane.xlu0 %1481
    %vm1483 = vcmp.eq.f32.partialorder %v1480, %v1482
    %v1484 = vsel %vm1483, %v1479, inf
    %1485 = vmin.xlane.f32.xlu0 %v1484
    %v1486 = vpop.xlane.xlu0 %1485
    %v1487 = vcvt.f32.s32 %v1486
    %v1488 = vcvt.f32.s32 %v1482
    %v1489 = vshll.u32 %v1488, 16
    %v1490 = vadd.s32 %v1489, %v1487
    %vm1491 = vcmp.lt.s32.totalorder %v1105, %v1106
    %v1492 = vsel %vm1491, %v1105, %v1106
    %v1493 = vand.u32 %v1492, 65535
    %v1494 = vshra.s32 %v1492, 16
    %v1495 = vcvt.s32.f32 %v1493
    %v1496 = vcvt.s32.f32 %v1494
    %1497 = vmin.xlane.f32.xlu0 %v1496
    %v1498 = vpop.xlane.xlu0 %1497
    %vm1499 = vcmp.eq.f32.partialorder %v1496, %v1498
    %v1500 = vsel %vm1499, %v1495, inf
    %1501 = vmin.xlane.f32.xlu0 %v1500
    %v1502 = vpop.xlane.xlu0 %1501
    %v1503 = vcvt.f32.s32 %v1502
    %v1504 = vcvt.f32.s32 %v1498
    %v1505 = vshll.u32 %v1504, 16
    %v1506 = vadd.s32 %v1505, %v1503
    %vm1507 = vcmp.lt.s32.totalorder %v1107, %v1108
    %v1508 = vsel %vm1507, %v1107, %v1108
    %v1509 = vand.u32 %v1508, 65535
    %v1510 = vshra.s32 %v1508, 16
    %v1511 = vcvt.s32.f32 %v1509
    %v1512 = vcvt.s32.f32 %v1510
    %1513 = vmin.xlane.f32.xlu0 %v1512
    %v1514 = vpop.xlane.xlu0 %1513
    %vm1515 = vcmp.eq.f32.partialorder %v1512, %v1514
    %v1516 = vsel %vm1515, %v1511, inf
    %1517 = vmin.xlane.f32.xlu0 %v1516
    %v1518 = vpop.xlane.xlu0 %1517
    %v1519 = vcvt.f32.s32 %v1518
    %v1520 = vcvt.f32.s32 %v1514
    %v1521 = vshll.u32 %v1520, 16
    %v1522 = vadd.s32 %v1521, %v1519
    %vm1523 = vcmp.lt.s32.totalorder %v1109, %v1110
    %v1524 = vsel %vm1523, %v1109, %v1110
    %v1525 = vand.u32 %v1524, 65535
    %v1526 = vshra.s32 %v1524, 16
    %v1527 = vcvt.s32.f32 %v1525
    %v1528 = vcvt.s32.f32 %v1526
    %1529 = vmin.xlane.f32.xlu0 %v1528
    %v1530 = vpop.xlane.xlu0 %1529
    %vm1531 = vcmp.eq.f32.partialorder %v1528, %v1530
    %v1532 = vsel %vm1531, %v1527, inf
    %1533 = vmin.xlane.f32.xlu0 %v1532
    %v1534 = vpop.xlane.xlu0 %1533
    %v1535 = vcvt.f32.s32 %v1534
    %v1536 = vcvt.f32.s32 %v1530
    %v1537 = vshll.u32 %v1536, 16
    %v1538 = vadd.s32 %v1537, %v1535
    %vm1539 = vcmp.lt.s32.totalorder %v1111, %v1112
    %v1540 = vsel %vm1539, %v1111, %v1112
    %v1541 = vand.u32 %v1540, 65535
    %v1542 = vshra.s32 %v1540, 16
    %v1543 = vcvt.s32.f32 %v1541
    %v1544 = vcvt.s32.f32 %v1542
    %1545 = vmin.xlane.f32.xlu0 %v1544
    %v1546 = vpop.xlane.xlu0 %1545
    %vm1547 = vcmp.eq.f32.partialorder %v1544, %v1546
    %v1548 = vsel %vm1547, %v1543, inf
    %1549 = vmin.xlane.f32.xlu0 %v1548
    %v1550 = vpop.xlane.xlu0 %1549
    %v1551 = vcvt.f32.s32 %v1550
    %v1552 = vcvt.f32.s32 %v1546
    %v1553 = vshll.u32 %v1552, 16
    %v1554 = vadd.s32 %v1553, %v1551
    %vm1555 = vcmp.lt.s32.totalorder %v1113, %v1114
    %v1556 = vsel %vm1555, %v1113, %v1114
    %v1557 = vand.u32 %v1556, 65535
    %v1558 = vshra.s32 %v1556, 16
    %v1559 = vcvt.s32.f32 %v1557
    %v1560 = vcvt.s32.f32 %v1558
    %1561 = vmin.xlane.f32.xlu0 %v1560
    %v1562 = vpop.xlane.xlu0 %1561
    %vm1563 = vcmp.eq.f32.partialorder %v1560, %v1562
    %v1564 = vsel %vm1563, %v1559, inf
    %1565 = vmin.xlane.f32.xlu0 %v1564
    %v1566 = vpop.xlane.xlu0 %1565
    %v1567 = vcvt.f32.s32 %v1566
    %v1568 = vcvt.f32.s32 %v1562
    %v1569 = vshll.u32 %v1568, 16
    %v1570 = vadd.s32 %v1569, %v1567
    %vm1571 = vcmp.lt.s32.totalorder %v1115, %v1116
    %v1572 = vsel %vm1571, %v1115, %v1116
    %v1573 = vand.u32 %v1572, 65535
    %v1574 = vshra.s32 %v1572, 16
    %v1575 = vcvt.s32.f32 %v1573
    %v1576 = vcvt.s32.f32 %v1574
    %1577 = vmin.xlane.f32.xlu0 %v1576
    %v1578 = vpop.xlane.xlu0 %1577
    %vm1579 = vcmp.eq.f32.partialorder %v1576, %v1578
    %v1580 = vsel %vm1579, %v1575, inf
    %1581 = vmin.xlane.f32.xlu0 %v1580
    %v1582 = vpop.xlane.xlu0 %1581
    %v1583 = vcvt.f32.s32 %v1582
    %v1584 = vcvt.f32.s32 %v1578
    %v1585 = vshll.u32 %v1584, 16
    %v1586 = vadd.s32 %v1585, %v1583
    %vm1587 = vcmp.lt.s32.totalorder %v1117, %v1118
    %v1588 = vsel %vm1587, %v1117, %v1118
    %v1589 = vand.u32 %v1588, 65535
    %v1590 = vshra.s32 %v1588, 16
    %v1591 = vcvt.s32.f32 %v1589
    %v1592 = vcvt.s32.f32 %v1590
    %1593 = vmin.xlane.f32.xlu0 %v1592
    %v1594 = vpop.xlane.xlu0 %1593
    %vm1595 = vcmp.eq.f32.partialorder %v1592, %v1594
    %v1596 = vsel %vm1595, %v1591, inf
    %1597 = vmin.xlane.f32.xlu0 %v1596
    %v1598 = vpop.xlane.xlu0 %1597
    %v1599 = vcvt.f32.s32 %v1598
    %v1600 = vcvt.f32.s32 %v1594
    %v1601 = vshll.u32 %v1600, 16
    %v1602 = vadd.s32 %v1601, %v1599
    %vm1603 = vcmp.lt.s32.totalorder %v1119, %v1120
    %v1604 = vsel %vm1603, %v1119, %v1120
    %v1605 = vand.u32 %v1604, 65535
    %v1606 = vshra.s32 %v1604, 16
    %v1607 = vcvt.s32.f32 %v1605
    %v1608 = vcvt.s32.f32 %v1606
    %1609 = vmin.xlane.f32.xlu0 %v1608
    %v1610 = vpop.xlane.xlu0 %1609
    %vm1611 = vcmp.eq.f32.partialorder %v1608, %v1610
    %v1612 = vsel %vm1611, %v1607, inf
    %1613 = vmin.xlane.f32.xlu0 %v1612
    %v1614 = vpop.xlane.xlu0 %1613
    %v1615 = vcvt.f32.s32 %v1614
    %v1616 = vcvt.f32.s32 %v1610
    %v1617 = vshll.u32 %v1616, 16
    %v1618 = vadd.s32 %v1617, %v1615
    %vm1619 = vcmp.lt.s32.totalorder %v1121, %v1122
    %v1620 = vsel %vm1619, %v1121, %v1122
    %v1621 = vand.u32 %v1620, 65535
    %v1622 = vshra.s32 %v1620, 16
    %v1623 = vcvt.s32.f32 %v1621
    %v1624 = vcvt.s32.f32 %v1622
    %1625 = vmin.xlane.f32.xlu0 %v1624
    %v1626 = vpop.xlane.xlu0 %1625
    %vm1627 = vcmp.eq.f32.partialorder %v1624, %v1626
    %v1628 = vsel %vm1627, %v1623, inf
    %1629 = vmin.xlane.f32.xlu0 %v1628
    %v1630 = vpop.xlane.xlu0 %1629
    %v1631 = vcvt.f32.s32 %v1630
    %v1632 = vcvt.f32.s32 %v1626
    %v1633 = vshll.u32 %v1632, 16
    %v1634 = vadd.s32 %v1633, %v1631
    %vm1635 = vcmp.eq.s32.totalorder %v897, %v1138
    %vm1636 = vcmp.eq.s32.totalorder %v898, %v1138
    %vm1637 = vcmp.eq.s32.totalorder %v897, %v1154
    %vm1638 = vcmp.eq.s32.totalorder %v898, %v1154
    %vm1639 = vcmp.eq.s32.totalorder %v897, %v1170
    %vm1640 = vcmp.eq.s32.totalorder %v898, %v1170
    %vm1641 = vcmp.eq.s32.totalorder %v897, %v1186
    %vm1642 = vcmp.eq.s32.totalorder %v898, %v1186
    %vm1643 = vcmp.eq.s32.totalorder %v897, %v1202
    %vm1644 = vcmp.eq.s32.totalorder %v898, %v1202
    %vm1645 = vcmp.eq.s32.totalorder %v897, %v1218
    %vm1646 = vcmp.eq.s32.totalorder %v898, %v1218
    %vm1647 = vcmp.eq.s32.totalorder %v897, %v1234
    %vm1648 = vcmp.eq.s32.totalorder %v898, %v1234
    %vm1649 = vcmp.eq.s32.totalorder %v897, %v1250
    %vm1650 = vcmp.eq.s32.totalorder %v898, %v1250
    %vm1651 = vcmp.eq.s32.totalorder %v897, %v1266
    %vm1652 = vcmp.eq.s32.totalorder %v898, %v1266
    %vm1653 = vcmp.eq.s32.totalorder %v897, %v1282
    %vm1654 = vcmp.eq.s32.totalorder %v898, %v1282
    %vm1655 = vcmp.eq.s32.totalorder %v897, %v1298
    %vm1656 = vcmp.eq.s32.totalorder %v898, %v1298
    %vm1657 = vcmp.eq.s32.totalorder %v897, %v1314
    %vm1658 = vcmp.eq.s32.totalorder %v898, %v1314
    %vm1659 = vcmp.eq.s32.totalorder %v897, %v1330
    %vm1660 = vcmp.eq.s32.totalorder %v898, %v1330
    %vm1661 = vcmp.eq.s32.totalorder %v897, %v1346
    %vm1662 = vcmp.eq.s32.totalorder %v898, %v1346
    %vm1663 = vcmp.eq.s32.totalorder %v897, %v1362
    %vm1664 = vcmp.eq.s32.totalorder %v898, %v1362
    %vm1665 = vcmp.eq.s32.totalorder %v897, %v1378
    %vm1666 = vcmp.eq.s32.totalorder %v898, %v1378
    %vm1667 = vcmp.eq.s32.totalorder %v897, %v1394
    %vm1668 = vcmp.eq.s32.totalorder %v898, %v1394
    %vm1669 = vcmp.eq.s32.totalorder %v897, %v1410
    %vm1670 = vcmp.eq.s32.totalorder %v898, %v1410
    %vm1671 = vcmp.eq.s32.totalorder %v897, %v1426
    %vm1672 = vcmp.eq.s32.totalorder %v898, %v1426
    %vm1673 = vcmp.eq.s32.totalorder %v897, %v1442
    %vm1674 = vcmp.eq.s32.totalorder %v898, %v1442
    %vm1675 = vcmp.eq.s32.totalorder %v897, %v1458
    %vm1676 = vcmp.eq.s32.totalorder %v898, %v1458
    %vm1677 = vcmp.eq.s32.totalorder %v897, %v1474
    %vm1678 = vcmp.eq.s32.totalorder %v898, %v1474
    %vm1679 = vcmp.eq.s32.totalorder %v897, %v1490
    %vm1680 = vcmp.eq.s32.totalorder %v898, %v1490
    %vm1681 = vcmp.eq.s32.totalorder %v897, %v1506
    %vm1682 = vcmp.eq.s32.totalorder %v898, %v1506
    %vm1683 = vcmp.eq.s32.totalorder %v897, %v1522
    %vm1684 = vcmp.eq.s32.totalorder %v898, %v1522
    %vm1685 = vcmp.eq.s32.totalorder %v897, %v1538
    %vm1686 = vcmp.eq.s32.totalorder %v898, %v1538
    %vm1687 = vcmp.eq.s32.totalorder %v897, %v1554
    %vm1688 = vcmp.eq.s32.totalorder %v898, %v1554
    %vm1689 = vcmp.eq.s32.totalorder %v897, %v1570
    %vm1690 = vcmp.eq.s32.totalorder %v898, %v1570
    %vm1691 = vcmp.eq.s32.totalorder %v897, %v1586
    %vm1692 = vcmp.eq.s32.totalorder %v898, %v1586
    %vm1693 = vcmp.eq.s32.totalorder %v897, %v1602
    %vm1694 = vcmp.eq.s32.totalorder %v898, %v1602
    %vm1695 = vcmp.eq.s32.totalorder %v897, %v1618
    %vm1696 = vcmp.eq.s32.totalorder %v898, %v1618
    %vm1697 = vcmp.eq.s32.totalorder %v897, %v1634
    %vm1698 = vcmp.eq.s32.totalorder %v898, %v1634
    %v1699 = vsel %vm1635, 1, 0
    %v1700 = vsel %vm1636, 1, 0
    %v1701 = vsel %vm1637, 1, 0
    %v1702 = vsel %vm1638, 1, 0
    %v1703 = vsel %vm1639, 1, 0
    %v1704 = vsel %vm1640, 1, 0
    %v1705 = vsel %vm1641, 1, 0
    %v1706 = vsel %vm1642, 1, 0
    %v1707 = vsel %vm1643, 1, 0
    %v1708 = vsel %vm1644, 1, 0
    %v1709 = vsel %vm1645, 1, 0
    %v1710 = vsel %vm1646, 1, 0
    %v1711 = vsel %vm1647, 1, 0
    %v1712 = vsel %vm1648, 1, 0
    %v1713 = vsel %vm1649, 1, 0
    %v1714 = vsel %vm1650, 1, 0
    %v1715 = vsel %vm1651, 1, 0
    %v1716 = vsel %vm1652, 1, 0
    %v1717 = vsel %vm1653, 1, 0
    %v1718 = vsel %vm1654, 1, 0
    %v1719 = vsel %vm1655, 1, 0
    %v1720 = vsel %vm1656, 1, 0
    %v1721 = vsel %vm1657, 1, 0
    %v1722 = vsel %vm1658, 1, 0
    %v1723 = vsel %vm1659, 1, 0
    %v1724 = vsel %vm1660, 1, 0
    %v1725 = vsel %vm1661, 1, 0
    %v1726 = vsel %vm1662, 1, 0
    %v1727 = vsel %vm1663, 1, 0
    %v1728 = vsel %vm1664, 1, 0
    %v1729 = vsel %vm1665, 1, 0
    %v1730 = vsel %vm1666, 1, 0
    %v1731 = vsel %vm1667, 1, 0
    %v1732 = vsel %vm1668, 1, 0
    %v1733 = vsel %vm1669, 1, 0
    %v1734 = vsel %vm1670, 1, 0
    %v1735 = vsel %vm1671, 1, 0
    %v1736 = vsel %vm1672, 1, 0
    %v1737 = vsel %vm1673, 1, 0
    %v1738 = vsel %vm1674, 1, 0
    %v1739 = vsel %vm1675, 1, 0
    %v1740 = vsel %vm1676, 1, 0
    %v1741 = vsel %vm1677, 1, 0
    %v1742 = vsel %vm1678, 1, 0
    %v1743 = vsel %vm1679, 1, 0
    %v1744 = vsel %vm1680, 1, 0
    %v1745 = vsel %vm1681, 1, 0
    %v1746 = vsel %vm1682, 1, 0
    %v1747 = vsel %vm1683, 1, 0
    %v1748 = vsel %vm1684, 1, 0
    %v1749 = vsel %vm1685, 1, 0
    %v1750 = vsel %vm1686, 1, 0
    %v1751 = vsel %vm1687, 1, 0
    %v1752 = vsel %vm1688, 1, 0
    %v1753 = vsel %vm1689, 1, 0
    %v1754 = vsel %vm1690, 1, 0
    %v1755 = vsel %vm1691, 1, 0
    %v1756 = vsel %vm1692, 1, 0
    %v1757 = vsel %vm1693, 1, 0
    %v1758 = vsel %vm1694, 1, 0
    %v1759 = vsel %vm1695, 1, 0
    %v1760 = vsel %vm1696, 1, 0
    %v1761 = vsel %vm1697, 1, 0
    %v1762 = vsel %vm1698, 1, 0
    %v1763 = vcvt.s32.f32 %v1699
    %v1764 = vcvt.s32.f32 %v1700
    %v1765 = vcvt.s32.f32 %v1701
    %v1766 = vcvt.s32.f32 %v1702
    %v1767 = vcvt.s32.f32 %v1703
    %v1768 = vcvt.s32.f32 %v1704
    %v1769 = vcvt.s32.f32 %v1705
    %v1770 = vcvt.s32.f32 %v1706
    %v1771 = vcvt.s32.f32 %v1707
    %v1772 = vcvt.s32.f32 %v1708
    %v1773 = vcvt.s32.f32 %v1709
    %v1774 = vcvt.s32.f32 %v1710
    %v1775 = vcvt.s32.f32 %v1711
    %v1776 = vcvt.s32.f32 %v1712
    %v1777 = vcvt.s32.f32 %v1713
    %v1778 = vcvt.s32.f32 %v1714
    %v1779 = vcvt.s32.f32 %v1715
    %v1780 = vcvt.s32.f32 %v1716
    %v1781 = vcvt.s32.f32 %v1717
    %v1782 = vcvt.s32.f32 %v1718
    %v1783 = vcvt.s32.f32 %v1719
    %v1784 = vcvt.s32.f32 %v1720
    %v1785 = vcvt.s32.f32 %v1721
    %v1786 = vcvt.s32.f32 %v1722
    %v1787 = vcvt.s32.f32 %v1723
    %v1788 = vcvt.s32.f32 %v1724
    %v1789 = vcvt.s32.f32 %v1725
    %v1790 = vcvt.s32.f32 %v1726
    %v1791 = vcvt.s32.f32 %v1727
    %v1792 = vcvt.s32.f32 %v1728
    %v1793 = vcvt.s32.f32 %v1729
    %v1794 = vcvt.s32.f32 %v1730
    %v1795 = vcvt.s32.f32 %v1731
    %v1796 = vcvt.s32.f32 %v1732
    %v1797 = vcvt.s32.f32 %v1733
    %v1798 = vcvt.s32.f32 %v1734
    %v1799 = vcvt.s32.f32 %v1735
    %v1800 = vcvt.s32.f32 %v1736
    %v1801 = vcvt.s32.f32 %v1737
    %v1802 = vcvt.s32.f32 %v1738
    %v1803 = vcvt.s32.f32 %v1739
    %v1804 = vcvt.s32.f32 %v1740
    %v1805 = vcvt.s32.f32 %v1741
    %v1806 = vcvt.s32.f32 %v1742
    %v1807 = vcvt.s32.f32 %v1743
    %v1808 = vcvt.s32.f32 %v1744
    %v1809 = vcvt.s32.f32 %v1745
    %v1810 = vcvt.s32.f32 %v1746
    %v1811 = vcvt.s32.f32 %v1747
    %v1812 = vcvt.s32.f32 %v1748
    %v1813 = vcvt.s32.f32 %v1749
    %v1814 = vcvt.s32.f32 %v1750
    %v1815 = vcvt.s32.f32 %v1751
    %v1816 = vcvt.s32.f32 %v1752
    %v1817 = vcvt.s32.f32 %v1753
    %v1818 = vcvt.s32.f32 %v1754
    %v1819 = vcvt.s32.f32 %v1755
    %v1820 = vcvt.s32.f32 %v1756
    %v1821 = vcvt.s32.f32 %v1757
    %v1822 = vcvt.s32.f32 %v1758
    %v1823 = vcvt.s32.f32 %v1759
    %v1824 = vcvt.s32.f32 %v1760
    %v1825 = vcvt.s32.f32 %v1761
    %v1826 = vcvt.s32.f32 %v1762
    %1827 = vmatprep.subr.mxu0 0.0
    %1828 = vmatpush1.msra.mxu0 %v499
    %1829 = vmatprep.subr.mxu0 0.0
    %1830 = vmatpush1.msra.mxu0 %v500
    %1831 = vmatprep.subr.mxu0 0.0
    %1832 = vmatpush1.msra.mxu0 %v501
    %1833 = vmatprep.subr.mxu0 0.0
    %1834 = vmatpush1.msra.mxu0 %v502
    %1835 = vmatprep.subr.mxu0 0.0
    %1836 = vmatpush1.msra.mxu0 %v503
    %1837 = vmatprep.subr.mxu0 0.0
    %1838 = vmatpush1.msra.mxu0 %v504
    %1839 = vmatprep.subr.mxu0 0.0
    %1840 = vmatpush1.msra.mxu0 %v505
    %1841 = vmatprep.subr.mxu0 0.0
    %1842 = vmatpush1.msra.mxu0 %v506
    %1843 = vmatprep.subr.mxu0 0.0
    %1844 = vmatpush1.msra.mxu0 %v507
    %1845 = vmatprep.subr.mxu0 0.0
    %1846 = vmatpush1.msra.mxu0 %v508
    %1847 = vmatprep.subr.mxu0 0.0
    %1848 = vmatpush1.msra.mxu0 %v509
    %1849 = vmatprep.subr.mxu0 0.0
    %1850 = vmatpush1.msra.mxu0 %v510
    %1851 = vmatprep.subr.mxu0 0.0
    %1852 = vmatpush1.msra.mxu0 %v511
    %1853 = vmatprep.subr.mxu0 0.0
    %1854 = vmatpush1.msra.mxu0 %v512
    %1855 = vmatprep.subr.mxu0 0.0
    %1856 = vmatpush1.msra.mxu0 %v513
    %1857 = vmatprep.subr.mxu0 0.0
    %1858 = vmatpush1.msra.mxu0 %v514
    %1859 = vmatprep.subr.mxu0 0.0
    %1860 = vmatpush1.msra.mxu0 %v515
    %1861 = vmatprep.subr.mxu0 0.0
    %1862 = vmatpush1.msra.mxu0 %v516
    %1863 = vmatprep.subr.mxu0 0.0
    %1864 = vmatpush1.msra.mxu0 %v517
    %1865 = vmatprep.subr.mxu0 0.0
    %1866 = vmatpush1.msra.mxu0 %v518
    %1867 = vmatprep.subr.mxu0 0.0
    %1868 = vmatpush1.msra.mxu0 %v519
    %1869 = vmatprep.subr.mxu0 0.0
    %1870 = vmatpush1.msra.mxu0 %v520
    %1871 = vmatprep.subr.mxu0 0.0
    %1872 = vmatpush1.msra.mxu0 %v521
    %1873 = vmatprep.subr.mxu0 0.0
    %1874 = vmatpush1.msra.mxu0 %v522
    %1875 = vmatprep.subr.mxu0 0.0
    %1876 = vmatpush1.msra.mxu0 %v523
    %1877 = vmatprep.subr.mxu0 0.0
    %1878 = vmatpush1.msra.mxu0 %v524
    %1879 = vmatprep.subr.mxu0 0.0
    %1880 = vmatpush1.msra.mxu0 %v525
    %1881 = vmatprep.subr.mxu0 0.0
    %1882 = vmatpush1.msra.mxu0 %v526
    %1883 = vmatprep.subr.mxu0 0.0
    %1884 = vmatpush1.msra.mxu0 %v527
    %1885 = vmatprep.subr.mxu0 0.0
    %1886 = vmatpush1.msra.mxu0 %v528
    %1887 = vmatprep.subr.mxu0 0.0
    %1888 = vmatpush1.msra.mxu0 %v529
    %1889 = vmatprep.subr.mxu0 0.0
    %1890 = vmatpush1.msra.mxu0 %v530
    %1891 = vmatprep.mubr.f32.mxu0 %v1764
    %1892 = vmatmul.mubr.f32.gmra.mrb[0].mxu0 %v1763
    %v1893 = vpop.f32.mrb[0].mxu0
    %v1894 = vadd.f32 0.0, %v1893
    %v1895 = vpop.f32.mrb[0].mxu0
    %1896 = vmatprep.mubr.f32.mxu0 %v1766
    %1897 = vmatmul.mubr.f32.gmra.mrb[0].mxu0 %v1765
    %v1898 = vpop.f32.mrb[0].mxu0
    %v1899 = vadd.f32 0.0, %v1898
    %v1900 = vpop.f32.mrb[0].mxu0
    %1901 = vmatprep.mubr.f32.mxu0 %v1768
    %1902 = vmatmul.mubr.f32.gmra.mrb[0].mxu0 %v1767
    %v1903 = vpop.f32.mrb[0].mxu0
    %v1904 = vadd.f32 0.0, %v1903
    %v1905 = vpop.f32.mrb[0].mxu0
    %1906 = vmatprep.mubr.f32.mxu0 %v1770
    %1907 = vmatmul.mubr.f32.gmra.mrb[0].mxu0 %v1769
    %v1908 = vpop.f32.mrb[0].mxu0
    %v1909 = vadd.f32 0.0, %v1908
    %v1910 = vpop.f32.mrb[0].mxu0
    %1911 = vmatprep.mubr.f32.mxu0 %v1772
    %1912 = vmatmul.mubr.f32.gmra.mrb[0].mxu0 %v1771
    %v1913 = vpop.f32.mrb[0].mxu0
    %v1914 = vadd.f32 0.0, %v1913
    %v1915 = vpop.f32.mrb[0].mxu0
    %1916 = vmatprep.mubr.f32.mxu0 %v1774
    %1917 = vmatmul.mubr.f32.gmra.mrb[0].mxu0 %v1773
    %v1918 = vpop.f32.mrb[0].mxu0
    %v1919 = vadd.f32 0.0, %v1918
    %v1920 = vpop.f32.mrb[0].mxu0
    %1921 = vmatprep.mubr.f32.mxu0 %v1776
    %1922 = vmatmul.mubr.f32.gmra.mrb[0].mxu0 %v1775
    %v1923 = vpop.f32.mrb[0].mxu0
    %v1924 = vadd.f32 0.0, %v1923
    %v1925 = vpop.f32.mrb[0].mxu0
    %1926 = vmatprep.mubr.f32.mxu0 %v1778
    %1927 = vmatmul.mubr.f32.gmra.mrb[0].mxu0 %v1777
    %v1928 = vpop.f32.mrb[0].mxu0
    %v1929 = vadd.f32 0.0, %v1928
    %v1930 = vpop.f32.mrb[0].mxu0
    %1931 = vmatprep.mubr.f32.mxu0 %v1780
    %1932 = vmatmul.mubr.f32.gmra.mrb[0].mxu0 %v1779
    %v1933 = vpop.f32.mrb[0].mxu0
    %v1934 = vadd.f32 0.0, %v1933
    %v1935 = vpop.f32.mrb[0].mxu0
    %1936 = vmatprep.mubr.f32.mxu0 %v1782
    %1937 = vmatmul.mubr.f32.gmra.mrb[0].mxu0 %v1781
    %v1938 = vpop.f32.mrb[0].mxu0
    %v1939 = vadd.f32 0.0, %v1938
    %v1940 = vpop.f32.mrb[0].mxu0
    %1941 = vmatprep.mubr.f32.mxu0 %v1784
    %1942 = vmatmul.mubr.f32.gmra.mrb[0].mxu0 %v1783
    %v1943 = vpop.f32.mrb[0].mxu0
    %v1944 = vadd.f32 0.0, %v1943
    %v1945 = vpop.f32.mrb[0].mxu0
    %1946 = vmatprep.mubr.f32.mxu0 %v1786
    %1947 = vmatmul.mubr.f32.gmra.mrb[0].mxu0 %v1785
    %v1948 = vpop.f32.mrb[0].mxu0
    %v1949 = vadd.f32 0.0, %v1948
    %v1950 = vpop.f32.mrb[0].mxu0
    %1951 = vmatprep.mubr.f32.mxu0 %v1788
    %1952 = vmatmul.mubr.f32.gmra.mrb[0].mxu0 %v1787
    %v1953 = vpop.f32.mrb[0].mxu0
    %v1954 = vadd.f32 0.0, %v1953
    %v1955 = vpop.f32.mrb[0].mxu0
    %1956 = vmatprep.mubr.f32.mxu0 %v1790
    %1957 = vmatmul.mubr.f32.gmra.mrb[0].mxu0 %v1789
    %v1958 = vpop.f32.mrb[0].mxu0
    %v1959 = vadd.f32 0.0, %v1958
    %v1960 = vpop.f32.mrb[0].mxu0
    %1961 = vmatprep.mubr.f32.mxu0 %v1792
    %1962 = vmatmul.mubr.f32.gmra.mrb[0].mxu0 %v1791
    %v1963 = vpop.f32.mrb[0].mxu0
    %v1964 = vadd.f32 0.0, %v1963
    %v1965 = vpop.f32.mrb[0].mxu0
    %1966 = vmatprep.mubr.f32.mxu0 %v1794
    %1967 = vmatmul.mubr.f32.gmra.mrb[0].mxu0 %v1793
    %v1968 = vpop.f32.mrb[0].mxu0
    %v1969 = vadd.f32 0.0, %v1968
    %v1970 = vpop.f32.mrb[0].mxu0
    %1971 = vmatprep.mubr.f32.mxu0 %v1796
    %1972 = vmatmul.mubr.f32.gmra.mrb[0].mxu0 %v1795
    %v1973 = vpop.f32.mrb[0].mxu0
    %v1974 = vadd.f32 0.0, %v1973
    %v1975 = vpop.f32.mrb[0].mxu0
    %1976 = vmatprep.mubr.f32.mxu0 %v1798
    %1977 = vmatmul.mubr.f32.gmra.mrb[0].mxu0 %v1797
    %v1978 = vpop.f32.mrb[0].mxu0
    %v1979 = vadd.f32 0.0, %v1978
    %v1980 = vpop.f32.mrb[0].mxu0
    %1981 = vmatprep.mubr.f32.mxu0 %v1800
    %1982 = vmatmul.mubr.f32.gmra.mrb[0].mxu0 %v1799
    %v1983 = vpop.f32.mrb[0].mxu0
    %v1984 = vadd.f32 0.0, %v1983
    %v1985 = vpop.f32.mrb[0].mxu0
    %1986 = vmatprep.mubr.f32.mxu0 %v1802
    %1987 = vmatmul.mubr.f32.gmra.mrb[0].mxu0 %v1801
    %v1988 = vpop.f32.mrb[0].mxu0
    %v1989 = vadd.f32 0.0, %v1988
    %v1990 = vpop.f32.mrb[0].mxu0
    %1991 = vmatprep.mubr.f32.mxu0 %v1804
    %1992 = vmatmul.mubr.f32.gmra.mrb[0].mxu0 %v1803
    %v1993 = vpop.f32.mrb[0].mxu0
    %v1994 = vadd.f32 0.0, %v1993
    %v1995 = vpop.f32.mrb[0].mxu0
    %1996 = vmatprep.mubr.f32.mxu0 %v1806
    %1997 = vmatmul.mubr.f32.gmra.mrb[0].mxu0 %v1805
    %v1998 = vpop.f32.mrb[0].mxu0
    %v1999 = vadd.f32 0.0, %v1998
    %v2000 = vpop.f32.mrb[0].mxu0
    %2001 = vmatprep.mubr.f32.mxu0 %v1808
    %2002 = vmatmul.mubr.f32.gmra.mrb[0].mxu0 %v1807
    %v2003 = vpop.f32.mrb[0].mxu0
    %v2004 = vadd.f32 0.0, %v2003
    %v2005 = vpop.f32.mrb[0].mxu0
    %2006 = vmatprep.mubr.f32.mxu0 %v1810
    %2007 = vmatmul.mubr.f32.gmra.mrb[0].mxu0 %v1809
    %v2008 = vpop.f32.mrb[0].mxu0
    %v2009 = vadd.f32 0.0, %v2008
    %v2010 = vpop.f32.mrb[0].mxu0
    %2011 = vmatprep.mubr.f32.mxu0 %v1812
    %2012 = vmatmul.mubr.f32.gmra.mrb[0].mxu0 %v1811
    %v2013 = vpop.f32.mrb[0].mxu0
    %v2014 = vadd.f32 0.0, %v2013
    %v2015 = vpop.f32.mrb[0].mxu0
    %2016 = vmatprep.mubr.f32.mxu0 %v1814
    %2017 = vmatmul.mubr.f32.gmra.mrb[0].mxu0 %v1813
    %v2018 = vpop.f32.mrb[0].mxu0
    %v2019 = vadd.f32 0.0, %v2018
    %v2020 = vpop.f32.mrb[0].mxu0
    %2021 = vmatprep.mubr.f32.mxu0 %v1816
    %2022 = vmatmul.mubr.f32.gmra.mrb[0].mxu0 %v1815
    %v2023 = vpop.f32.mrb[0].mxu0
    %v2024 = vadd.f32 0.0, %v2023
    %v2025 = vpop.f32.mrb[0].mxu0
    %2026 = vmatprep.mubr.f32.mxu0 %v1818
    %2027 = vmatmul.mubr.f32.gmra.mrb[0].mxu0 %v1817
    %v2028 = vpop.f32.mrb[0].mxu0
    %v2029 = vadd.f32 0.0, %v2028
    %v2030 = vpop.f32.mrb[0].mxu0
    %2031 = vmatprep.mubr.f32.mxu0 %v1820
    %2032 = vmatmul.mubr.f32.gmra.mrb[0].mxu0 %v1819
    %v2033 = vpop.f32.mrb[0].mxu0
    %v2034 = vadd.f32 0.0, %v2033
    %v2035 = vpop.f32.mrb[0].mxu0
    %2036 = vmatprep.mubr.f32.mxu0 %v1822
    %2037 = vmatmul.mubr.f32.gmra.mrb[0].mxu0 %v1821
    %v2038 = vpop.f32.mrb[0].mxu0
    %v2039 = vadd.f32 0.0, %v2038
    %v2040 = vpop.f32.mrb[0].mxu0
    %2041 = vmatprep.mubr.f32.mxu0 %v1824
    %2042 = vmatmul.mubr.f32.gmra.mrb[0].mxu0 %v1823
    %v2043 = vpop.f32.mrb[0].mxu0
    %v2044 = vadd.f32 0.0, %v2043
    %v2045 = vpop.f32.mrb[0].mxu0
    %2046 = vmatprep.mubr.f32.mxu0 %v1826
    %2047 = vmatmul.mubr.f32.gmra.mrb[0].mxu0 %v1825
    %v2048 = vpop.f32.mrb[0].mxu0
    %v2049 = vadd.f32 0.0, %v2048
    %v2050 = vpop.f32.mrb[0].mxu0
    %2051 = vdwg.mxu0
    %2084 = vrot.lane.b32.xlu0 %v1894, 32
    %v2085 = vpop.permute.xlu0 %2084
    %2086 = vrot.lane.b32.xlu0 %v1899, 32
    %v2087 = vpop.permute.xlu0 %2086
    %2088 = vrot.lane.b32.xlu0 %v1904, 32
    %v2089 = vpop.permute.xlu0 %2088
    %2090 = vrot.lane.b32.xlu0 %v1909, 32
    %v2091 = vpop.permute.xlu0 %2090
    %2092 = vrot.lane.b32.xlu0 %v1914, 32
    %v2093 = vpop.permute.xlu0 %2092
    %2094 = vrot.lane.b32.xlu0 %v1919, 32
    %v2095 = vpop.permute.xlu0 %2094
    %2096 = vrot.lane.b32.xlu0 %v1924, 32
    %v2097 = vpop.permute.xlu0 %2096
    %2098 = vrot.lane.b32.xlu0 %v1929, 32
    %v2099 = vpop.permute.xlu0 %2098
    %2100 = vrot.lane.b32.xlu0 %v1934, 32
    %v2101 = vpop.permute.xlu0 %2100
    %2102 = vrot.lane.b32.xlu0 %v1939, 32
    %v2103 = vpop.permute.xlu0 %2102
    %2104 = vrot.lane.b32.xlu0 %v1944, 32
    %v2105 = vpop.permute.xlu0 %2104
    %2106 = vrot.lane.b32.xlu0 %v1949, 32
    %v2107 = vpop.permute.xlu0 %2106
    %2108 = vrot.lane.b32.xlu0 %v1954, 32
    %v2109 = vpop.permute.xlu0 %2108
    %2110 = vrot.lane.b32.xlu0 %v1959, 32
    %v2111 = vpop.permute.xlu0 %2110
    %2112 = vrot.lane.b32.xlu0 %v1964, 32
    %v2113 = vpop.permute.xlu0 %2112
    %2114 = vrot.lane.b32.xlu0 %v1969, 32
    %v2115 = vpop.permute.xlu0 %2114
    %2116 = vrot.lane.b32.xlu0 %v1974, 32
    %v2117 = vpop.permute.xlu0 %2116
    %2118 = vrot.lane.b32.xlu0 %v1979, 32
    %v2119 = vpop.permute.xlu0 %2118
    %2120 = vrot.lane.b32.xlu0 %v1984, 32
    %v2121 = vpop.permute.xlu0 %2120
    %2122 = vrot.lane.b32.xlu0 %v1989, 32
    %v2123 = vpop.permute.xlu0 %2122
    %2124 = vrot.lane.b32.xlu0 %v1994, 32
    %v2125 = vpop.permute.xlu0 %2124
    %2126 = vrot.lane.b32.xlu0 %v1999, 32
    %v2127 = vpop.permute.xlu0 %2126
    %2128 = vrot.lane.b32.xlu0 %v2004, 32
    %v2129 = vpop.permute.xlu0 %2128
    %2130 = vrot.lane.b32.xlu0 %v2009, 32
    %v2131 = vpop.permute.xlu0 %2130
    %2132 = vrot.lane.b32.xlu0 %v2014, 32
    %v2133 = vpop.permute.xlu0 %2132
    %2134 = vrot.lane.b32.xlu0 %v2019, 32
    %v2135 = vpop.permute.xlu0 %2134
    %2136 = vrot.lane.b32.xlu0 %v2024, 32
    %v2137 = vpop.permute.xlu0 %2136
    %2138 = vrot.lane.b32.xlu0 %v2029, 32
    %v2139 = vpop.permute.xlu0 %2138
    %2140 = vrot.lane.b32.xlu0 %v2034, 32
    %v2141 = vpop.permute.xlu0 %2140
    %2142 = vrot.lane.b32.xlu0 %v2039, 32
    %v2143 = vpop.permute.xlu0 %2142
    %2144 = vrot.lane.b32.xlu0 %v2044, 32
    %v2145 = vpop.permute.xlu0 %2144
    %2146 = vrot.lane.b32.xlu0 %v2049, 32
    %v2147 = vpop.permute.xlu0 %2146
    %v2180 = vsel %vm110, %v432, %v2085
    %v2181 = vsel %vm110, %v433, %v2087
    %v2182 = vsel %vm110, %v434, %v2089
    %v2183 = vsel %vm110, %v435, %v2091
    %v2184 = vsel %vm110, %v436, %v2093
    %v2185 = vsel %vm110, %v437, %v2095
    %v2186 = vsel %vm110, %v438, %v2097
    %v2187 = vsel %vm110, %v439, %v2099
    %v2188 = vsel %vm110, %v440, %v2101
    %v2189 = vsel %vm110, %v441, %v2103
    %v2190 = vsel %vm110, %v442, %v2105
    %v2191 = vsel %vm110, %v443, %v2107
    %v2192 = vsel %vm110, %v444, %v2109
    %v2193 = vsel %vm110, %v445, %v2111
    %v2194 = vsel %vm110, %v446, %v2113
    %v2195 = vsel %vm110, %v447, %v2115
    %v2196 = vsel %vm110, %v448, %v2117
    %v2197 = vsel %vm110, %v449, %v2119
    %v2198 = vsel %vm110, %v450, %v2121
    %v2199 = vsel %vm110, %v451, %v2123
    %v2200 = vsel %vm110, %v452, %v2125
    %v2201 = vsel %vm110, %v453, %v2127
    %v2202 = vsel %vm110, %v454, %v2129
    %v2203 = vsel %vm110, %v455, %v2131
    %v2204 = vsel %vm110, %v456, %v2133
    %v2205 = vsel %vm110, %v457, %v2135
    %v2206 = vsel %vm110, %v458, %v2137
    %v2207 = vsel %vm110, %v459, %v2139
    %v2208 = vsel %vm110, %v460, %v2141
    %v2209 = vsel %vm110, %v461, %v2143
    %v2210 = vsel %vm110, %v462, %v2145
    %v2211 = vsel %vm110, %v463, %v2147
    %v2212 = vld [vmem:[%s1] sm:$0xff]
    %v2213 = vld [vmem:[%s1 + $0x8] sm:$0xff]
    %v2214 = vld [vmem:[%s1 + $0x10] sm:$0xff]
    %v2215 = vld [vmem:[%s1 + $0x18] sm:$0xff]
    %v2216 = vld [vmem:[%s1 + $0x20] sm:$0xff]
    %v2217 = vld [vmem:[%s1 + $0x28] sm:$0xff]
    %v2218 = vld [vmem:[%s1 + $0x30] sm:$0xff]
    %v2219 = vld [vmem:[%s1 + $0x38] sm:$0xff]
    %v2220 = vld [vmem:[%s2] sm:$0x1]
    %v2222 = vlaneseq
    %v2223 = vshrl.u32 %v2222, 7
    %v2224 = vsub.s32 0, %v2223
    %v2225 = vrot.slane %v2220, %v2224
    %vm2227 = vcmask 523264
    %v2229 = vsel %vm2227, %v2180, 0
    %v2232 = vsel %vm2227, %v2181, 0
    %v2235 = vsel %vm2227, %v2182, 0
    %v2238 = vsel %vm2227, %v2183, 0
    %v2241 = vsel %vm2227, %v2184, 0
    %v2244 = vsel %vm2227, %v2185, 0
    %v2247 = vsel %vm2227, %v2186, 0
    %v2250 = vsel %vm2227, %v2187, 0
    %v2253 = vsel %vm2227, %v2188, 0
    %v2256 = vsel %vm2227, %v2189, 0
    %v2259 = vsel %vm2227, %v2190, 0
    %v2262 = vsel %vm2227, %v2191, 0
    %v2265 = vsel %vm2227, %v2192, 0
    %v2268 = vsel %vm2227, %v2193, 0
    %v2271 = vsel %vm2227, %v2194, 0
    %v2274 = vsel %vm2227, %v2195, 0
    %v2277 = vsel %vm2227, %v2196, 0
    %v2280 = vsel %vm2227, %v2197, 0
    %v2283 = vsel %vm2227, %v2198, 0
    %v2286 = vsel %vm2227, %v2199, 0
    %v2289 = vsel %vm2227, %v2200, 0
    %v2292 = vsel %vm2227, %v2201, 0
    %v2295 = vsel %vm2227, %v2202, 0
    %v2298 = vsel %vm2227, %v2203, 0
    %v2301 = vsel %vm2227, %v2204, 0
    %v2304 = vsel %vm2227, %v2205, 0
    %v2307 = vsel %vm2227, %v2206, 0
    %v2310 = vsel %vm2227, %v2207, 0
    %v2313 = vsel %vm2227, %v2208, 0
    %v2316 = vsel %vm2227, %v2209, 0
    %v2319 = vsel %vm2227, %v2210, 0
    %v2322 = vsel %vm2227, %v2211, 0
    %2324 = vmatprep.subr.mxu0 0.0
    %2325 = vmatpush1.msra.mxu0 %v2212
    %2326 = vmatprep.subr.mxu0 0.0
    %2327 = vmatpush1.msra.mxu0 %v2213
    %2328 = vmatprep.subr.mxu0 0.0
    %2329 = vmatpush1.msra.mxu0 %v2214
    %2330 = vmatprep.subr.mxu0 0.0
    %2331 = vmatpush1.msra.mxu0 %v2215
    %2332 = vmatprep.subr.mxu0 0.0
    %2333 = vmatpush1.msra.mxu0 %v2216
    %2334 = vmatprep.subr.mxu0 0.0
    %2335 = vmatpush1.msra.mxu0 %v2217
    %2336 = vmatprep.subr.mxu0 0.0
    %2337 = vmatpush1.msra.mxu0 %v2218
    %2338 = vmatprep.subr.mxu0 0.0
    %2339 = vmatpush1.msra.mxu0 %v2219
    %2340 = vmatprep.subr.mxu0 0.0
    %2341 = vmatpush1.msra.mxu0 0.0
    %2342 = vmatprep.subr.mxu0 0.0
    %2343 = vmatpush1.msra.mxu0 0.0
    %2344 = vmatprep.subr.mxu0 0.0
    %2345 = vmatpush1.msra.mxu0 0.0
    %2346 = vmatprep.subr.mxu0 0.0
    %2347 = vmatpush1.msra.mxu0 0.0
    %2348 = vmatprep.subr.mxu0 0.0
    %2349 = vmatpush1.msra.mxu0 0.0
    %2350 = vmatprep.subr.mxu0 0.0
    %2351 = vmatpush1.msra.mxu0 0.0
    %2352 = vmatprep.subr.mxu0 0.0
    %2353 = vmatpush1.msra.mxu0 0.0
    %2354 = vmatprep.subr.mxu0 0.0
    %2355 = vmatpush1.msra.mxu0 0.0
    %2356 = vmatprep.subr.mxu0 0.0
    %2357 = vmatpush1.msra.mxu0 0.0
    %2358 = vmatprep.subr.mxu0 0.0
    %2359 = vmatpush1.msra.mxu0 0.0
    %2360 = vmatprep.subr.mxu0 0.0
    %2361 = vmatpush1.msra.mxu0 0.0
    %2362 = vmatprep.subr.mxu0 0.0
    %2363 = vmatpush1.msra.mxu0 0.0
    %2364 = vmatprep.subr.mxu0 0.0
    %2365 = vmatpush1.msra.mxu0 0.0
    %2366 = vmatprep.subr.mxu0 0.0
    %2367 = vmatpush1.msra.mxu0 0.0
    %2368 = vmatprep.subr.mxu0 0.0
    %2369 = vmatpush1.msra.mxu0 0.0
    %2370 = vmatprep.subr.mxu0 0.0
    %2371 = vmatpush1.msra.mxu0 0.0
    %2372 = vmatprep.subr.mxu0 0.0
    %2373 = vmatpush1.msra.mxu0 0.0
    %2374 = vmatprep.subr.mxu0 0.0
    %2375 = vmatpush1.msra.mxu0 0.0
    %2376 = vmatprep.subr.mxu0 0.0
    %2377 = vmatpush1.msra.mxu0 0.0
    %2378 = vmatprep.subr.mxu0 0.0
    %2379 = vmatpush1.msra.mxu0 0.0
    %2380 = vmatprep.subr.mxu0 0.0
    %2381 = vmatpush1.msra.mxu0 0.0
    %2382 = vmatprep.subr.mxu0 0.0
    %2383 = vmatpush1.msra.mxu0 0.0
    %2384 = vmatprep.subr.mxu0 0.0
    %2385 = vmatpush1.msra.mxu0 0.0
    %2386 = vmatprep.subr.mxu0 0.0
    %2387 = vmatpush1.msra.mxu0 0.0
    %2388 = vmatprep.mubr.f32.mxu0 0.0
    %2389 = vmatmul.mubr.f32.gmra.mrb[0].mxu0 %v2229
    %v2390 = vpop.f32.mrb[0].mxu0
    %v2391 = vadd.f32 %v2225, %v2390
    %v2392 = vpop.f32.mrb[0].mxu0
    %2393 = vmatprep.mubr.f32.mxu0 0.0
    %2394 = vmatmul.mubr.f32.gmra.mrb[0].mxu0 %v2232
    %v2395 = vpop.f32.mrb[0].mxu0
    %v2396 = vadd.f32 %v2225, %v2395
    %v2397 = vpop.f32.mrb[0].mxu0
    %2398 = vmatprep.mubr.f32.mxu0 0.0
    %2399 = vmatmul.mubr.f32.gmra.mrb[0].mxu0 %v2235
    %v2400 = vpop.f32.mrb[0].mxu0
    %v2401 = vadd.f32 %v2225, %v2400
    %v2402 = vpop.f32.mrb[0].mxu0
    %2403 = vmatprep.mubr.f32.mxu0 0.0
    %2404 = vmatmul.mubr.f32.gmra.mrb[0].mxu0 %v2238
    %v2405 = vpop.f32.mrb[0].mxu0
    %v2406 = vadd.f32 %v2225, %v2405
    %v2407 = vpop.f32.mrb[0].mxu0
    %2408 = vmatprep.mubr.f32.mxu0 0.0
    %2409 = vmatmul.mubr.f32.gmra.mrb[0].mxu0 %v2241
    %v2410 = vpop.f32.mrb[0].mxu0
    %v2411 = vadd.f32 %v2225, %v2410
    %v2412 = vpop.f32.mrb[0].mxu0
    %2413 = vmatprep.mubr.f32.mxu0 0.0
    %2414 = vmatmul.mubr.f32.gmra.mrb[0].mxu0 %v2244
    %v2415 = vpop.f32.mrb[0].mxu0
    %v2416 = vadd.f32 %v2225, %v2415
    %v2417 = vpop.f32.mrb[0].mxu0
    %2418 = vmatprep.mubr.f32.mxu0 0.0
    %2419 = vmatmul.mubr.f32.gmra.mrb[0].mxu0 %v2247
    %v2420 = vpop.f32.mrb[0].mxu0
    %v2421 = vadd.f32 %v2225, %v2420
    %v2422 = vpop.f32.mrb[0].mxu0
    %2423 = vmatprep.mubr.f32.mxu0 0.0
    %2424 = vmatmul.mubr.f32.gmra.mrb[0].mxu0 %v2250
    %v2425 = vpop.f32.mrb[0].mxu0
    %v2426 = vadd.f32 %v2225, %v2425
    %v2427 = vpop.f32.mrb[0].mxu0
    %2428 = vmatprep.mubr.f32.mxu0 0.0
    %2429 = vmatmul.mubr.f32.gmra.mrb[0].mxu0 %v2253
    %v2430 = vpop.f32.mrb[0].mxu0
    %v2431 = vadd.f32 %v2225, %v2430
    %v2432 = vpop.f32.mrb[0].mxu0
    %2433 = vmatprep.mubr.f32.mxu0 0.0
    %2434 = vmatmul.mubr.f32.gmra.mrb[0].mxu0 %v2256
    %v2435 = vpop.f32.mrb[0].mxu0
    %v2436 = vadd.f32 %v2225, %v2435
    %v2437 = vpop.f32.mrb[0].mxu0
    %2438 = vmatprep.mubr.f32.mxu0 0.0
    %2439 = vmatmul.mubr.f32.gmra.mrb[0].mxu0 %v2259
    %v2440 = vpop.f32.mrb[0].mxu0
    %v2441 = vadd.f32 %v2225, %v2440
    %v2442 = vpop.f32.mrb[0].mxu0
    %2443 = vmatprep.mubr.f32.mxu0 0.0
    %2444 = vmatmul.mubr.f32.gmra.mrb[0].mxu0 %v2262
    %v2445 = vpop.f32.mrb[0].mxu0
    %v2446 = vadd.f32 %v2225, %v2445
    %v2447 = vpop.f32.mrb[0].mxu0
    %2448 = vmatprep.mubr.f32.mxu0 0.0
    %2449 = vmatmul.mubr.f32.gmra.mrb[0].mxu0 %v2265
    %v2450 = vpop.f32.mrb[0].mxu0
    %v2451 = vadd.f32 %v2225, %v2450
    %v2452 = vpop.f32.mrb[0].mxu0
    %2453 = vmatprep.mubr.f32.mxu0 0.0
    %2454 = vmatmul.mubr.f32.gmra.mrb[0].mxu0 %v2268
    %v2455 = vpop.f32.mrb[0].mxu0
    %v2456 = vadd.f32 %v2225, %v2455
    %v2457 = vpop.f32.mrb[0].mxu0
    %2458 = vmatprep.mubr.f32.mxu0 0.0
    %2459 = vmatmul.mubr.f32.gmra.mrb[0].mxu0 %v2271
    %v2460 = vpop.f32.mrb[0].mxu0
    %v2461 = vadd.f32 %v2225, %v2460
    %v2462 = vpop.f32.mrb[0].mxu0
    %2463 = vmatprep.mubr.f32.mxu0 0.0
    %2464 = vmatmul.mubr.f32.gmra.mrb[0].mxu0 %v2274
    %v2465 = vpop.f32.mrb[0].mxu0
    %v2466 = vadd.f32 %v2225, %v2465
    %v2467 = vpop.f32.mrb[0].mxu0
    %2468 = vmatprep.mubr.f32.mxu0 0.0
    %2469 = vmatmul.mubr.f32.gmra.mrb[0].mxu0 %v2277
    %v2470 = vpop.f32.mrb[0].mxu0
    %v2471 = vadd.f32 %v2225, %v2470
    %v2472 = vpop.f32.mrb[0].mxu0
    %2473 = vmatprep.mubr.f32.mxu0 0.0
    %2474 = vmatmul.mubr.f32.gmra.mrb[0].mxu0 %v2280
    %v2475 = vpop.f32.mrb[0].mxu0
    %v2476 = vadd.f32 %v2225, %v2475
    %v2477 = vpop.f32.mrb[0].mxu0
    %2478 = vmatprep.mubr.f32.mxu0 0.0
    %2479 = vmatmul.mubr.f32.gmra.mrb[0].mxu0 %v2283
    %v2480 = vpop.f32.mrb[0].mxu0
    %v2481 = vadd.f32 %v2225, %v2480
    %v2482 = vpop.f32.mrb[0].mxu0
    %2483 = vmatprep.mubr.f32.mxu0 0.0
    %2484 = vmatmul.mubr.f32.gmra.mrb[0].mxu0 %v2286
    %v2485 = vpop.f32.mrb[0].mxu0
    %v2486 = vadd.f32 %v2225, %v2485
    %v2487 = vpop.f32.mrb[0].mxu0
    %2488 = vmatprep.mubr.f32.mxu0 0.0
    %2489 = vmatmul.mubr.f32.gmra.mrb[0].mxu0 %v2289
    %v2490 = vpop.f32.mrb[0].mxu0
    %v2491 = vadd.f32 %v2225, %v2490
    %v2492 = vpop.f32.mrb[0].mxu0
    %2493 = vmatprep.mubr.f32.mxu0 0.0
    %2494 = vmatmul.mubr.f32.gmra.mrb[0].mxu0 %v2292
    %v2495 = vpop.f32.mrb[0].mxu0
    %v2496 = vadd.f32 %v2225, %v2495
    %v2497 = vpop.f32.mrb[0].mxu0
    %2498 = vmatprep.mubr.f32.mxu0 0.0
    %2499 = vmatmul.mubr.f32.gmra.mrb[0].mxu0 %v2295
    %v2500 = vpop.f32.mrb[0].mxu0
    %v2501 = vadd.f32 %v2225, %v2500
    %v2502 = vpop.f32.mrb[0].mxu0
    %2503 = vmatprep.mubr.f32.mxu0 0.0
    %2504 = vmatmul.mubr.f32.gmra.mrb[0].mxu0 %v2298
    %v2505 = vpop.f32.mrb[0].mxu0
    %v2506 = vadd.f32 %v2225, %v2505
    %v2507 = vpop.f32.mrb[0].mxu0
    %2508 = vmatprep.mubr.f32.mxu0 0.0
    %2509 = vmatmul.mubr.f32.gmra.mrb[0].mxu0 %v2301
    %v2510 = vpop.f32.mrb[0].mxu0
    %v2511 = vadd.f32 %v2225, %v2510
    %v2512 = vpop.f32.mrb[0].mxu0
    %2513 = vmatprep.mubr.f32.mxu0 0.0
    %2514 = vmatmul.mubr.f32.gmra.mrb[0].mxu0 %v2304
    %v2515 = vpop.f32.mrb[0].mxu0
    %v2516 = vadd.f32 %v2225, %v2515
    %v2517 = vpop.f32.mrb[0].mxu0
    %2518 = vmatprep.mubr.f32.mxu0 0.0
    %2519 = vmatmul.mubr.f32.gmra.mrb[0].mxu0 %v2307
    %v2520 = vpop.f32.mrb[0].mxu0
    %v2521 = vadd.f32 %v2225, %v2520
    %v2522 = vpop.f32.mrb[0].mxu0
    %2523 = vmatprep.mubr.f32.mxu0 0.0
    %2524 = vmatmul.mubr.f32.gmra.mrb[0].mxu0 %v2310
    %v2525 = vpop.f32.mrb[0].mxu0
    %v2526 = vadd.f32 %v2225, %v2525
    %v2527 = vpop.f32.mrb[0].mxu0
    %2528 = vmatprep.mubr.f32.mxu0 0.0
    %2529 = vmatmul.mubr.f32.gmra.mrb[0].mxu0 %v2313
    %v2530 = vpop.f32.mrb[0].mxu0
    %v2531 = vadd.f32 %v2225, %v2530
    %v2532 = vpop.f32.mrb[0].mxu0
    %2533 = vmatprep.mubr.f32.mxu0 0.0
    %2534 = vmatmul.mubr.f32.gmra.mrb[0].mxu0 %v2316
    %v2535 = vpop.f32.mrb[0].mxu0
    %v2536 = vadd.f32 %v2225, %v2535
    %v2537 = vpop.f32.mrb[0].mxu0
    %2538 = vmatprep.mubr.f32.mxu0 0.0
    %2539 = vmatmul.mubr.f32.gmra.mrb[0].mxu0 %v2319
    %v2540 = vpop.f32.mrb[0].mxu0
    %v2541 = vadd.f32 %v2225, %v2540
    %v2542 = vpop.f32.mrb[0].mxu0
    %2543 = vmatprep.mubr.f32.mxu0 0.0
    %2544 = vmatmul.mubr.f32.gmra.mrb[0].mxu0 %v2322
    %v2545 = vpop.f32.mrb[0].mxu0
    %v2546 = vadd.f32 %v2225, %v2545
    %v2547 = vpop.f32.mrb[0].mxu0
    %2548 = vdwg.mxu0
    %2549 = vst [vmem:[#allocation2] sm:$0xff] %v2391
    %2550 = vst [vmem:[#allocation2 + $0x8] sm:$0xff] %v2396
    %2551 = vst [vmem:[#allocation2 + $0x10] sm:$0xff] %v2401
    %2552 = vst [vmem:[#allocation2 + $0x18] sm:$0xff] %v2406
    %2553 = vst [vmem:[#allocation2 + $0x20] sm:$0xff] %v2411
    %2554 = vst [vmem:[#allocation2 + $0x28] sm:$0xff] %v2416
    %2555 = vst [vmem:[#allocation2 + $0x30] sm:$0xff] %v2421
    %2556 = vst [vmem:[#allocation2 + $0x38] sm:$0xff] %v2426
    %2557 = vst [vmem:[#allocation2 + $0x40] sm:$0xff] %v2431
    %2558 = vst [vmem:[#allocation2 + $0x48] sm:$0xff] %v2436
    %2559 = vst [vmem:[#allocation2 + $0x50] sm:$0xff] %v2441
    %2560 = vst [vmem:[#allocation2 + $0x58] sm:$0xff] %v2446
    %2561 = vst [vmem:[#allocation2 + $0x60] sm:$0xff] %v2451
    %2562 = vst [vmem:[#allocation2 + $0x68] sm:$0xff] %v2456
    %2563 = vst [vmem:[#allocation2 + $0x70] sm:$0xff] %v2461
    %2564 = vst [vmem:[#allocation2 + $0x78] sm:$0xff] %v2466
    %2565 = vst [vmem:[#allocation2 + $0x80] sm:$0xff] %v2471
    %2566 = vst [vmem:[#allocation2 + $0x88] sm:$0xff] %v2476
    %2567 = vst [vmem:[#allocation2 + $0x90] sm:$0xff] %v2481
    %2568 = vst [vmem:[#allocation2 + $0x98] sm:$0xff] %v2486
    %2569 = vst [vmem:[#allocation2 + $0xa0] sm:$0xff] %v2491
    %2570 = vst [vmem:[#allocation2 + $0xa8] sm:$0xff] %v2496
    %2571 = vst [vmem:[#allocation2 + $0xb0] sm:$0xff] %v2501
    %2572 = vst [vmem:[#allocation2 + $0xb8] sm:$0xff] %v2506
    %2573 = vst [vmem:[#allocation2 + $0xc0] sm:$0xff] %v2511
    %2574 = vst [vmem:[#allocation2 + $0xc8] sm:$0xff] %v2516
    %2575 = vst [vmem:[#allocation2 + $0xd0] sm:$0xff] %v2521
    %2576 = vst [vmem:[#allocation2 + $0xd8] sm:$0xff] %v2526
    %2577 = vst [vmem:[#allocation2 + $0xe0] sm:$0xff] %v2531
    %2578 = vst [vmem:[#allocation2 + $0xe8] sm:$0xff] %v2536
    %2579 = vst [vmem:[#allocation2 + $0xf0] sm:$0xff] %v2541
    %2580 = vst [vmem:[#allocation2 + $0xf8] sm:$0xff] %v2546
    // Predicated region
    $region38: #{tpu_custom_call.1} parent=1 // pred_check
      _
    $region39: #{tpu_custom_call.1} parent=1 // pred_check_branch
      %2582 = sbr.rel (0) target = $region41
    $region40: #{tpu_custom_call.1} parent=1 // pred_region
      %s2584 = ssub.s32 4096, 4096
      %2585 = vsyncadd [#allocation3], %s2584
      %s2586 = sshll.u32 [#allocation2], 4
      %s2587 = int_to_ptr.vmem [resolvable:$true] %s2586
      %2592 = dma.vmem_to_hbm [thread:$0]  %s2587, 4096, %s9, [#allocation3], 128, 128, 8
    $region41: #{tpu_custom_call.1} parent=1 // pred_fallthru
      _
    // Predicated region
    $region42: #{tpu_custom_call.1} parent=1 // pred_check
      _
    $region43: #{tpu_custom_call.1} parent=1 // pred_check_branch
      %2594 = sbr.rel (0) target = $region45
    $region44: #{tpu_custom_call.1} parent=1 // pred_region
      _
    $region45: #{tpu_custom_call.1} parent=1 // pred_fallthru
      _
    // Predicated region
    $region46: #{tpu_custom_call.1} parent=1 // pred_check
      _
    $region47: #{tpu_custom_call.1} parent=1 // pred_check_branch
      %2596 = sbr.rel (0) target = $region49
    $region48: #{tpu_custom_call.1} parent=1 // pred_region
      %2597 = dma.done [#allocation3], 4096
    $region49: #{tpu_custom_call.1} parent=1 // pred_fallthru
      _
    // Predicated region
    $region50: #{tpu_custom_call.1} parent=1 // pred_check
      _
    $region51: #{tpu_custom_call.1} parent=1 // pred_check_branch
      %2599 = sbr.rel (0) target = $region53
    $region52: #{tpu_custom_call.1} parent=1 // pred_region
      _
    $region53: #{tpu_custom_call.1} parent=1 // pred_fallthru
      _
    %2600 = vsyncpa [#allocation3], 1

</llo_original>
